<compile_context>
chip_gen: v7x
topology: tpu7x:2x2x1
jax: 0.10.0
libtpu: 0.0.40
codegen_flags: <defaults>
</compile_context>

<pallas_src>
import functools

import numpy as np
import jax
import jax.numpy as jnp
from jax.experimental import pallas as pl
from jax.experimental.pallas import tpu as pltpu  # noqa: F401  (kept for completeness)


MEAN = np.array([0.4376821, 0.4437697, 0.47280442], dtype=np.float32)
STD = np.array([0.19803012, 0.20101562, 0.19703614], dtype=np.float32)


# ---------------- offline packing helpers (run once, outside the forward pass) ----------------

def _row_toeplitz(w_oihw, wo_count, w_in_count):
    """Per-kernel-row Toeplitz expansion of a 4x4 / stride-2 / pad-1 conv over the W axis.

    T[i, w*Cin + c, wo*Cout + co] = w_oihw[co, c, i, (w + 1) - 2*wo]  when that tap exists;
    taps landing on the zero padding are simply absent (contribute 0).
    """
    cout, cin, kh, kw = w_oihw.shape
    t = np.zeros((kh, w_in_count * cin, wo_count * cout), np.float32)
    for i in range(kh):
        for wo in range(wo_count):
            for k in range(kw):
                w_in = 2 * wo + k - 1                               # pad = 1
                if 0 <= w_in < w_in_count:
                    t[i, w_in * cin:(w_in + 1) * cin,
                      wo * cout:(wo + 1) * cout] = w_oihw[:, :, i, k].T
    return t


def _row_select(batch, ho_count, kh, h_in_count):
    """Q[i, b*ho_count + ho, b*h_in_count + (2*ho + i - 1)] = 1 (zero row if tap hits padding)."""
    q = np.zeros((kh, batch * ho_count, batch * h_in_count), np.float32)
    for i in range(kh):
        for b in range(batch):
            for ho in range(ho_count):
                r = 2 * ho + i - 1
                if 0 <= r < h_in_count:
                    q[i, b * ho_count + ho, b * h_in_count + r] = 1.0
    return q


def _fc1_row_select(batch):
    """S[h, b, b*8 + h] = 1 : picks conv2-output row h of image b."""
    s = np.zeros((8, batch, batch * 8), np.float32)
    for h in range(8):
        for b in range(batch):
            s[h, b, b * 8 + h] = 1.0
    return s


def init_params(key):
    """Deterministic PyTorch-default-style (uniform +-1/sqrt(fan_in)) init, torch layouts."""
    ks = jax.random.split(key, 8)

    def u(k, shape, fan_in):
        bound = 1.0 / float(fan_in) ** 0.5
        return jax.random.uniform(k, shape, jnp.float32, -bound, bound)

    return {
        "conv1_w": u(ks[0], (16, 3, 4, 4), 3 * 4 * 4),
        "conv1_b": u(ks[1], (16,), 3 * 4 * 4),
        "conv2_w": u(ks[2], (32, 16, 4, 4), 16 * 4 * 4),
        "conv2_b": u(ks[3], (32,), 16 * 4 * 4),
        "fc1_w": u(ks[4], (128, 2048), 2048),
        "fc1_b": u(ks[5], (128,), 2048),
        "fc2_w": u(ks[6], (10, 128), 128),
        "fc2_b": u(ks[7], (10,), 128),
    }


def pack_params(params):
    """One-time repack of torch-layout params into the fused kernel's layouts (outside jit)."""
    w1 = np.asarray(params["conv1_w"], np.float32)              # (16, 3, 4, 4)
    w2 = np.asarray(params["conv2_w"], np.float32)              # (32, 16, 4, 4)
    w1s = w1 / STD[None, :, None, None]                         # fold 1/std into conv1 weights
    packed = {
        "mshift": np.tile(MEAN, 32)[None, :],                   # (1, 96): per-(w,c) channel mean
        "t1": _row_toeplitz(w1s, 16, 32),                       # (4,  96, 256)
        "b1": np.tile(np.asarray(params["conv1_b"], np.float32), 16)[None, :],   # (1, 256)
        "t2": _row_toeplitz(w2, 8, 16),                         # (4, 256, 256)
        "b2": np.tile(np.asarray(params["conv2_b"], np.float32), 8)[None, :],    # (1, 256)
        # fc1 rows permuted: torch flatten index c*64 + h*8 + w -> kernel index h*256 + w*32 + c
        "wfc1": np.asarray(params["fc1_w"], np.float32)
                  .reshape(128, 32, 8, 8).transpose(2, 3, 1, 0).reshape(2048, 128),
        "bfc1": np.asarray(params["fc1_b"], np.float32)[None, :],                # (1, 128)
        "wfc2": np.asarray(params["fc2_w"], np.float32).T,                       # (128, 10)
        "bfc2": np.asarray(params["fc2_b"], np.float32)[None, :],                # (1, 10)
    }
    return {k: jnp.asarray(v) for k, v in packed.items()}


# ---------------- fused Pallas kernel ----------------

def _net_kernel(x_ref, mshift_ref, q1_ref, t1_ref, b1_ref,
                q2_ref, t2_ref, b2_ref, s1_ref,
                wfc1_ref, bfc1_ref, wfc2_ref, bfc2_ref,
                out_ref, *, batch):
    f32 = jnp.float32
    dot = functools.partial(jnp.dot, preferred_element_type=f32)

    # normalization: subtract per-channel mean here; the 1/std scale is folded into t1
    xc = x_ref[...] - mshift_ref[...]                       # (B*32, 96)

    # conv1 (4x4, stride 2, zero-pad 1) + bias + ReLU; rows = (b, h1), lanes = (w1, c1) [NHWC]
    acc1 = jnp.zeros((batch * 16, 256), f32)
    for i in range(4):
        acc1 = acc1 + dot(dot(q1_ref[i], xc), t1_ref[i])
    h1 = jnp.maximum(acc1 + b1_ref[...], 0.0)               # (B*16, 256)

    # conv2 (4x4, stride 2, zero-pad 1) + bias + ReLU; rows = (b, h2), lanes = (w2, c2)
    acc2 = jnp.zeros((batch * 8, 256), f32)
    for i in range(4):
        acc2 = acc2 + dot(dot(q2_ref[i], h1), t2_ref[i])
    h2 = jnp.maximum(acc2 + b2_ref[...], 0.0)               # (B*8, 256)

    # fc1 + ReLU: the NCHW flatten permutation is pre-baked into wfc1's row order, and the
    # (B*8, 256) -> (B, 2048) flatten is expressed as 8 (row-select, weight-block) matmul pairs
    z1 = jnp.zeros((batch, 128), f32)
    for h in range(8):
        z1 = z1 + dot(dot(s1_ref[h], h2), wfc1_ref[h * 256:(h + 1) * 256, :])
    z1 = jnp.maximum(z1 + bfc1_ref[...], 0.0)               # (B, 128)

    # TODO(synk): nn.Dropout is identity in eval/inference mode; training-mode masking not implemented.
    out_ref[...] = dot(z1, wfc2_ref[...]) + bfc2_ref[...]   # (B, 10)


# ---------------- forward ----------------

def net_forward(packed, x):
    """x: (B, 3, 32, 32) float32 NCHW -> logits, squeezed like torch .squeeze()."""
    batch = x.shape[0]
    # tiny layout glue: NCHW -> NHWC rows (b*h, w*c); everything else happens inside the kernel
    xrows = jnp.transpose(x, (0, 2, 3, 1)).reshape(batch * 32, 32 * 3).astype(jnp.float32)
    q1 = jnp.asarray(_row_select(batch, 16, 4, 32))          # (4, B*16, B*32) trace-time constants
    q2 = jnp.asarray(_row_select(batch, 8, 4, 16))           # (4, B*8,  B*16)
    s1 = jnp.asarray(_fc1_row_select(batch))                 # (8, B,    B*8)

    logits = pl.pallas_call(
        functools.partial(_net_kernel, batch=batch),
        out_shape=jax.ShapeDtypeStruct((batch, 10), jnp.float32),
    )(xrows, packed["mshift"], q1, packed["t1"], packed["b1"],
      q2, packed["t2"], packed["b2"], s1,
      packed["wfc1"], packed["bfc1"], packed["wfc2"], packed["bfc2"])
    return jnp.squeeze(logits)


if __name__ == "__main__":
    key = jax.random.PRNGKey(0)
    kx, kp = jax.random.split(key)
    # Spatial/channel dims are fixed by the module (Linear expects 2048 = 32*8*8 from 3x32x32 input).
    x = jax.random.normal(kx, (2, 3, 32, 32), dtype=jnp.float32)
    params = init_params(kp)
    packed = pack_params(params)

    logits = jax.jit(net_forward)(packed, x)
    jax.block_until_ready(logits)
    assert logits.shape == (2, 10), logits.shape
    assert logits.dtype == jnp.float32
    print("KERNEL_OK")
</pallas_src>

<mosaic_0001>
module attributes {stable_mosaic.version = 11 : i64} {
  func.func @_net_kernel(%arg0: memref<64x96xf32, #tpu.memory_space<vmem>>, %arg1: memref<1x96xf32, #tpu.memory_space<vmem>>, %arg2: memref<4x32x64xf32, #tpu.memory_space<vmem>>, %arg3: memref<4x96x256xf32, #tpu.memory_space<vmem>>, %arg4: memref<1x256xf32, #tpu.memory_space<vmem>>, %arg5: memref<4x16x32xf32, #tpu.memory_space<vmem>>, %arg6: memref<4x256x256xf32, #tpu.memory_space<vmem>>, %arg7: memref<1x256xf32, #tpu.memory_space<vmem>>, %arg8: memref<8x2x16xf32, #tpu.memory_space<vmem>>, %arg9: memref<2048x128xf32, #tpu.memory_space<vmem>>, %arg10: memref<1x128xf32, #tpu.memory_space<vmem>>, %arg11: memref<128x10xf32, #tpu.memory_space<vmem>>, %arg12: memref<1x10xf32, #tpu.memory_space<vmem>>, %arg13: memref<2x10xf32, #tpu.memory_space<vmem>>) attributes {dimension_semantics = [], scalar_prefetch = 0 : i64, scratch_operands = 0 : i64, tpu.core_type = #tpu.core_type<tc>} {
    %c0 = arith.constant 0 : index
    %c0_0 = arith.constant 0 : index
    %0 = vector.load %arg0[%c0, %c0_0] : memref<64x96xf32, #tpu.memory_space<vmem>>, vector<64x96xf32>
    %c0_1 = arith.constant 0 : index
    %c0_2 = arith.constant 0 : index
    %1 = vector.load %arg1[%c0_1, %c0_2] : memref<1x96xf32, #tpu.memory_space<vmem>>, vector<1x96xf32>
    %2 = vector.broadcast %1 : vector<1x96xf32> to vector<64x96xf32>
    %3 = arith.subf %0, %2 : vector<64x96xf32>
    %cst = arith.constant 0.000000e+00 : f32
    %4 = vector.broadcast %cst : f32 to vector<32x256xf32>
    %c0_3 = arith.constant 0 : index
    %c0_4 = arith.constant 0 : index
    %c0_5 = arith.constant 0 : index
    %5 = vector.load %arg2[%c0_3, %c0_4, %c0_5] : memref<4x32x64xf32, #tpu.memory_space<vmem>>, vector<1x32x64xf32>
    %6 = vector.shape_cast %5 : vector<1x32x64xf32> to vector<32x64xf32>
    %cst_6 = arith.constant dense<0.000000e+00> : vector<32x96xf32>
    %7 = tpu.matmul %6, %3, %cst_6 {dimension_numbers = #tpu.dot_dimension_numbers<[1], [0], [0], [1], [0, 0, 1, 1], [], []>} : vector<32x64xf32>, vector<64x96xf32>, vector<32x96xf32> -> vector<32x96xf32>
    %c0_7 = arith.constant 0 : index
    %c0_8 = arith.constant 0 : index
    %c0_9 = arith.constant 0 : index
    %8 = vector.load %arg3[%c0_7, %c0_8, %c0_9] : memref<4x96x256xf32, #tpu.memory_space<vmem>>, vector<1x96x256xf32>
    %9 = vector.shape_cast %8 : vector<1x96x256xf32> to vector<96x256xf32>
    %cst_10 = arith.constant dense<0.000000e+00> : vector<32x256xf32>
    %10 = tpu.matmul %7, %9, %cst_10 {dimension_numbers = #tpu.dot_dimension_numbers<[1], [0], [0], [1], [0, 0, 1, 1], [], []>} : vector<32x96xf32>, vector<96x256xf32>, vector<32x256xf32> -> vector<32x256xf32>
    %11 = arith.addf %4, %10 : vector<32x256xf32>
    %c1 = arith.constant 1 : index
    %c0_11 = arith.constant 0 : index
    %c0_12 = arith.constant 0 : index
    %12 = vector.load %arg2[%c1, %c0_11, %c0_12] : memref<4x32x64xf32, #tpu.memory_space<vmem>>, vector<1x32x64xf32>
    %13 = vector.shape_cast %12 : vector<1x32x64xf32> to vector<32x64xf32>
    %cst_13 = arith.constant dense<0.000000e+00> : vector<32x96xf32>
    %14 = tpu.matmul %13, %3, %cst_13 {dimension_numbers = #tpu.dot_dimension_numbers<[1], [0], [0], [1], [0, 0, 1, 1], [], []>} : vector<32x64xf32>, vector<64x96xf32>, vector<32x96xf32> -> vector<32x96xf32>
    %c1_14 = arith.constant 1 : index
    %c0_15 = arith.constant 0 : index
    %c0_16 = arith.constant 0 : index
    %15 = vector.load %arg3[%c1_14, %c0_15, %c0_16] : memref<4x96x256xf32, #tpu.memory_space<vmem>>, vector<1x96x256xf32>
    %16 = vector.shape_cast %15 : vector<1x96x256xf32> to vector<96x256xf32>
    %cst_17 = arith.constant dense<0.000000e+00> : vector<32x256xf32>
    %17 = tpu.matmul %14, %16, %cst_17 {dimension_numbers = #tpu.dot_dimension_numbers<[1], [0], [0], [1], [0, 0, 1, 1], [], []>} : vector<32x96xf32>, vector<96x256xf32>, vector<32x256xf32> -> vector<32x256xf32>
    %18 = arith.addf %11, %17 : vector<32x256xf32>
    %c2 = arith.constant 2 : index
    %c0_18 = arith.constant 0 : index
    %c0_19 = arith.constant 0 : index
    %19 = vector.load %arg2[%c2, %c0_18, %c0_19] : memref<4x32x64xf32, #tpu.memory_space<vmem>>, vector<1x32x64xf32>
    %20 = vector.shape_cast %19 : vector<1x32x64xf32> to vector<32x64xf32>
    %cst_20 = arith.constant dense<0.000000e+00> : vector<32x96xf32>
    %21 = tpu.matmul %20, %3, %cst_20 {dimension_numbers = #tpu.dot_dimension_numbers<[1], [0], [0], [1], [0, 0, 1, 1], [], []>} : vector<32x64xf32>, vector<64x96xf32>, vector<32x96xf32> -> vector<32x96xf32>
    %c2_21 = arith.constant 2 : index
    %c0_22 = arith.constant 0 : index
    %c0_23 = arith.constant 0 : index
    %22 = vector.load %arg3[%c2_21, %c0_22, %c0_23] : memref<4x96x256xf32, #tpu.memory_space<vmem>>, vector<1x96x256xf32>
    %23 = vector.shape_cast %22 : vector<1x96x256xf32> to vector<96x256xf32>
    %cst_24 = arith.constant dense<0.000000e+00> : vector<32x256xf32>
    %24 = tpu.matmul %21, %23, %cst_24 {dimension_numbers = #tpu.dot_dimension_numbers<[1], [0], [0], [1], [0, 0, 1, 1], [], []>} : vector<32x96xf32>, vector<96x256xf32>, vector<32x256xf32> -> vector<32x256xf32>
    %25 = arith.addf %18, %24 : vector<32x256xf32>
    %c3 = arith.constant 3 : index
    %c0_25 = arith.constant 0 : index
    %c0_26 = arith.constant 0 : index
    %26 = vector.load %arg2[%c3, %c0_25, %c0_26] : memref<4x32x64xf32, #tpu.memory_space<vmem>>, vector<1x32x64xf32>
    %27 = vector.shape_cast %26 : vector<1x32x64xf32> to vector<32x64xf32>
    %cst_27 = arith.constant dense<0.000000e+00> : vector<32x96xf32>
    %28 = tpu.matmul %27, %3, %cst_27 {dimension_numbers = #tpu.dot_dimension_numbers<[1], [0], [0], [1], [0, 0, 1, 1], [], []>} : vector<32x64xf32>, vector<64x96xf32>, vector<32x96xf32> -> vector<32x96xf32>
    %c3_28 = arith.constant 3 : index
    %c0_29 = arith.constant 0 : index
    %c0_30 = arith.constant 0 : index
    %29 = vector.load %arg3[%c3_28, %c0_29, %c0_30] : memref<4x96x256xf32, #tpu.memory_space<vmem>>, vector<1x96x256xf32>
    %30 = vector.shape_cast %29 : vector<1x96x256xf32> to vector<96x256xf32>
    %cst_31 = arith.constant dense<0.000000e+00> : vector<32x256xf32>
    %31 = tpu.matmul %28, %30, %cst_31 {dimension_numbers = #tpu.dot_dimension_numbers<[1], [0], [0], [1], [0, 0, 1, 1], [], []>} : vector<32x96xf32>, vector<96x256xf32>, vector<32x256xf32> -> vector<32x256xf32>
    %32 = arith.addf %25, %31 : vector<32x256xf32>
    %c0_32 = arith.constant 0 : index
    %c0_33 = arith.constant 0 : index
    %33 = vector.load %arg4[%c0_32, %c0_33] : memref<1x256xf32, #tpu.memory_space<vmem>>, vector<1x256xf32>
    %34 = vector.broadcast %33 : vector<1x256xf32> to vector<32x256xf32>
    %35 = arith.addf %32, %34 : vector<32x256xf32>
    %cst_34 = arith.constant 0.000000e+00 : f32
    %36 = vector.broadcast %cst_34 : f32 to vector<32x256xf32>
    %37 = arith.maximumf %35, %36 : vector<32x256xf32>
    %cst_35 = arith.constant 0.000000e+00 : f32
    %38 = vector.broadcast %cst_35 : f32 to vector<16x256xf32>
    %c0_36 = arith.constant 0 : index
    %c0_37 = arith.constant 0 : index
    %c0_38 = arith.constant 0 : index
    %39 = vector.load %arg5[%c0_36, %c0_37, %c0_38] : memref<4x16x32xf32, #tpu.memory_space<vmem>>, vector<1x16x32xf32>
    %40 = vector.shape_cast %39 : vector<1x16x32xf32> to vector<16x32xf32>
    %cst_39 = arith.constant dense<0.000000e+00> : vector<16x256xf32>
    %41 = tpu.matmul %40, %37, %cst_39 {dimension_numbers = #tpu.dot_dimension_numbers<[1], [0], [0], [1], [0, 0, 1, 1], [], []>} : vector<16x32xf32>, vector<32x256xf32>, vector<16x256xf32> -> vector<16x256xf32>
    %c0_40 = arith.constant 0 : index
    %c0_41 = arith.constant 0 : index
    %c0_42 = arith.constant 0 : index
    %42 = vector.load %arg6[%c0_40, %c0_41, %c0_42] : memref<4x256x256xf32, #tpu.memory_space<vmem>>, vector<1x256x256xf32>
    %43 = vector.shape_cast %42 : vector<1x256x256xf32> to vector<256x256xf32>
    %cst_43 = arith.constant dense<0.000000e+00> : vector<16x256xf32>
    %44 = tpu.matmul %41, %43, %cst_43 {dimension_numbers = #tpu.dot_dimension_numbers<[1], [0], [0], [1], [0, 0, 1, 1], [], []>} : vector<16x256xf32>, vector<256x256xf32>, vector<16x256xf32> -> vector<16x256xf32>
    %45 = arith.addf %38, %44 : vector<16x256xf32>
    %c1_44 = arith.constant 1 : index
    %c0_45 = arith.constant 0 : index
    %c0_46 = arith.constant 0 : index
    %46 = vector.load %arg5[%c1_44, %c0_45, %c0_46] : memref<4x16x32xf32, #tpu.memory_space<vmem>>, vector<1x16x32xf32>
    %47 = vector.shape_cast %46 : vector<1x16x32xf32> to vector<16x32xf32>
    %cst_47 = arith.constant dense<0.000000e+00> : vector<16x256xf32>
    %48 = tpu.matmul %47, %37, %cst_47 {dimension_numbers = #tpu.dot_dimension_numbers<[1], [0], [0], [1], [0, 0, 1, 1], [], []>} : vector<16x32xf32>, vector<32x256xf32>, vector<16x256xf32> -> vector<16x256xf32>
    %c1_48 = arith.constant 1 : index
    %c0_49 = arith.constant 0 : index
    %c0_50 = arith.constant 0 : index
    %49 = vector.load %arg6[%c1_48, %c0_49, %c0_50] : memref<4x256x256xf32, #tpu.memory_space<vmem>>, vector<1x256x256xf32>
    %50 = vector.shape_cast %49 : vector<1x256x256xf32> to vector<256x256xf32>
    %cst_51 = arith.constant dense<0.000000e+00> : vector<16x256xf32>
    %51 = tpu.matmul %48, %50, %cst_51 {dimension_numbers = #tpu.dot_dimension_numbers<[1], [0], [0], [1], [0, 0, 1, 1], [], []>} : vector<16x256xf32>, vector<256x256xf32>, vector<16x256xf32> -> vector<16x256xf32>
    %52 = arith.addf %45, %51 : vector<16x256xf32>
    %c2_52 = arith.constant 2 : index
    %c0_53 = arith.constant 0 : index
    %c0_54 = arith.constant 0 : index
    %53 = vector.load %arg5[%c2_52, %c0_53, %c0_54] : memref<4x16x32xf32, #tpu.memory_space<vmem>>, vector<1x16x32xf32>
    %54 = vector.shape_cast %53 : vector<1x16x32xf32> to vector<16x32xf32>
    %cst_55 = arith.constant dense<0.000000e+00> : vector<16x256xf32>
    %55 = tpu.matmul %54, %37, %cst_55 {dimension_numbers = #tpu.dot_dimension_numbers<[1], [0], [0], [1], [0, 0, 1, 1], [], []>} : vector<16x32xf32>, vector<32x256xf32>, vector<16x256xf32> -> vector<16x256xf32>
    %c2_56 = arith.constant 2 : index
    %c0_57 = arith.constant 0 : index
    %c0_58 = arith.constant 0 : index
    %56 = vector.load %arg6[%c2_56, %c0_57, %c0_58] : memref<4x256x256xf32, #tpu.memory_space<vmem>>, vector<1x256x256xf32>
    %57 = vector.shape_cast %56 : vector<1x256x256xf32> to vector<256x256xf32>
    %cst_59 = arith.constant dense<0.000000e+00> : vector<16x256xf32>
    %58 = tpu.matmul %55, %57, %cst_59 {dimension_numbers = #tpu.dot_dimension_numbers<[1], [0], [0], [1], [0, 0, 1, 1], [], []>} : vector<16x256xf32>, vector<256x256xf32>, vector<16x256xf32> -> vector<16x256xf32>
    %59 = arith.addf %52, %58 : vector<16x256xf32>
    %c3_60 = arith.constant 3 : index
    %c0_61 = arith.constant 0 : index
    %c0_62 = arith.constant 0 : index
    %60 = vector.load %arg5[%c3_60, %c0_61, %c0_62] : memref<4x16x32xf32, #tpu.memory_space<vmem>>, vector<1x16x32xf32>
    %61 = vector.shape_cast %60 : vector<1x16x32xf32> to vector<16x32xf32>
    %cst_63 = arith.constant dense<0.000000e+00> : vector<16x256xf32>
    %62 = tpu.matmul %61, %37, %cst_63 {dimension_numbers = #tpu.dot_dimension_numbers<[1], [0], [0], [1], [0, 0, 1, 1], [], []>} : vector<16x32xf32>, vector<32x256xf32>, vector<16x256xf32> -> vector<16x256xf32>
    %c3_64 = arith.constant 3 : index
    %c0_65 = arith.constant 0 : index
    %c0_66 = arith.constant 0 : index
    %63 = vector.load %arg6[%c3_64, %c0_65, %c0_66] : memref<4x256x256xf32, #tpu.memory_space<vmem>>, vector<1x256x256xf32>
    %64 = vector.shape_cast %63 : vector<1x256x256xf32> to vector<256x256xf32>
    %cst_67 = arith.constant dense<0.000000e+00> : vector<16x256xf32>
    %65 = tpu.matmul %62, %64, %cst_67 {dimension_numbers = #tpu.dot_dimension_numbers<[1], [0], [0], [1], [0, 0, 1, 1], [], []>} : vector<16x256xf32>, vector<256x256xf32>, vector<16x256xf32> -> vector<16x256xf32>
    %66 = arith.addf %59, %65 : vector<16x256xf32>
    %c0_68 = arith.constant 0 : index
    %c0_69 = arith.constant 0 : index
    %67 = vector.load %arg7[%c0_68, %c0_69] : memref<1x256xf32, #tpu.memory_space<vmem>>, vector<1x256xf32>
    %68 = vector.broadcast %67 : vector<1x256xf32> to vector<16x256xf32>
    %69 = arith.addf %66, %68 : vector<16x256xf32>
    %cst_70 = arith.constant 0.000000e+00 : f32
    %70 = vector.broadcast %cst_70 : f32 to vector<16x256xf32>
    %71 = arith.maximumf %69, %70 : vector<16x256xf32>
    %cst_71 = arith.constant 0.000000e+00 : f32
    %72 = vector.broadcast %cst_71 : f32 to vector<2x128xf32>
    %c0_72 = arith.constant 0 : index
    %c0_73 = arith.constant 0 : index
    %c0_74 = arith.constant 0 : index
    %73 = vector.load %arg8[%c0_72, %c0_73, %c0_74] : memref<8x2x16xf32, #tpu.memory_space<vmem>>, vector<1x2x16xf32>
    %74 = vector.shape_cast %73 : vector<1x2x16xf32> to vector<2x16xf32>
    %cst_75 = arith.constant dense<0.000000e+00> : vector<2x256xf32>
    %75 = tpu.matmul %74, %71, %cst_75 {dimension_numbers = #tpu.dot_dimension_numbers<[1], [0], [0], [1], [0, 0, 1, 1], [], []>} : vector<2x16xf32>, vector<16x256xf32>, vector<2x256xf32> -> vector<2x256xf32>
    %c0_76 = arith.constant 0 : index
    %c0_77 = arith.constant 0 : index
    %76 = vector.load %arg9[%c0_76, %c0_77] : memref<2048x128xf32, #tpu.memory_space<vmem>>, vector<256x128xf32>
    %cst_78 = arith.constant dense<0.000000e+00> : vector<2x128xf32>
    %77 = tpu.matmul %75, %76, %cst_78 {dimension_numbers = #tpu.dot_dimension_numbers<[1], [0], [0], [1], [0, 0, 1, 1], [], []>} : vector<2x256xf32>, vector<256x128xf32>, vector<2x128xf32> -> vector<2x128xf32>
    %78 = arith.addf %72, %77 : vector<2x128xf32>
    %c1_79 = arith.constant 1 : index
    %c0_80 = arith.constant 0 : index
    %c0_81 = arith.constant 0 : index
    %79 = vector.load %arg8[%c1_79, %c0_80, %c0_81] : memref<8x2x16xf32, #tpu.memory_space<vmem>>, vector<1x2x16xf32>
    %80 = vector.shape_cast %79 : vector<1x2x16xf32> to vector<2x16xf32>
    %cst_82 = arith.constant dense<0.000000e+00> : vector<2x256xf32>
    %81 = tpu.matmul %80, %71, %cst_82 {dimension_numbers = #tpu.dot_dimension_numbers<[1], [0], [0], [1], [0, 0, 1, 1], [], []>} : vector<2x16xf32>, vector<16x256xf32>, vector<2x256xf32> -> vector<2x256xf32>
    %c256 = arith.constant 256 : index
    %c0_83 = arith.constant 0 : index
    %82 = vector.load %arg9[%c256, %c0_83] : memref<2048x128xf32, #tpu.memory_space<vmem>>, vector<256x128xf32>
    %cst_84 = arith.constant dense<0.000000e+00> : vector<2x128xf32>
    %83 = tpu.matmul %81, %82, %cst_84 {dimension_numbers = #tpu.dot_dimension_numbers<[1], [0], [0], [1], [0, 0, 1, 1], [], []>} : vector<2x256xf32>, vector<256x128xf32>, vector<2x128xf32> -> vector<2x128xf32>
    %84 = arith.addf %78, %83 : vector<2x128xf32>
    %c2_85 = arith.constant 2 : index
    %c0_86 = arith.constant 0 : index
    %c0_87 = arith.constant 0 : index
    %85 = vector.load %arg8[%c2_85, %c0_86, %c0_87] : memref<8x2x16xf32, #tpu.memory_space<vmem>>, vector<1x2x16xf32>
    %86 = vector.shape_cast %85 : vector<1x2x16xf32> to vector<2x16xf32>
    %cst_88 = arith.constant dense<0.000000e+00> : vector<2x256xf32>
    %87 = tpu.matmul %86, %71, %cst_88 {dimension_numbers = #tpu.dot_dimension_numbers<[1], [0], [0], [1], [0, 0, 1, 1], [], []>} : vector<2x16xf32>, vector<16x256xf32>, vector<2x256xf32> -> vector<2x256xf32>
    %c512 = arith.constant 512 : index
    %c0_89 = arith.constant 0 : index
    %88 = vector.load %arg9[%c512, %c0_89] : memref<2048x128xf32, #tpu.memory_space<vmem>>, vector<256x128xf32>
    %cst_90 = arith.constant dense<0.000000e+00> : vector<2x128xf32>
    %89 = tpu.matmul %87, %88, %cst_90 {dimension_numbers = #tpu.dot_dimension_numbers<[1], [0], [0], [1], [0, 0, 1, 1], [], []>} : vector<2x256xf32>, vector<256x128xf32>, vector<2x128xf32> -> vector<2x128xf32>
    %90 = arith.addf %84, %89 : vector<2x128xf32>
    %c3_91 = arith.constant 3 : index
    %c0_92 = arith.constant 0 : index
    %c0_93 = arith.constant 0 : index
    %91 = vector.load %arg8[%c3_91, %c0_92, %c0_93] : memref<8x2x16xf32, #tpu.memory_space<vmem>>, vector<1x2x16xf32>
    %92 = vector.shape_cast %91 : vector<1x2x16xf32> to vector<2x16xf32>
    %cst_94 = arith.constant dense<0.000000e+00> : vector<2x256xf32>
    %93 = tpu.matmul %92, %71, %cst_94 {dimension_numbers = #tpu.dot_dimension_numbers<[1], [0], [0], [1], [0, 0, 1, 1], [], []>} : vector<2x16xf32>, vector<16x256xf32>, vector<2x256xf32> -> vector<2x256xf32>
    %c768 = arith.constant 768 : index
    %c0_95 = arith.constant 0 : index
    %94 = vector.load %arg9[%c768, %c0_95] : memref<2048x128xf32, #tpu.memory_space<vmem>>, vector<256x128xf32>
    %cst_96 = arith.constant dense<0.000000e+00> : vector<2x128xf32>
    %95 = tpu.matmul %93, %94, %cst_96 {dimension_numbers = #tpu.dot_dimension_numbers<[1], [0], [0], [1], [0, 0, 1, 1], [], []>} : vector<2x256xf32>, vector<256x128xf32>, vector<2x128xf32> -> vector<2x128xf32>
    %96 = arith.addf %90, %95 : vector<2x128xf32>
    %c4 = arith.constant 4 : index
    %c0_97 = arith.constant 0 : index
    %c0_98 = arith.constant 0 : index
    %97 = vector.load %arg8[%c4, %c0_97, %c0_98] : memref<8x2x16xf32, #tpu.memory_space<vmem>>, vector<1x2x16xf32>
    %98 = vector.shape_cast %97 : vector<1x2x16xf32> to vector<2x16xf32>
    %cst_99 = arith.constant dense<0.000000e+00> : vector<2x256xf32>
    %99 = tpu.matmul %98, %71, %cst_99 {dimension_numbers = #tpu.dot_dimension_numbers<[1], [0], [0], [1], [0, 0, 1, 1], [], []>} : vector<2x16xf32>, vector<16x256xf32>, vector<2x256xf32> -> vector<2x256xf32>
    %c1024 = arith.constant 1024 : index
    %c0_100 = arith.constant 0 : index
    %100 = vector.load %arg9[%c1024, %c0_100] : memref<2048x128xf32, #tpu.memory_space<vmem>>, vector<256x128xf32>
    %cst_101 = arith.constant dense<0.000000e+00> : vector<2x128xf32>
    %101 = tpu.matmul %99, %100, %cst_101 {dimension_numbers = #tpu.dot_dimension_numbers<[1], [0], [0], [1], [0, 0, 1, 1], [], []>} : vector<2x256xf32>, vector<256x128xf32>, vector<2x128xf32> -> vector<2x128xf32>
    %102 = arith.addf %96, %101 : vector<2x128xf32>
    %c5 = arith.constant 5 : index
    %c0_102 = arith.constant 0 : index
    %c0_103 = arith.constant 0 : index
    %103 = vector.load %arg8[%c5, %c0_102, %c0_103] : memref<8x2x16xf32, #tpu.memory_space<vmem>>, vector<1x2x16xf32>
    %104 = vector.shape_cast %103 : vector<1x2x16xf32> to vector<2x16xf32>
    %cst_104 = arith.constant dense<0.000000e+00> : vector<2x256xf32>
    %105 = tpu.matmul %104, %71, %cst_104 {dimension_numbers = #tpu.dot_dimension_numbers<[1], [0], [0], [1], [0, 0, 1, 1], [], []>} : vector<2x16xf32>, vector<16x256xf32>, vector<2x256xf32> -> vector<2x256xf32>
    %c1280 = arith.constant 1280 : index
    %c0_105 = arith.constant 0 : index
    %106 = vector.load %arg9[%c1280, %c0_105] : memref<2048x128xf32, #tpu.memory_space<vmem>>, vector<256x128xf32>
    %cst_106 = arith.constant dense<0.000000e+00> : vector<2x128xf32>
    %107 = tpu.matmul %105, %106, %cst_106 {dimension_numbers = #tpu.dot_dimension_numbers<[1], [0], [0], [1], [0, 0, 1, 1], [], []>} : vector<2x256xf32>, vector<256x128xf32>, vector<2x128xf32> -> vector<2x128xf32>
    %108 = arith.addf %102, %107 : vector<2x128xf32>
    %c6 = arith.constant 6 : index
    %c0_107 = arith.constant 0 : index
    %c0_108 = arith.constant 0 : index
    %109 = vector.load %arg8[%c6, %c0_107, %c0_108] : memref<8x2x16xf32, #tpu.memory_space<vmem>>, vector<1x2x16xf32>
    %110 = vector.shape_cast %109 : vector<1x2x16xf32> to vector<2x16xf32>
    %cst_109 = arith.constant dense<0.000000e+00> : vector<2x256xf32>
    %111 = tpu.matmul %110, %71, %cst_109 {dimension_numbers = #tpu.dot_dimension_numbers<[1], [0], [0], [1], [0, 0, 1, 1], [], []>} : vector<2x16xf32>, vector<16x256xf32>, vector<2x256xf32> -> vector<2x256xf32>
    %c1536 = arith.constant 1536 : index
    %c0_110 = arith.constant 0 : index
    %112 = vector.load %arg9[%c1536, %c0_110] : memref<2048x128xf32, #tpu.memory_space<vmem>>, vector<256x128xf32>
    %cst_111 = arith.constant dense<0.000000e+00> : vector<2x128xf32>
    %113 = tpu.matmul %111, %112, %cst_111 {dimension_numbers = #tpu.dot_dimension_numbers<[1], [0], [0], [1], [0, 0, 1, 1], [], []>} : vector<2x256xf32>, vector<256x128xf32>, vector<2x128xf32> -> vector<2x128xf32>
    %114 = arith.addf %108, %113 : vector<2x128xf32>
    %c7 = arith.constant 7 : index
    %c0_112 = arith.constant 0 : index
    %c0_113 = arith.constant 0 : index
    %115 = vector.load %arg8[%c7, %c0_112, %c0_113] : memref<8x2x16xf32, #tpu.memory_space<vmem>>, vector<1x2x16xf32>
    %116 = vector.shape_cast %115 : vector<1x2x16xf32> to vector<2x16xf32>
    %cst_114 = arith.constant dense<0.000000e+00> : vector<2x256xf32>
    %117 = tpu.matmul %116, %71, %cst_114 {dimension_numbers = #tpu.dot_dimension_numbers<[1], [0], [0], [1], [0, 0, 1, 1], [], []>} : vector<2x16xf32>, vector<16x256xf32>, vector<2x256xf32> -> vector<2x256xf32>
    %c1792 = arith.constant 1792 : index
    %c0_115 = arith.constant 0 : index
    %118 = vector.load %arg9[%c1792, %c0_115] : memref<2048x128xf32, #tpu.memory_space<vmem>>, vector<256x128xf32>
    %cst_116 = arith.constant dense<0.000000e+00> : vector<2x128xf32>
    %119 = tpu.matmul %117, %118, %cst_116 {dimension_numbers = #tpu.dot_dimension_numbers<[1], [0], [0], [1], [0, 0, 1, 1], [], []>} : vector<2x256xf32>, vector<256x128xf32>, vector<2x128xf32> -> vector<2x128xf32>
    %120 = arith.addf %114, %119 : vector<2x128xf32>
    %c0_117 = arith.constant 0 : index
    %c0_118 = arith.constant 0 : index
    %121 = vector.load %arg10[%c0_117, %c0_118] : memref<1x128xf32, #tpu.memory_space<vmem>>, vector<1x128xf32>
    %122 = vector.broadcast %121 : vector<1x128xf32> to vector<2x128xf32>
    %123 = arith.addf %120, %122 : vector<2x128xf32>
    %cst_119 = arith.constant 0.000000e+00 : f32
    %124 = vector.broadcast %cst_119 : f32 to vector<2x128xf32>
    %125 = arith.maximumf %123, %124 : vector<2x128xf32>
    %c0_120 = arith.constant 0 : index
    %c0_121 = arith.constant 0 : index
    %126 = vector.load %arg11[%c0_120, %c0_121] : memref<128x10xf32, #tpu.memory_space<vmem>>, vector<128x10xf32>
    %cst_122 = arith.constant dense<0.000000e+00> : vector<2x10xf32>
    %127 = tpu.matmul %125, %126, %cst_122 {dimension_numbers = #tpu.dot_dimension_numbers<[1], [0], [0], [1], [0, 0, 1, 1], [], []>} : vector<2x128xf32>, vector<128x10xf32>, vector<2x10xf32> -> vector<2x10xf32>
    %c0_123 = arith.constant 0 : index
    %c0_124 = arith.constant 0 : index
    %128 = vector.load %arg12[%c0_123, %c0_124] : memref<1x10xf32, #tpu.memory_space<vmem>>, vector<1x10xf32>
    %129 = vector.broadcast %128 : vector<1x10xf32> to vector<2x10xf32>
    %130 = arith.addf %127, %129 : vector<2x10xf32>
    %c0_125 = arith.constant 0 : index
    %c0_126 = arith.constant 0 : index
    %131 = vector.load %arg13[%c0_125, %c0_126] : memref<2x10xf32, #tpu.memory_space<vmem>>, vector<2x10xf32>
    tpu.vector_store %arg13[%c0_125, %c0_126], %130 {strides = array<i32>} : memref<2x10xf32, #tpu.memory_space<vmem>>, vector<2x10xf32>,
    return
  }
}

</mosaic_0001>

<llo_original>
// kernel: net_forward.1
$region0: #{net_forward.1}
  #allocation0 [shape = 'u32[]', space=smem, size = 0x4, offset = 0x4, fixed_abs, tag = 'smem constant byte address 0x4 - core index']
  #allocation1 [shape = 'u32[144,128]{1,0:T(1,128)}', space=vmem, size = 0x12000, scoped, tag = 'internal scratch']
  %s0 = inlined_call_operand.vmem [shape: f32[64,96], index: 0, kind: input, shape index: {}]
  %s1 = inlined_call_operand.vmem [shape: f32[1,96], index: 1, kind: input, shape index: {}]
  %s2 = inlined_call_operand.vmem [shape: f32[4,32,64], index: 2, kind: input, shape index: {}]
  %s3 = inlined_call_operand.vmem [shape: f32[4,96,256], index: 3, kind: input, shape index: {}]
  %s4 = inlined_call_operand.vmem [shape: f32[1,256], index: 4, kind: input, shape index: {}]
  %s5 = inlined_call_operand.vmem [shape: f32[4,16,32], index: 5, kind: input, shape index: {}]
  %s6 = inlined_call_operand.hbm [shape: f32[4,256,256], index: 6, kind: input, shape index: {}]
  %s7 = inlined_call_operand.vmem [shape: f32[1,256], index: 7, kind: input, shape index: {}]
  %s8 = inlined_call_operand.vmem [shape: f32[8,2,16], index: 8, kind: input, shape index: {}]
  %s9 = inlined_call_operand.hbm [shape: f32[2048,128], index: 9, kind: input, shape index: {}]
  %s10 = inlined_call_operand.vmem [shape: f32[1,128], index: 10, kind: input, shape index: {}]
  %s11 = inlined_call_operand.vmem [shape: f32[128,10], index: 11, kind: input, shape index: {}]
  %s12 = inlined_call_operand.hbm [shape: f32[1,10], index: 12, kind: input, shape index: {}]
  %s13 = inlined_call_operand.hbm [shape: f32[2,10], index: 13, kind: output, shape index: {}]
  %s14 = sld [smem:[#allocation0]]
  $region74: #{net_forward.1} parent=0
    _
  %s16 = ssub.s32 1, %s14
  %s17 = scalar_select 0, %s16, %s14
  $region1: #{net_forward.1} parent=0
    #allocation2 [shape = 'u8[1048576]{0}', space=vmem, size = 0x100000, scoped, tag = 'input window, operand 6, single buffered']
    #allocation3 [shape = 's32[1]{0}', space=sflag, size = 0x4, scoped, tag = 'scoped memory for net_forward.1']
    #allocation4 [shape = 's32[1]{0}', space=sflag, size = 0x4, scoped, tag = 'scoped memory for net_forward.1']
    #allocation5 [shape = 'u8[1048576]{0}', space=vmem, size = 0x100000, scoped, tag = 'input window, operand 9, single buffered']
    #allocation6 [shape = 's32[1]{0}', space=sflag, size = 0x4, scoped, tag = 'scoped memory for net_forward.1']
    #allocation7 [shape = 'u8[512]{0}', space=vmem, size = 0x400, scoped, tag = 'input window, operand 12, single buffered']
    #allocation8 [shape = 'u8[1024]{0}', space=vmem, size = 0x400, scoped, tag = 'output window, operand 0, single buffered']
    %18 = vsyncpa [#allocation3], 0
    %19 = vsyncpa [#allocation6], 0
    %20 = vsyncpa [#allocation4], 0
    // Predicated region
    $region2: #{net_forward.1} parent=1 // pred_check
      _
    $region3: #{net_forward.1} parent=1 // pred_check_branch
      %22 = sbr.rel (0) target = $region5
    $region4: #{net_forward.1} parent=1 // pred_region
      _
    $region5: #{net_forward.1} parent=1 // pred_fallthru
      _
    // Predicated region
    $region6: #{net_forward.1} parent=1 // pred_check
      _
    $region7: #{net_forward.1} parent=1 // pred_check_branch
      %24 = sbr.rel (0) target = $region9
    $region8: #{net_forward.1} parent=1 // pred_region
      _
    $region9: #{net_forward.1} parent=1 // pred_fallthru
      _
    // Predicated region
    $region10: #{net_forward.1} parent=1 // pred_check
      _
    $region11: #{net_forward.1} parent=1 // pred_check_branch
      %26 = sbr.rel (0) target = $region13
    $region12: #{net_forward.1} parent=1 // pred_region
      _
    $region13: #{net_forward.1} parent=1 // pred_fallthru
      _
    // Predicated region
    $region14: #{net_forward.1} parent=1 // pred_check
      _
    $region15: #{net_forward.1} parent=1 // pred_check_branch
      %28 = sbr.rel (0) target = $region17
    $region16: #{net_forward.1} parent=1 // pred_region
      _
    $region17: #{net_forward.1} parent=1 // pred_fallthru
      _
    // Predicated region
    $region18: #{net_forward.1} parent=1 // pred_check
      _
    $region19: #{net_forward.1} parent=1 // pred_check_branch
      %30 = sbr.rel (0) target = $region21
    $region20: #{net_forward.1} parent=1 // pred_region
      _
    $region21: #{net_forward.1} parent=1 // pred_fallthru
      _
    // Predicated region
    $region22: #{net_forward.1} parent=1 // pred_check
      _
    $region23: #{net_forward.1} parent=1 // pred_check_branch
      %32 = sbr.rel (0) target = $region25
    $region24: #{net_forward.1} parent=1 // pred_region
      _
    $region25: #{net_forward.1} parent=1 // pred_fallthru
      _
    // Predicated region
    $region26: #{net_forward.1} parent=1 // pred_check
      _
    $region27: #{net_forward.1} parent=1 // pred_check_branch
      %34 = sbr.rel (0) target = $region29
    $region28: #{net_forward.1} parent=1 // pred_region
      %s36 = ssub.s32 32768, 32768
      %37 = vsyncadd [#allocation3], %s36
      %s38 = sshll.u32 [#allocation2], 4
      %s39 = int_to_ptr.vmem [resolvable:$true] %s38
      %44 = dma.hbm_to_vmem [thread:$0]  %s6, 32768, %s39, [#allocation3], 256, 256, 16
    $region29: #{net_forward.1} parent=1 // pred_fallthru
      _
    // Predicated region
    $region30: #{net_forward.1} parent=1 // pred_check
      _
    $region31: #{net_forward.1} parent=1 // pred_check_branch
      %46 = sbr.rel (0) target = $region33
    $region32: #{net_forward.1} parent=1 // pred_region
      _
    $region33: #{net_forward.1} parent=1 // pred_fallthru
      _
    // Predicated region
    $region34: #{net_forward.1} parent=1 // pred_check
      _
    $region35: #{net_forward.1} parent=1 // pred_check_branch
      %48 = sbr.rel (0) target = $region37
    $region36: #{net_forward.1} parent=1 // pred_region
      _
    $region37: #{net_forward.1} parent=1 // pred_fallthru
      _
    // Predicated region
    $region38: #{net_forward.1} parent=1 // pred_check
      _
    $region39: #{net_forward.1} parent=1 // pred_check_branch
      %50 = sbr.rel (0) target = $region41
    $region40: #{net_forward.1} parent=1 // pred_region
      %s52 = ssub.s32 32768, 32768
      %53 = vsyncadd [#allocation6], %s52
      %s54 = sshll.u32 [#allocation5], 4
      %s55 = int_to_ptr.vmem [resolvable:$true] %s54
      %60 = dma.hbm_to_vmem [thread:$0]  %s9, 32768, %s55, [#allocation6], 128, 128, 8
    $region41: #{net_forward.1} parent=1 // pred_fallthru
      _
    // Predicated region
    $region42: #{net_forward.1} parent=1 // pred_check
      _
    $region43: #{net_forward.1} parent=1 // pred_check_branch
      %62 = sbr.rel (0) target = $region45
    $region44: #{net_forward.1} parent=1 // pred_region
      _
    $region45: #{net_forward.1} parent=1 // pred_fallthru
      _
    // Predicated region
    $region46: #{net_forward.1} parent=1 // pred_check
      _
    $region47: #{net_forward.1} parent=1 // pred_check_branch
      %64 = sbr.rel (0) target = $region49
    $region48: #{net_forward.1} parent=1 // pred_region
      _
    $region49: #{net_forward.1} parent=1 // pred_fallthru
      _
    // Predicated region
    $region50: #{net_forward.1} parent=1 // pred_check
      _
    $region51: #{net_forward.1} parent=1 // pred_check_branch
      %66 = sbr.rel (0) target = $region53
    $region52: #{net_forward.1} parent=1 // pred_region
      %s68 = ssub.s32 16, 16
      %69 = vsyncadd [#allocation6], %s68
      %s71 = sshll.u32 [#allocation7], 4
      %s72 = int_to_ptr.vmem [resolvable:$true] %s71
      %74 = dma.hbm_to_vmem [thread:$0]  %s12, 16, %s72, [#allocation6]
    $region53: #{net_forward.1} parent=1 // pred_fallthru
      _
    // Predicated region
    $region54: #{net_forward.1} parent=1 // pred_check
      _
    $region55: #{net_forward.1} parent=1 // pred_check_branch
      %76 = sbr.rel (0) target = $region57
    $region56: #{net_forward.1} parent=1 // pred_region
      %77 = dma.done [#allocation3], 32768
    $region57: #{net_forward.1} parent=1 // pred_fallthru
      _
    // Predicated region
    $region58: #{net_forward.1} parent=1 // pred_check
      _
    $region59: #{net_forward.1} parent=1 // pred_check_branch
      %79 = sbr.rel (0) target = $region61
    $region60: #{net_forward.1} parent=1 // pred_region
      %80 = dma.done [#allocation6], 32768
    $region61: #{net_forward.1} parent=1 // pred_fallthru
      _
    // Predicated region
    $region62: #{net_forward.1} parent=1 // pred_check
      _
    $region63: #{net_forward.1} parent=1 // pred_check_branch
      %82 = sbr.rel (0) target = $region65
    $region64: #{net_forward.1} parent=1 // pred_region
      %83 = dma.done [#allocation6], 16
    $region65: #{net_forward.1} parent=1 // pred_fallthru
      _
    %v84 = vld [vmem:[%s0] sm:$0xff]
    %v85 = vld [vmem:[%s0 + $0x8] sm:$0xff]
    %v86 = vld [vmem:[%s0 + $0x10] sm:$0xff]
    %v87 = vld [vmem:[%s0 + $0x18] sm:$0xff]
    %v88 = vld [vmem:[%s0 + $0x20] sm:$0xff]
    %v89 = vld [vmem:[%s0 + $0x28] sm:$0xff]
    %v90 = vld [vmem:[%s0 + $0x30] sm:$0xff]
    %v91 = vld [vmem:[%s0 + $0x38] sm:$0xff]
    %v92 = vld [vmem:[%s1] sm:$0x1]
    %v94 = vlaneseq
    %v95 = vshrl.u32 %v94, 7
    %v96 = vsub.s32 0, %v95
    %v97 = vrot.slane %v92, %v96
    %v99 = vsub.f32 %v84, %v97
    %v100 = vsub.f32 %v85, %v97
    %v101 = vsub.f32 %v86, %v97
    %v102 = vsub.f32 %v87, %v97
    %v103 = vsub.f32 %v88, %v97
    %v104 = vsub.f32 %v89, %v97
    %v105 = vsub.f32 %v90, %v97
    %v106 = vsub.f32 %v91, %v97
    %v107 = vld [vmem:[%s2] sm:$0xff]
    %v108 = vld [vmem:[%s2 + $0x8] sm:$0xff]
    %v109 = vld [vmem:[%s2 + $0x10] sm:$0xff]
    %v110 = vld [vmem:[%s2 + $0x18] sm:$0xff]
    %vm111 = vcmask 523264
    %v113 = vsel %vm111, %v107, 0
    %v116 = vsel %vm111, %v108, 0
    %v119 = vsel %vm111, %v109, 0
    %v122 = vsel %vm111, %v110, 0
    %124 = vmatprep.subr.mxu0 0.0
    %125 = vmatpush1.msra.mxu0 %v99
    %126 = vmatprep.subr.mxu0 0.0
    %127 = vmatpush1.msra.mxu0 %v100
    %128 = vmatprep.subr.mxu0 0.0
    %129 = vmatpush1.msra.mxu0 %v101
    %130 = vmatprep.subr.mxu0 0.0
    %131 = vmatpush1.msra.mxu0 %v102
    %132 = vmatprep.subr.mxu0 0.0
    %133 = vmatpush1.msra.mxu0 %v103
    %134 = vmatprep.subr.mxu0 0.0
    %135 = vmatpush1.msra.mxu0 %v104
    %136 = vmatprep.subr.mxu0 0.0
    %137 = vmatpush1.msra.mxu0 %v105
    %138 = vmatprep.subr.mxu0 0.0
    %139 = vmatpush1.msra.mxu0 %v106
    %140 = vmatprep.subr.mxu0 0.0
    %141 = vmatpush1.msra.mxu0 0.0
    %142 = vmatprep.subr.mxu0 0.0
    %143 = vmatpush1.msra.mxu0 0.0
    %144 = vmatprep.subr.mxu0 0.0
    %145 = vmatpush1.msra.mxu0 0.0
    %146 = vmatprep.subr.mxu0 0.0
    %147 = vmatpush1.msra.mxu0 0.0
    %148 = vmatprep.subr.mxu0 0.0
    %149 = vmatpush1.msra.mxu0 0.0
    %150 = vmatprep.subr.mxu0 0.0
    %151 = vmatpush1.msra.mxu0 0.0
    %152 = vmatprep.subr.mxu0 0.0
    %153 = vmatpush1.msra.mxu0 0.0
    %154 = vmatprep.subr.mxu0 0.0
    %155 = vmatpush1.msra.mxu0 0.0
    %156 = vmatprep.subr.mxu0 0.0
    %157 = vmatpush1.msra.mxu0 0.0
    %158 = vmatprep.subr.mxu0 0.0
    %159 = vmatpush1.msra.mxu0 0.0
    %160 = vmatprep.subr.mxu0 0.0
    %161 = vmatpush1.msra.mxu0 0.0
    %162 = vmatprep.subr.mxu0 0.0
    %163 = vmatpush1.msra.mxu0 0.0
    %164 = vmatprep.subr.mxu0 0.0
    %165 = vmatpush1.msra.mxu0 0.0
    %166 = vmatprep.subr.mxu0 0.0
    %167 = vmatpush1.msra.mxu0 0.0
    %168 = vmatprep.subr.mxu0 0.0
    %169 = vmatpush1.msra.mxu0 0.0
    %170 = vmatprep.subr.mxu0 0.0
    %171 = vmatpush1.msra.mxu0 0.0
    %172 = vmatprep.subr.mxu0 0.0
    %173 = vmatpush1.msra.mxu0 0.0
    %174 = vmatprep.subr.mxu0 0.0
    %175 = vmatpush1.msra.mxu0 0.0
    %176 = vmatprep.subr.mxu0 0.0
    %177 = vmatpush1.msra.mxu0 0.0
    %178 = vmatprep.subr.mxu0 0.0
    %179 = vmatpush1.msra.mxu0 0.0
    %180 = vmatprep.subr.mxu0 0.0
    %181 = vmatpush1.msra.mxu0 0.0
    %182 = vmatprep.subr.mxu0 0.0
    %183 = vmatpush1.msra.mxu0 0.0
    %184 = vmatprep.subr.mxu0 0.0
    %185 = vmatpush1.msra.mxu0 0.0
    %186 = vmatprep.subr.mxu0 0.0
    %187 = vmatpush1.msra.mxu0 0.0
    %188 = vmatprep.mubr.f32.mxu0 0.0
    %189 = vmatmul.mubr.f32.gmra.mrb[0].mxu0 %v113
    %v190 = vpop.f32.mrb[0].mxu0
    %v191 = vadd.f32 0.0, %v190
    %v192 = vpop.f32.mrb[0].mxu0
    %193 = vmatprep.mubr.f32.mxu0 0.0
    %194 = vmatmul.mubr.f32.gmra.mrb[0].mxu0 %v116
    %v195 = vpop.f32.mrb[0].mxu0
    %v196 = vadd.f32 0.0, %v195
    %v197 = vpop.f32.mrb[0].mxu0
    %198 = vmatprep.mubr.f32.mxu0 0.0
    %199 = vmatmul.mubr.f32.gmra.mrb[0].mxu0 %v119
    %v200 = vpop.f32.mrb[0].mxu0
    %v201 = vadd.f32 0.0, %v200
    %v202 = vpop.f32.mrb[0].mxu0
    %203 = vmatprep.mubr.f32.mxu0 0.0
    %204 = vmatmul.mubr.f32.gmra.mrb[0].mxu0 %v122
    %v205 = vpop.f32.mrb[0].mxu0
    %v206 = vadd.f32 0.0, %v205
    %v207 = vpop.f32.mrb[0].mxu0
    %208 = vdwg.mxu0
    %v209 = vld [vmem:[%s3] sm:$0xff]
    %v210 = vld [vmem:[%s3 + $0x8] sm:$0xff]
    %v211 = vld [vmem:[%s3 + $0x10] sm:$0xff]
    %v212 = vld [vmem:[%s3 + $0x18] sm:$0xff]
    %v213 = vld [vmem:[%s3 + $0x20] sm:$0xff]
    %v214 = vld [vmem:[%s3 + $0x28] sm:$0xff]
    %v215 = vld [vmem:[%s3 + $0x30] sm:$0xff]
    %v216 = vld [vmem:[%s3 + $0x38] sm:$0xff]
    %v217 = vld [vmem:[%s3 + $0x40] sm:$0xff]
    %v218 = vld [vmem:[%s3 + $0x48] sm:$0xff]
    %v219 = vld [vmem:[%s3 + $0x50] sm:$0xff]
    %v220 = vld [vmem:[%s3 + $0x58] sm:$0xff]
    %v221 = vld [vmem:[%s3 + $0x60] sm:$0xff]
    %v222 = vld [vmem:[%s3 + $0x68] sm:$0xff]
    %v223 = vld [vmem:[%s3 + $0x70] sm:$0xff]
    %v224 = vld [vmem:[%s3 + $0x78] sm:$0xff]
    %v225 = vld [vmem:[%s3 + $0x80] sm:$0xff]
    %v226 = vld [vmem:[%s3 + $0x88] sm:$0xff]
    %v227 = vld [vmem:[%s3 + $0x90] sm:$0xff]
    %v228 = vld [vmem:[%s3 + $0x98] sm:$0xff]
    %v229 = vld [vmem:[%s3 + $0xa0] sm:$0xff]
    %v230 = vld [vmem:[%s3 + $0xa8] sm:$0xff]
    %v231 = vld [vmem:[%s3 + $0xb0] sm:$0xff]
    %v232 = vld [vmem:[%s3 + $0xb8] sm:$0xff]
    %s233 = scalar_lea.vmem %s2, 32
    %v234 = vld [vmem:[%s233] sm:$0xff]
    %v235 = vld [vmem:[%s233 + $0x8] sm:$0xff]
    %v236 = vld [vmem:[%s233 + $0x10] sm:$0xff]
    %v237 = vld [vmem:[%s233 + $0x18] sm:$0xff]
    %v239 = vsel %vm111, %v234, 0
    %v242 = vsel %vm111, %v235, 0
    %v245 = vsel %vm111, %v236, 0
    %v248 = vsel %vm111, %v237, 0
    %250 = vmatprep.subr.mxu0 0.0
    %251 = vmatpush1.msra.mxu0 %v99
    %252 = vmatprep.subr.mxu0 0.0
    %253 = vmatpush1.msra.mxu0 %v100
    %254 = vmatprep.subr.mxu0 0.0
    %255 = vmatpush1.msra.mxu0 %v101
    %256 = vmatprep.subr.mxu0 0.0
    %257 = vmatpush1.msra.mxu0 %v102
    %258 = vmatprep.subr.mxu0 0.0
    %259 = vmatpush1.msra.mxu0 %v103
    %260 = vmatprep.subr.mxu0 0.0
    %261 = vmatpush1.msra.mxu0 %v104
    %262 = vmatprep.subr.mxu0 0.0
    %263 = vmatpush1.msra.mxu0 %v105
    %264 = vmatprep.subr.mxu0 0.0
    %265 = vmatpush1.msra.mxu0 %v106
    %266 = vmatprep.subr.mxu0 0.0
    %267 = vmatpush1.msra.mxu0 0.0
    %268 = vmatprep.subr.mxu0 0.0
    %269 = vmatpush1.msra.mxu0 0.0
    %270 = vmatprep.subr.mxu0 0.0
    %271 = vmatpush1.msra.mxu0 0.0
    %272 = vmatprep.subr.mxu0 0.0
    %273 = vmatpush1.msra.mxu0 0.0
    %274 = vmatprep.subr.mxu0 0.0
    %275 = vmatpush1.msra.mxu0 0.0
    %276 = vmatprep.subr.mxu0 0.0
    %277 = vmatpush1.msra.mxu0 0.0
    %278 = vmatprep.subr.mxu0 0.0
    %279 = vmatpush1.msra.mxu0 0.0
    %280 = vmatprep.subr.mxu0 0.0
    %281 = vmatpush1.msra.mxu0 0.0
    %282 = vmatprep.subr.mxu0 0.0
    %283 = vmatpush1.msra.mxu0 0.0
    %284 = vmatprep.subr.mxu0 0.0
    %285 = vmatpush1.msra.mxu0 0.0
    %286 = vmatprep.subr.mxu0 0.0
    %287 = vmatpush1.msra.mxu0 0.0
    %288 = vmatprep.subr.mxu0 0.0
    %289 = vmatpush1.msra.mxu0 0.0
    %290 = vmatprep.subr.mxu0 0.0
    %291 = vmatpush1.msra.mxu0 0.0
    %292 = vmatprep.subr.mxu0 0.0
    %293 = vmatpush1.msra.mxu0 0.0
    %294 = vmatprep.subr.mxu0 0.0
    %295 = vmatpush1.msra.mxu0 0.0
    %296 = vmatprep.subr.mxu0 0.0
    %297 = vmatpush1.msra.mxu0 0.0
    %298 = vmatprep.subr.mxu0 0.0
    %299 = vmatpush1.msra.mxu0 0.0
    %300 = vmatprep.subr.mxu0 0.0
    %301 = vmatpush1.msra.mxu0 0.0
    %302 = vmatprep.subr.mxu0 0.0
    %303 = vmatpush1.msra.mxu0 0.0
    %304 = vmatprep.subr.mxu0 0.0
    %305 = vmatpush1.msra.mxu0 0.0
    %306 = vmatprep.subr.mxu0 0.0
    %307 = vmatpush1.msra.mxu0 0.0
    %308 = vmatprep.subr.mxu0 0.0
    %309 = vmatpush1.msra.mxu0 0.0
    %310 = vmatprep.subr.mxu0 0.0
    %311 = vmatpush1.msra.mxu0 0.0
    %312 = vmatprep.subr.mxu0 0.0
    %313 = vmatpush1.msra.mxu0 0.0
    %314 = vmatprep.mubr.f32.mxu0 0.0
    %315 = vmatmul.mubr.f32.gmra.mrb[0].mxu0 %v239
    %v316 = vpop.f32.mrb[0].mxu0
    %v317 = vadd.f32 0.0, %v316
    %v318 = vpop.f32.mrb[0].mxu0
    %319 = vmatprep.mubr.f32.mxu0 0.0
    %320 = vmatmul.mubr.f32.gmra.mrb[0].mxu0 %v242
    %v321 = vpop.f32.mrb[0].mxu0
    %v322 = vadd.f32 0.0, %v321
    %v323 = vpop.f32.mrb[0].mxu0
    %324 = vmatprep.mubr.f32.mxu0 0.0
    %325 = vmatmul.mubr.f32.gmra.mrb[0].mxu0 %v245
    %v326 = vpop.f32.mrb[0].mxu0
    %v327 = vadd.f32 0.0, %v326
    %v328 = vpop.f32.mrb[0].mxu0
    %329 = vmatprep.mubr.f32.mxu0 0.0
    %330 = vmatmul.mubr.f32.gmra.mrb[0].mxu0 %v248
    %v331 = vpop.f32.mrb[0].mxu0
    %v332 = vadd.f32 0.0, %v331
    %v333 = vpop.f32.mrb[0].mxu0
    %334 = vdwg.mxu0
    %s335 = scalar_lea.vmem %s3, 192
    %v336 = vld [vmem:[%s335] sm:$0xff]
    %v337 = vld [vmem:[%s335 + $0x8] sm:$0xff]
    %v338 = vld [vmem:[%s335 + $0x10] sm:$0xff]
    %v339 = vld [vmem:[%s335 + $0x18] sm:$0xff]
    %v340 = vld [vmem:[%s335 + $0x20] sm:$0xff]
    %v341 = vld [vmem:[%s335 + $0x28] sm:$0xff]
    %v342 = vld [vmem:[%s335 + $0x30] sm:$0xff]
    %v343 = vld [vmem:[%s335 + $0x38] sm:$0xff]
    %v344 = vld [vmem:[%s335 + $0x40] sm:$0xff]
    %v345 = vld [vmem:[%s335 + $0x48] sm:$0xff]
    %v346 = vld [vmem:[%s335 + $0x50] sm:$0xff]
    %v347 = vld [vmem:[%s335 + $0x58] sm:$0xff]
    %v348 = vld [vmem:[%s335 + $0x60] sm:$0xff]
    %v349 = vld [vmem:[%s335 + $0x68] sm:$0xff]
    %v350 = vld [vmem:[%s335 + $0x70] sm:$0xff]
    %v351 = vld [vmem:[%s335 + $0x78] sm:$0xff]
    %v352 = vld [vmem:[%s335 + $0x80] sm:$0xff]
    %v353 = vld [vmem:[%s335 + $0x88] sm:$0xff]
    %v354 = vld [vmem:[%s335 + $0x90] sm:$0xff]
    %v355 = vld [vmem:[%s335 + $0x98] sm:$0xff]
    %v356 = vld [vmem:[%s335 + $0xa0] sm:$0xff]
    %v357 = vld [vmem:[%s335 + $0xa8] sm:$0xff]
    %v358 = vld [vmem:[%s335 + $0xb0] sm:$0xff]
    %v359 = vld [vmem:[%s335 + $0xb8] sm:$0xff]
    %vm360 = vcmask 785408
    %v362 = vsel %vm360, %v317, 0
    %v365 = vsel %vm360, %v322, 0
    %v368 = vsel %vm360, %v327, 0
    %v371 = vsel %vm360, %v332, 0
    %373 = vmatprep.subr.mxu0 %v337
    %374 = vmatpush1.msra.mxu0 %v336
    %375 = vmatprep.subr.mxu0 %v339
    %376 = vmatpush1.msra.mxu0 %v338
    %377 = vmatprep.subr.mxu0 %v341
    %378 = vmatpush1.msra.mxu0 %v340
    %379 = vmatprep.subr.mxu0 %v343
    %380 = vmatpush1.msra.mxu0 %v342
    %381 = vmatprep.subr.mxu0 %v345
    %382 = vmatpush1.msra.mxu0 %v344
    %383 = vmatprep.subr.mxu0 %v347
    %384 = vmatpush1.msra.mxu0 %v346
    %385 = vmatprep.subr.mxu0 %v349
    %386 = vmatpush1.msra.mxu0 %v348
    %387 = vmatprep.subr.mxu0 %v351
    %388 = vmatpush1.msra.mxu0 %v350
    %389 = vmatprep.subr.mxu0 %v353
    %390 = vmatpush1.msra.mxu0 %v352
    %391 = vmatprep.subr.mxu0 %v355
    %392 = vmatpush1.msra.mxu0 %v354
    %393 = vmatprep.subr.mxu0 %v357
    %394 = vmatpush1.msra.mxu0 %v356
    %395 = vmatprep.subr.mxu0 %v359
    %396 = vmatpush1.msra.mxu0 %v358
    %397 = vmatprep.subr.mxu0 0.0
    %398 = vmatpush1.msra.mxu0 0.0
    %399 = vmatprep.subr.mxu0 0.0
    %400 = vmatpush1.msra.mxu0 0.0
    %401 = vmatprep.subr.mxu0 0.0
    %402 = vmatpush1.msra.mxu0 0.0
    %403 = vmatprep.subr.mxu0 0.0
    %404 = vmatpush1.msra.mxu0 0.0
    %405 = vmatprep.subr.mxu0 0.0
    %406 = vmatpush1.msra.mxu0 0.0
    %407 = vmatprep.subr.mxu0 0.0
    %408 = vmatpush1.msra.mxu0 0.0
    %409 = vmatprep.subr.mxu0 0.0
    %410 = vmatpush1.msra.mxu0 0.0
    %411 = vmatprep.subr.mxu0 0.0
    %412 = vmatpush1.msra.mxu0 0.0
    %413 = vmatprep.subr.mxu0 0.0
    %414 = vmatpush1.msra.mxu0 0.0
    %415 = vmatprep.subr.mxu0 0.0
    %416 = vmatpush1.msra.mxu0 0.0
    %417 = vmatprep.subr.mxu0 0.0
    %418 = vmatpush1.msra.mxu0 0.0
    %419 = vmatprep.subr.mxu0 0.0
    %420 = vmatpush1.msra.mxu0 0.0
    %421 = vmatprep.subr.mxu0 0.0
    %422 = vmatpush1.msra.mxu0 0.0
    %423 = vmatprep.subr.mxu0 0.0
    %424 = vmatpush1.msra.mxu0 0.0
    %425 = vmatprep.subr.mxu0 0.0
    %426 = vmatpush1.msra.mxu0 0.0
    %427 = vmatprep.subr.mxu0 0.0
    %428 = vmatpush1.msra.mxu0 0.0
    %429 = vmatprep.subr.mxu0 0.0
    %430 = vmatpush1.msra.mxu0 0.0
    %431 = vmatprep.subr.mxu0 0.0
    %432 = vmatpush1.msra.mxu0 0.0
    %433 = vmatprep.subr.mxu0 0.0
    %434 = vmatpush1.msra.mxu0 0.0
    %435 = vmatprep.subr.mxu0 0.0
    %436 = vmatpush1.msra.mxu0 0.0
    %437 = vmatprep.mubr.f32.mxu0 0.0
    %438 = vmatmul.mubr.f32.gmra.mrb[0].mxu0 %v362
    %v439 = vpop.f32.mrb[0].mxu0
    %v440 = vadd.f32 0.0, %v439
    %v441 = vpop.f32.mrb[0].mxu0
    %v442 = vadd.f32 0.0, %v441
    %443 = vmatprep.mubr.f32.mxu0 0.0
    %444 = vmatmul.mubr.f32.gmra.mrb[0].mxu0 %v365
    %v445 = vpop.f32.mrb[0].mxu0
    %v446 = vadd.f32 0.0, %v445
    %v447 = vpop.f32.mrb[0].mxu0
    %v448 = vadd.f32 0.0, %v447
    %449 = vmatprep.mubr.f32.mxu0 0.0
    %450 = vmatmul.mubr.f32.gmra.mrb[0].mxu0 %v368
    %v451 = vpop.f32.mrb[0].mxu0
    %v452 = vadd.f32 0.0, %v451
    %v453 = vpop.f32.mrb[0].mxu0
    %v454 = vadd.f32 0.0, %v453
    %455 = vmatprep.mubr.f32.mxu0 0.0
    %456 = vmatmul.mubr.f32.gmra.mrb[0].mxu0 %v371
    %v457 = vpop.f32.mrb[0].mxu0
    %v458 = vadd.f32 0.0, %v457
    %v459 = vpop.f32.mrb[0].mxu0
    %v460 = vadd.f32 0.0, %v459
    %461 = vdwg.mxu0
    %v463 = vsel %vm360, %v191, 0
    %v466 = vsel %vm360, %v196, 0
    %v469 = vsel %vm360, %v201, 0
    %v472 = vsel %vm360, %v206, 0
    %474 = vmatprep.subr.mxu0 %v210
    %475 = vmatpush1.msra.mxu0 %v209
    %476 = vmatprep.subr.mxu0 %v212
    %477 = vmatpush1.msra.mxu0 %v211
    %478 = vmatprep.subr.mxu0 %v214
    %479 = vmatpush1.msra.mxu0 %v213
    %480 = vmatprep.subr.mxu0 %v216
    %481 = vmatpush1.msra.mxu0 %v215
    %482 = vmatprep.subr.mxu0 %v218
    %483 = vmatpush1.msra.mxu0 %v217
    %484 = vmatprep.subr.mxu0 %v220
    %485 = vmatpush1.msra.mxu0 %v219
    %486 = vmatprep.subr.mxu0 %v222
    %487 = vmatpush1.msra.mxu0 %v221
    %488 = vmatprep.subr.mxu0 %v224
    %489 = vmatpush1.msra.mxu0 %v223
    %490 = vmatprep.subr.mxu0 %v226
    %491 = vmatpush1.msra.mxu0 %v225
    %492 = vmatprep.subr.mxu0 %v228
    %493 = vmatpush1.msra.mxu0 %v227
    %494 = vmatprep.subr.mxu0 %v230
    %495 = vmatpush1.msra.mxu0 %v229
    %496 = vmatprep.subr.mxu0 %v232
    %497 = vmatpush1.msra.mxu0 %v231
    %498 = vmatprep.subr.mxu0 0.0
    %499 = vmatpush1.msra.mxu0 0.0
    %500 = vmatprep.subr.mxu0 0.0
    %501 = vmatpush1.msra.mxu0 0.0
    %502 = vmatprep.subr.mxu0 0.0
    %503 = vmatpush1.msra.mxu0 0.0
    %504 = vmatprep.subr.mxu0 0.0
    %505 = vmatpush1.msra.mxu0 0.0
    %506 = vmatprep.subr.mxu0 0.0
    %507 = vmatpush1.msra.mxu0 0.0
    %508 = vmatprep.subr.mxu0 0.0
    %509 = vmatpush1.msra.mxu0 0.0
    %510 = vmatprep.subr.mxu0 0.0
    %511 = vmatpush1.msra.mxu0 0.0
    %512 = vmatprep.subr.mxu0 0.0
    %513 = vmatpush1.msra.mxu0 0.0
    %514 = vmatprep.subr.mxu0 0.0
    %515 = vmatpush1.msra.mxu0 0.0
    %516 = vmatprep.subr.mxu0 0.0
    %517 = vmatpush1.msra.mxu0 0.0
    %518 = vmatprep.subr.mxu0 0.0
    %519 = vmatpush1.msra.mxu0 0.0
    %520 = vmatprep.subr.mxu0 0.0
    %521 = vmatpush1.msra.mxu0 0.0
    %522 = vmatprep.subr.mxu0 0.0
    %523 = vmatpush1.msra.mxu0 0.0
    %524 = vmatprep.subr.mxu0 0.0
    %525 = vmatpush1.msra.mxu0 0.0
    %526 = vmatprep.subr.mxu0 0.0
    %527 = vmatpush1.msra.mxu0 0.0
    %528 = vmatprep.subr.mxu0 0.0
    %529 = vmatpush1.msra.mxu0 0.0
    %530 = vmatprep.subr.mxu0 0.0
    %531 = vmatpush1.msra.mxu0 0.0
    %532 = vmatprep.subr.mxu0 0.0
    %533 = vmatpush1.msra.mxu0 0.0
    %534 = vmatprep.subr.mxu0 0.0
    %535 = vmatpush1.msra.mxu0 0.0
    %536 = vmatprep.subr.mxu0 0.0
    %537 = vmatpush1.msra.mxu0 0.0
    %538 = vmatprep.mubr.f32.mxu0 0.0
    %539 = vmatmul.mubr.f32.gmra.mrb[0].mxu0 %v463
    %v540 = vpop.f32.mrb[0].mxu0
    %v541 = vadd.f32 %v440, %v540
    %v542 = vpop.f32.mrb[0].mxu0
    %v543 = vadd.f32 %v442, %v542
    %544 = vmatprep.mubr.f32.mxu0 0.0
    %545 = vmatmul.mubr.f32.gmra.mrb[0].mxu0 %v466
    %v546 = vpop.f32.mrb[0].mxu0
    %v547 = vadd.f32 %v446, %v546
    %v548 = vpop.f32.mrb[0].mxu0
    %v549 = vadd.f32 %v448, %v548
    %550 = vmatprep.mubr.f32.mxu0 0.0
    %551 = vmatmul.mubr.f32.gmra.mrb[0].mxu0 %v469
    %v552 = vpop.f32.mrb[0].mxu0
    %v553 = vadd.f32 %v452, %v552
    %v554 = vpop.f32.mrb[0].mxu0
    %v555 = vadd.f32 %v454, %v554
    %556 = vmatprep.mubr.f32.mxu0 0.0
    %557 = vmatmul.mubr.f32.gmra.mrb[0].mxu0 %v472
    %v558 = vpop.f32.mrb[0].mxu0
    %v559 = vadd.f32 %v458, %v558
    %v560 = vpop.f32.mrb[0].mxu0
    %v561 = vadd.f32 %v460, %v560
    %562 = vdwg.mxu0
    %s563 = scalar_lea.vmem %s2, 64
    %v564 = vld [vmem:[%s563] sm:$0xff]
    %v565 = vld [vmem:[%s563 + $0x8] sm:$0xff]
    %v566 = vld [vmem:[%s563 + $0x10] sm:$0xff]
    %v567 = vld [vmem:[%s563 + $0x18] sm:$0xff]
    %v569 = vsel %vm111, %v564, 0
    %v572 = vsel %vm111, %v565, 0
    %v575 = vsel %vm111, %v566, 0
    %v578 = vsel %vm111, %v567, 0
    %580 = vmatprep.subr.mxu0 0.0
    %581 = vmatpush1.msra.mxu0 %v99
    %582 = vmatprep.subr.mxu0 0.0
    %583 = vmatpush1.msra.mxu0 %v100
    %584 = vmatprep.subr.mxu0 0.0
    %585 = vmatpush1.msra.mxu0 %v101
    %586 = vmatprep.subr.mxu0 0.0
    %587 = vmatpush1.msra.mxu0 %v102
    %588 = vmatprep.subr.mxu0 0.0
    %589 = vmatpush1.msra.mxu0 %v103
    %590 = vmatprep.subr.mxu0 0.0
    %591 = vmatpush1.msra.mxu0 %v104
    %592 = vmatprep.subr.mxu0 0.0
    %593 = vmatpush1.msra.mxu0 %v105
    %594 = vmatprep.subr.mxu0 0.0
    %595 = vmatpush1.msra.mxu0 %v106
    %596 = vmatprep.subr.mxu0 0.0
    %597 = vmatpush1.msra.mxu0 0.0
    %598 = vmatprep.subr.mxu0 0.0
    %599 = vmatpush1.msra.mxu0 0.0
    %600 = vmatprep.subr.mxu0 0.0
    %601 = vmatpush1.msra.mxu0 0.0
    %602 = vmatprep.subr.mxu0 0.0
    %603 = vmatpush1.msra.mxu0 0.0
    %604 = vmatprep.subr.mxu0 0.0
    %605 = vmatpush1.msra.mxu0 0.0
    %606 = vmatprep.subr.mxu0 0.0
    %607 = vmatpush1.msra.mxu0 0.0
    %608 = vmatprep.subr.mxu0 0.0
    %609 = vmatpush1.msra.mxu0 0.0
    %610 = vmatprep.subr.mxu0 0.0
    %611 = vmatpush1.msra.mxu0 0.0
    %612 = vmatprep.subr.mxu0 0.0
    %613 = vmatpush1.msra.mxu0 0.0
    %614 = vmatprep.subr.mxu0 0.0
    %615 = vmatpush1.msra.mxu0 0.0
    %616 = vmatprep.subr.mxu0 0.0
    %617 = vmatpush1.msra.mxu0 0.0
    %618 = vmatprep.subr.mxu0 0.0
    %619 = vmatpush1.msra.mxu0 0.0
    %620 = vmatprep.subr.mxu0 0.0
    %621 = vmatpush1.msra.mxu0 0.0
    %622 = vmatprep.subr.mxu0 0.0
    %623 = vmatpush1.msra.mxu0 0.0
    %624 = vmatprep.subr.mxu0 0.0
    %625 = vmatpush1.msra.mxu0 0.0
    %626 = vmatprep.subr.mxu0 0.0
    %627 = vmatpush1.msra.mxu0 0.0
    %628 = vmatprep.subr.mxu0 0.0
    %629 = vmatpush1.msra.mxu0 0.0
    %630 = vmatprep.subr.mxu0 0.0
    %631 = vmatpush1.msra.mxu0 0.0
    %632 = vmatprep.subr.mxu0 0.0
    %633 = vmatpush1.msra.mxu0 0.0
    %634 = vmatprep.subr.mxu0 0.0
    %635 = vmatpush1.msra.mxu0 0.0
    %636 = vmatprep.subr.mxu0 0.0
    %637 = vmatpush1.msra.mxu0 0.0
    %638 = vmatprep.subr.mxu0 0.0
    %639 = vmatpush1.msra.mxu0 0.0
    %640 = vmatprep.subr.mxu0 0.0
    %641 = vmatpush1.msra.mxu0 0.0
    %642 = vmatprep.subr.mxu0 0.0
    %643 = vmatpush1.msra.mxu0 0.0
    %644 = vmatprep.mubr.f32.mxu0 0.0
    %645 = vmatmul.mubr.f32.gmra.mrb[0].mxu0 %v569
    %v646 = vpop.f32.mrb[0].mxu0
    %v647 = vadd.f32 0.0, %v646
    %v648 = vpop.f32.mrb[0].mxu0
    %649 = vmatprep.mubr.f32.mxu0 0.0
    %650 = vmatmul.mubr.f32.gmra.mrb[0].mxu0 %v572
    %v651 = vpop.f32.mrb[0].mxu0
    %v652 = vadd.f32 0.0, %v651
    %v653 = vpop.f32.mrb[0].mxu0
    %654 = vmatprep.mubr.f32.mxu0 0.0
    %655 = vmatmul.mubr.f32.gmra.mrb[0].mxu0 %v575
    %v656 = vpop.f32.mrb[0].mxu0
    %v657 = vadd.f32 0.0, %v656
    %v658 = vpop.f32.mrb[0].mxu0
    %659 = vmatprep.mubr.f32.mxu0 0.0
    %660 = vmatmul.mubr.f32.gmra.mrb[0].mxu0 %v578
    %v661 = vpop.f32.mrb[0].mxu0
    %v662 = vadd.f32 0.0, %v661
    %v663 = vpop.f32.mrb[0].mxu0
    %664 = vdwg.mxu0
    %s665 = scalar_lea.vmem %s3, 384
    %v666 = vld [vmem:[%s665] sm:$0xff]
    %v667 = vld [vmem:[%s665 + $0x8] sm:$0xff]
    %v668 = vld [vmem:[%s665 + $0x10] sm:$0xff]
    %v669 = vld [vmem:[%s665 + $0x18] sm:$0xff]
    %v670 = vld [vmem:[%s665 + $0x20] sm:$0xff]
    %v671 = vld [vmem:[%s665 + $0x28] sm:$0xff]
    %v672 = vld [vmem:[%s665 + $0x30] sm:$0xff]
    %v673 = vld [vmem:[%s665 + $0x38] sm:$0xff]
    %v674 = vld [vmem:[%s665 + $0x40] sm:$0xff]
    %v675 = vld [vmem:[%s665 + $0x48] sm:$0xff]
    %v676 = vld [vmem:[%s665 + $0x50] sm:$0xff]
    %v677 = vld [vmem:[%s665 + $0x58] sm:$0xff]
    %v678 = vld [vmem:[%s665 + $0x60] sm:$0xff]
    %v679 = vld [vmem:[%s665 + $0x68] sm:$0xff]
    %v680 = vld [vmem:[%s665 + $0x70] sm:$0xff]
    %v681 = vld [vmem:[%s665 + $0x78] sm:$0xff]
    %v682 = vld [vmem:[%s665 + $0x80] sm:$0xff]
    %v683 = vld [vmem:[%s665 + $0x88] sm:$0xff]
    %v684 = vld [vmem:[%s665 + $0x90] sm:$0xff]
    %v685 = vld [vmem:[%s665 + $0x98] sm:$0xff]
    %v686 = vld [vmem:[%s665 + $0xa0] sm:$0xff]
    %v687 = vld [vmem:[%s665 + $0xa8] sm:$0xff]
    %v688 = vld [vmem:[%s665 + $0xb0] sm:$0xff]
    %v689 = vld [vmem:[%s665 + $0xb8] sm:$0xff]
    %v691 = vsel %vm360, %v647, 0
    %v694 = vsel %vm360, %v652, 0
    %v697 = vsel %vm360, %v657, 0
    %v700 = vsel %vm360, %v662, 0
    %702 = vmatprep.subr.mxu0 %v667
    %703 = vmatpush1.msra.mxu0 %v666
    %704 = vmatprep.subr.mxu0 %v669
    %705 = vmatpush1.msra.mxu0 %v668
    %706 = vmatprep.subr.mxu0 %v671
    %707 = vmatpush1.msra.mxu0 %v670
    %708 = vmatprep.subr.mxu0 %v673
    %709 = vmatpush1.msra.mxu0 %v672
    %710 = vmatprep.subr.mxu0 %v675
    %711 = vmatpush1.msra.mxu0 %v674
    %712 = vmatprep.subr.mxu0 %v677
    %713 = vmatpush1.msra.mxu0 %v676
    %714 = vmatprep.subr.mxu0 %v679
    %715 = vmatpush1.msra.mxu0 %v678
    %716 = vmatprep.subr.mxu0 %v681
    %717 = vmatpush1.msra.mxu0 %v680
    %718 = vmatprep.subr.mxu0 %v683
    %719 = vmatpush1.msra.mxu0 %v682
    %720 = vmatprep.subr.mxu0 %v685
    %721 = vmatpush1.msra.mxu0 %v684
    %722 = vmatprep.subr.mxu0 %v687
    %723 = vmatpush1.msra.mxu0 %v686
    %724 = vmatprep.subr.mxu0 %v689
    %725 = vmatpush1.msra.mxu0 %v688
    %726 = vmatprep.subr.mxu0 0.0
    %727 = vmatpush1.msra.mxu0 0.0
    %728 = vmatprep.subr.mxu0 0.0
    %729 = vmatpush1.msra.mxu0 0.0
    %730 = vmatprep.subr.mxu0 0.0
    %731 = vmatpush1.msra.mxu0 0.0
    %732 = vmatprep.subr.mxu0 0.0
    %733 = vmatpush1.msra.mxu0 0.0
    %734 = vmatprep.subr.mxu0 0.0
    %735 = vmatpush1.msra.mxu0 0.0
    %736 = vmatprep.subr.mxu0 0.0
    %737 = vmatpush1.msra.mxu0 0.0
    %738 = vmatprep.subr.mxu0 0.0
    %739 = vmatpush1.msra.mxu0 0.0
    %740 = vmatprep.subr.mxu0 0.0
    %741 = vmatpush1.msra.mxu0 0.0
    %742 = vmatprep.subr.mxu0 0.0
    %743 = vmatpush1.msra.mxu0 0.0
    %744 = vmatprep.subr.mxu0 0.0
    %745 = vmatpush1.msra.mxu0 0.0
    %746 = vmatprep.subr.mxu0 0.0
    %747 = vmatpush1.msra.mxu0 0.0
    %748 = vmatprep.subr.mxu0 0.0
    %749 = vmatpush1.msra.mxu0 0.0
    %750 = vmatprep.subr.mxu0 0.0
    %751 = vmatpush1.msra.mxu0 0.0
    %752 = vmatprep.subr.mxu0 0.0
    %753 = vmatpush1.msra.mxu0 0.0
    %754 = vmatprep.subr.mxu0 0.0
    %755 = vmatpush1.msra.mxu0 0.0
    %756 = vmatprep.subr.mxu0 0.0
    %757 = vmatpush1.msra.mxu0 0.0
    %758 = vmatprep.subr.mxu0 0.0
    %759 = vmatpush1.msra.mxu0 0.0
    %760 = vmatprep.subr.mxu0 0.0
    %761 = vmatpush1.msra.mxu0 0.0
    %762 = vmatprep.subr.mxu0 0.0
    %763 = vmatpush1.msra.mxu0 0.0
    %764 = vmatprep.subr.mxu0 0.0
    %765 = vmatpush1.msra.mxu0 0.0
    %766 = vmatprep.mubr.f32.mxu0 0.0
    %767 = vmatmul.mubr.f32.gmra.mrb[0].mxu0 %v691
    %v768 = vpop.f32.mrb[0].mxu0
    %v769 = vadd.f32 0.0, %v768
    %v770 = vpop.f32.mrb[0].mxu0
    %v771 = vadd.f32 0.0, %v770
    %772 = vmatprep.mubr.f32.mxu0 0.0
    %773 = vmatmul.mubr.f32.gmra.mrb[0].mxu0 %v694
    %v774 = vpop.f32.mrb[0].mxu0
    %v775 = vadd.f32 0.0, %v774
    %v776 = vpop.f32.mrb[0].mxu0
    %v777 = vadd.f32 0.0, %v776
    %778 = vmatprep.mubr.f32.mxu0 0.0
    %779 = vmatmul.mubr.f32.gmra.mrb[0].mxu0 %v697
    %v780 = vpop.f32.mrb[0].mxu0
    %v781 = vadd.f32 0.0, %v780
    %v782 = vpop.f32.mrb[0].mxu0
    %v783 = vadd.f32 0.0, %v782
    %784 = vmatprep.mubr.f32.mxu0 0.0
    %785 = vmatmul.mubr.f32.gmra.mrb[0].mxu0 %v700
    %v786 = vpop.f32.mrb[0].mxu0
    %v787 = vadd.f32 0.0, %v786
    %v788 = vpop.f32.mrb[0].mxu0
    %v789 = vadd.f32 0.0, %v788
    %790 = vdwg.mxu0
    %v791 = vadd.f32 %v541, %v769
    %v792 = vadd.f32 %v543, %v771
    %v793 = vadd.f32 %v547, %v775
    %v794 = vadd.f32 %v549, %v777
    %v795 = vadd.f32 %v553, %v781
    %v796 = vadd.f32 %v555, %v783
    %v797 = vadd.f32 %v559, %v787
    %v798 = vadd.f32 %v561, %v789
    %s799 = scalar_lea.vmem %s2, 96
    %v800 = vld [vmem:[%s799] sm:$0xff]
    %v801 = vld [vmem:[%s799 + $0x8] sm:$0xff]
    %v802 = vld [vmem:[%s799 + $0x10] sm:$0xff]
    %v803 = vld [vmem:[%s799 + $0x18] sm:$0xff]
    %v805 = vsel %vm111, %v800, 0
    %v808 = vsel %vm111, %v801, 0
    %v811 = vsel %vm111, %v802, 0
    %v814 = vsel %vm111, %v803, 0
    %816 = vmatprep.subr.mxu0 0.0
    %817 = vmatpush1.msra.mxu0 %v99
    %818 = vmatprep.subr.mxu0 0.0
    %819 = vmatpush1.msra.mxu0 %v100
    %820 = vmatprep.subr.mxu0 0.0
    %821 = vmatpush1.msra.mxu0 %v101
    %822 = vmatprep.subr.mxu0 0.0
    %823 = vmatpush1.msra.mxu0 %v102
    %824 = vmatprep.subr.mxu0 0.0
    %825 = vmatpush1.msra.mxu0 %v103
    %826 = vmatprep.subr.mxu0 0.0
    %827 = vmatpush1.msra.mxu0 %v104
    %828 = vmatprep.subr.mxu0 0.0
    %829 = vmatpush1.msra.mxu0 %v105
    %830 = vmatprep.subr.mxu0 0.0
    %831 = vmatpush1.msra.mxu0 %v106
    %832 = vmatprep.subr.mxu0 0.0
    %833 = vmatpush1.msra.mxu0 0.0
    %834 = vmatprep.subr.mxu0 0.0
    %835 = vmatpush1.msra.mxu0 0.0
    %836 = vmatprep.subr.mxu0 0.0
    %837 = vmatpush1.msra.mxu0 0.0
    %838 = vmatprep.subr.mxu0 0.0
    %839 = vmatpush1.msra.mxu0 0.0
    %840 = vmatprep.subr.mxu0 0.0
    %841 = vmatpush1.msra.mxu0 0.0
    %842 = vmatprep.subr.mxu0 0.0
    %843 = vmatpush1.msra.mxu0 0.0
    %844 = vmatprep.subr.mxu0 0.0
    %845 = vmatpush1.msra.mxu0 0.0
    %846 = vmatprep.subr.mxu0 0.0
    %847 = vmatpush1.msra.mxu0 0.0
    %848 = vmatprep.subr.mxu0 0.0
    %849 = vmatpush1.msra.mxu0 0.0
    %850 = vmatprep.subr.mxu0 0.0
    %851 = vmatpush1.msra.mxu0 0.0
    %852 = vmatprep.subr.mxu0 0.0
    %853 = vmatpush1.msra.mxu0 0.0
    %854 = vmatprep.subr.mxu0 0.0
    %855 = vmatpush1.msra.mxu0 0.0
    %856 = vmatprep.subr.mxu0 0.0
    %857 = vmatpush1.msra.mxu0 0.0
    %858 = vmatprep.subr.mxu0 0.0
    %859 = vmatpush1.msra.mxu0 0.0
    %860 = vmatprep.subr.mxu0 0.0
    %861 = vmatpush1.msra.mxu0 0.0
    %862 = vmatprep.subr.mxu0 0.0
    %863 = vmatpush1.msra.mxu0 0.0
    %864 = vmatprep.subr.mxu0 0.0
    %865 = vmatpush1.msra.mxu0 0.0
    %866 = vmatprep.subr.mxu0 0.0
    %867 = vmatpush1.msra.mxu0 0.0
    %868 = vmatprep.subr.mxu0 0.0
    %869 = vmatpush1.msra.mxu0 0.0
    %870 = vmatprep.subr.mxu0 0.0
    %871 = vmatpush1.msra.mxu0 0.0
    %872 = vmatprep.subr.mxu0 0.0
    %873 = vmatpush1.msra.mxu0 0.0
    %874 = vmatprep.subr.mxu0 0.0
    %875 = vmatpush1.msra.mxu0 0.0
    %876 = vmatprep.subr.mxu0 0.0
    %877 = vmatpush1.msra.mxu0 0.0
    %878 = vmatprep.subr.mxu0 0.0
    %879 = vmatpush1.msra.mxu0 0.0
    %880 = vmatprep.mubr.f32.mxu0 0.0
    %881 = vmatmul.mubr.f32.gmra.mrb[0].mxu0 %v805
    %v882 = vpop.f32.mrb[0].mxu0
    %v883 = vadd.f32 0.0, %v882
    %v884 = vpop.f32.mrb[0].mxu0
    %885 = vmatprep.mubr.f32.mxu0 0.0
    %886 = vmatmul.mubr.f32.gmra.mrb[0].mxu0 %v808
    %v887 = vpop.f32.mrb[0].mxu0
    %v888 = vadd.f32 0.0, %v887
    %v889 = vpop.f32.mrb[0].mxu0
    %890 = vmatprep.mubr.f32.mxu0 0.0
    %891 = vmatmul.mubr.f32.gmra.mrb[0].mxu0 %v811
    %v892 = vpop.f32.mrb[0].mxu0
    %v893 = vadd.f32 0.0, %v892
    %v894 = vpop.f32.mrb[0].mxu0
    %895 = vmatprep.mubr.f32.mxu0 0.0
    %896 = vmatmul.mubr.f32.gmra.mrb[0].mxu0 %v814
    %v897 = vpop.f32.mrb[0].mxu0
    %v898 = vadd.f32 0.0, %v897
    %v899 = vpop.f32.mrb[0].mxu0
    %900 = vdwg.mxu0
    %s901 = scalar_lea.vmem %s3, 576
    %v902 = vld [vmem:[%s901] sm:$0xff]
    %v903 = vld [vmem:[%s901 + $0x8] sm:$0xff]
    %v904 = vld [vmem:[%s901 + $0x10] sm:$0xff]
    %v905 = vld [vmem:[%s901 + $0x18] sm:$0xff]
    %v906 = vld [vmem:[%s901 + $0x20] sm:$0xff]
    %v907 = vld [vmem:[%s901 + $0x28] sm:$0xff]
    %v908 = vld [vmem:[%s901 + $0x30] sm:$0xff]
    %v909 = vld [vmem:[%s901 + $0x38] sm:$0xff]
    %v910 = vld [vmem:[%s901 + $0x40] sm:$0xff]
    %v911 = vld [vmem:[%s901 + $0x48] sm:$0xff]
    %v912 = vld [vmem:[%s901 + $0x50] sm:$0xff]
    %v913 = vld [vmem:[%s901 + $0x58] sm:$0xff]
    %v914 = vld [vmem:[%s901 + $0x60] sm:$0xff]
    %v915 = vld [vmem:[%s901 + $0x68] sm:$0xff]
    %v916 = vld [vmem:[%s901 + $0x70] sm:$0xff]
    %v917 = vld [vmem:[%s901 + $0x78] sm:$0xff]
    %v918 = vld [vmem:[%s901 + $0x80] sm:$0xff]
    %v919 = vld [vmem:[%s901 + $0x88] sm:$0xff]
    %v920 = vld [vmem:[%s901 + $0x90] sm:$0xff]
    %v921 = vld [vmem:[%s901 + $0x98] sm:$0xff]
    %v922 = vld [vmem:[%s901 + $0xa0] sm:$0xff]
    %v923 = vld [vmem:[%s901 + $0xa8] sm:$0xff]
    %v924 = vld [vmem:[%s901 + $0xb0] sm:$0xff]
    %v925 = vld [vmem:[%s901 + $0xb8] sm:$0xff]
    %v927 = vsel %vm360, %v883, 0
    %v930 = vsel %vm360, %v888, 0
    %v933 = vsel %vm360, %v893, 0
    %v936 = vsel %vm360, %v898, 0
    %938 = vmatprep.subr.mxu0 %v903
    %939 = vmatpush1.msra.mxu0 %v902
    %940 = vmatprep.subr.mxu0 %v905
    %941 = vmatpush1.msra.mxu0 %v904
    %942 = vmatprep.subr.mxu0 %v907
    %943 = vmatpush1.msra.mxu0 %v906
    %944 = vmatprep.subr.mxu0 %v909
    %945 = vmatpush1.msra.mxu0 %v908
    %946 = vmatprep.subr.mxu0 %v911
    %947 = vmatpush1.msra.mxu0 %v910
    %948 = vmatprep.subr.mxu0 %v913
    %949 = vmatpush1.msra.mxu0 %v912
    %950 = vmatprep.subr.mxu0 %v915
    %951 = vmatpush1.msra.mxu0 %v914
    %952 = vmatprep.subr.mxu0 %v917
    %953 = vmatpush1.msra.mxu0 %v916
    %954 = vmatprep.subr.mxu0 %v919
    %955 = vmatpush1.msra.mxu0 %v918
    %956 = vmatprep.subr.mxu0 %v921
    %957 = vmatpush1.msra.mxu0 %v920
    %958 = vmatprep.subr.mxu0 %v923
    %959 = vmatpush1.msra.mxu0 %v922
    %960 = vmatprep.subr.mxu0 %v925
    %961 = vmatpush1.msra.mxu0 %v924
    %962 = vmatprep.subr.mxu0 0.0
    %963 = vmatpush1.msra.mxu0 0.0
    %964 = vmatprep.subr.mxu0 0.0
    %965 = vmatpush1.msra.mxu0 0.0
    %966 = vmatprep.subr.mxu0 0.0
    %967 = vmatpush1.msra.mxu0 0.0
    %968 = vmatprep.subr.mxu0 0.0
    %969 = vmatpush1.msra.mxu0 0.0
    %970 = vmatprep.subr.mxu0 0.0
    %971 = vmatpush1.msra.mxu0 0.0
    %972 = vmatprep.subr.mxu0 0.0
    %973 = vmatpush1.msra.mxu0 0.0
    %974 = vmatprep.subr.mxu0 0.0
    %975 = vmatpush1.msra.mxu0 0.0
    %976 = vmatprep.subr.mxu0 0.0
    %977 = vmatpush1.msra.mxu0 0.0
    %978 = vmatprep.subr.mxu0 0.0
    %979 = vmatpush1.msra.mxu0 0.0
    %980 = vmatprep.subr.mxu0 0.0
    %981 = vmatpush1.msra.mxu0 0.0
    %982 = vmatprep.subr.mxu0 0.0
    %983 = vmatpush1.msra.mxu0 0.0
    %984 = vmatprep.subr.mxu0 0.0
    %985 = vmatpush1.msra.mxu0 0.0
    %986 = vmatprep.subr.mxu0 0.0
    %987 = vmatpush1.msra.mxu0 0.0
    %988 = vmatprep.subr.mxu0 0.0
    %989 = vmatpush1.msra.mxu0 0.0
    %990 = vmatprep.subr.mxu0 0.0
    %991 = vmatpush1.msra.mxu0 0.0
    %992 = vmatprep.subr.mxu0 0.0
    %993 = vmatpush1.msra.mxu0 0.0
    %994 = vmatprep.subr.mxu0 0.0
    %995 = vmatpush1.msra.mxu0 0.0
    %996 = vmatprep.subr.mxu0 0.0
    %997 = vmatpush1.msra.mxu0 0.0
    %998 = vmatprep.subr.mxu0 0.0
    %999 = vmatpush1.msra.mxu0 0.0
    %1000 = vmatprep.subr.mxu0 0.0
    %1001 = vmatpush1.msra.mxu0 0.0
    %1002 = vmatprep.mubr.f32.mxu0 0.0
    %1003 = vmatmul.mubr.f32.gmra.mrb[0].mxu0 %v927
    %v1004 = vpop.f32.mrb[0].mxu0
    %v1005 = vadd.f32 0.0, %v1004
    %v1006 = vpop.f32.mrb[0].mxu0
    %v1007 = vadd.f32 0.0, %v1006
    %1008 = vmatprep.mubr.f32.mxu0 0.0
    %1009 = vmatmul.mubr.f32.gmra.mrb[0].mxu0 %v930
    %v1010 = vpop.f32.mrb[0].mxu0
    %v1011 = vadd.f32 0.0, %v1010
    %v1012 = vpop.f32.mrb[0].mxu0
    %v1013 = vadd.f32 0.0, %v1012
    %1014 = vmatprep.mubr.f32.mxu0 0.0
    %1015 = vmatmul.mubr.f32.gmra.mrb[0].mxu0 %v933
    %v1016 = vpop.f32.mrb[0].mxu0
    %v1017 = vadd.f32 0.0, %v1016
    %v1018 = vpop.f32.mrb[0].mxu0
    %v1019 = vadd.f32 0.0, %v1018
    %1020 = vmatprep.mubr.f32.mxu0 0.0
    %1021 = vmatmul.mubr.f32.gmra.mrb[0].mxu0 %v936
    %v1022 = vpop.f32.mrb[0].mxu0
    %v1023 = vadd.f32 0.0, %v1022
    %v1024 = vpop.f32.mrb[0].mxu0
    %v1025 = vadd.f32 0.0, %v1024
    %1026 = vdwg.mxu0
    %v1027 = vadd.f32 %v791, %v1005
    %v1028 = vadd.f32 %v792, %v1007
    %v1029 = vadd.f32 %v793, %v1011
    %v1030 = vadd.f32 %v794, %v1013
    %v1031 = vadd.f32 %v795, %v1017
    %v1032 = vadd.f32 %v796, %v1019
    %v1033 = vadd.f32 %v797, %v1023
    %v1034 = vadd.f32 %v798, %v1025
    %v1035 = vld [vmem:[%s4] sm:$0x3]
    %v1037 = vlaneseq
    %v1038 = vshrl.u32 %v1037, 7
    %v1039 = vsub.s32 0, %v1038
    %v1040 = vrot.slane %v1035, %v1039
    %v1041 = vlaneseq
    %v1042 = vshrl.u32 %v1041, 7
    %v1043 = vsub.s32 1, %v1042
    %v1044 = vrot.slane %v1035, %v1043
    %v1047 = vadd.f32 %v1027, %v1040
    %v1048 = vadd.f32 %v1028, %v1044
    %v1049 = vadd.f32 %v1029, %v1040
    %v1050 = vadd.f32 %v1030, %v1044
    %v1051 = vadd.f32 %v1031, %v1040
    %v1052 = vadd.f32 %v1032, %v1044
    %v1053 = vadd.f32 %v1033, %v1040
    %v1054 = vadd.f32 %v1034, %v1044
    %v1055 = vmax.f32 %v1047, 0.0
    %v1056 = vmax.f32 %v1048, 0.0
    %v1057 = vmax.f32 %v1049, 0.0
    %v1058 = vmax.f32 %v1050, 0.0
    %v1059 = vmax.f32 %v1051, 0.0
    %v1060 = vmax.f32 %v1052, 0.0
    %v1061 = vmax.f32 %v1053, 0.0
    %v1062 = vmax.f32 %v1054, 0.0
    %v1063 = vld [vmem:[%s5] sm:$0xff]
    %v1064 = vld [vmem:[%s5 + $0x8] sm:$0xff]
    %vm1065 = vcmask 261120
    %v1067 = vsel %vm1065, %v1063, 0
    %v1070 = vsel %vm1065, %v1064, 0
    %1072 = vmatprep.subr.mxu0 %v1056
    %1073 = vmatpush1.msra.mxu0 %v1055
    %1074 = vmatprep.subr.mxu0 %v1058
    %1075 = vmatpush1.msra.mxu0 %v1057
    %1076 = vmatprep.subr.mxu0 %v1060
    %1077 = vmatpush1.msra.mxu0 %v1059
    %1078 = vmatprep.subr.mxu0 %v1062
    %1079 = vmatpush1.msra.mxu0 %v1061
    %1080 = vmatprep.subr.mxu0 0.0
    %1081 = vmatpush1.msra.mxu0 0.0
    %1082 = vmatprep.subr.mxu0 0.0
    %1083 = vmatpush1.msra.mxu0 0.0
    %1084 = vmatprep.subr.mxu0 0.0
    %1085 = vmatpush1.msra.mxu0 0.0
    %1086 = vmatprep.subr.mxu0 0.0
    %1087 = vmatpush1.msra.mxu0 0.0
    %1088 = vmatprep.subr.mxu0 0.0
    %1089 = vmatpush1.msra.mxu0 0.0
    %1090 = vmatprep.subr.mxu0 0.0
    %1091 = vmatpush1.msra.mxu0 0.0
    %1092 = vmatprep.subr.mxu0 0.0
    %1093 = vmatpush1.msra.mxu0 0.0
    %1094 = vmatprep.subr.mxu0 0.0
    %1095 = vmatpush1.msra.mxu0 0.0
    %1096 = vmatprep.subr.mxu0 0.0
    %1097 = vmatpush1.msra.mxu0 0.0
    %1098 = vmatprep.subr.mxu0 0.0
    %1099 = vmatpush1.msra.mxu0 0.0
    %1100 = vmatprep.subr.mxu0 0.0
    %1101 = vmatpush1.msra.mxu0 0.0
    %1102 = vmatprep.subr.mxu0 0.0
    %1103 = vmatpush1.msra.mxu0 0.0
    %1104 = vmatprep.subr.mxu0 0.0
    %1105 = vmatpush1.msra.mxu0 0.0
    %1106 = vmatprep.subr.mxu0 0.0
    %1107 = vmatpush1.msra.mxu0 0.0
    %1108 = vmatprep.subr.mxu0 0.0
    %1109 = vmatpush1.msra.mxu0 0.0
    %1110 = vmatprep.subr.mxu0 0.0
    %1111 = vmatpush1.msra.mxu0 0.0
    %1112 = vmatprep.subr.mxu0 0.0
    %1113 = vmatpush1.msra.mxu0 0.0
    %1114 = vmatprep.subr.mxu0 0.0
    %1115 = vmatpush1.msra.mxu0 0.0
    %1116 = vmatprep.subr.mxu0 0.0
    %1117 = vmatpush1.msra.mxu0 0.0
    %1118 = vmatprep.subr.mxu0 0.0
    %1119 = vmatpush1.msra.mxu0 0.0
    %1120 = vmatprep.subr.mxu0 0.0
    %1121 = vmatpush1.msra.mxu0 0.0
    %1122 = vmatprep.subr.mxu0 0.0
    %1123 = vmatpush1.msra.mxu0 0.0
    %1124 = vmatprep.subr.mxu0 0.0
    %1125 = vmatpush1.msra.mxu0 0.0
    %1126 = vmatprep.subr.mxu0 0.0
    %1127 = vmatpush1.msra.mxu0 0.0
    %1128 = vmatprep.subr.mxu0 0.0
    %1129 = vmatpush1.msra.mxu0 0.0
    %1130 = vmatprep.subr.mxu0 0.0
    %1131 = vmatpush1.msra.mxu0 0.0
    %1132 = vmatprep.subr.mxu0 0.0
    %1133 = vmatpush1.msra.mxu0 0.0
    %1134 = vmatprep.subr.mxu0 0.0
    %1135 = vmatpush1.msra.mxu0 0.0
    %1136 = vmatprep.mubr.f32.mxu0 0.0
    %1137 = vmatmul.mubr.f32.gmra.mrb[0].mxu0 %v1067
    %v1138 = vpop.f32.mrb[0].mxu0
    %v1139 = vadd.f32 0.0, %v1138
    %v1140 = vpop.f32.mrb[0].mxu0
    %v1141 = vadd.f32 0.0, %v1140
    %1142 = vmatprep.mubr.f32.mxu0 0.0
    %1143 = vmatmul.mubr.f32.gmra.mrb[0].mxu0 %v1070
    %v1144 = vpop.f32.mrb[0].mxu0
    %v1145 = vadd.f32 0.0, %v1144
    %v1146 = vpop.f32.mrb[0].mxu0
    %v1147 = vadd.f32 0.0, %v1146
    %1148 = vdwg.mxu0
    %v1149 = vld [vmem:[#allocation2] sm:$0xff]
    %v1150 = vld [vmem:[#allocation2 + $0x8] sm:$0xff]
    %v1151 = vld [vmem:[#allocation2 + $0x10] sm:$0xff]
    %v1152 = vld [vmem:[#allocation2 + $0x18] sm:$0xff]
    %v1153 = vld [vmem:[#allocation2 + $0x20] sm:$0xff]
    %v1154 = vld [vmem:[#allocation2 + $0x28] sm:$0xff]
    %v1155 = vld [vmem:[#allocation2 + $0x30] sm:$0xff]
    %v1156 = vld [vmem:[#allocation2 + $0x38] sm:$0xff]
    %v1157 = vld [vmem:[#allocation2 + $0x40] sm:$0xff]
    %v1158 = vld [vmem:[#allocation2 + $0x48] sm:$0xff]
    %v1159 = vld [vmem:[#allocation2 + $0x50] sm:$0xff]
    %v1160 = vld [vmem:[#allocation2 + $0x58] sm:$0xff]
    %v1161 = vld [vmem:[#allocation2 + $0x60] sm:$0xff]
    %v1162 = vld [vmem:[#allocation2 + $0x68] sm:$0xff]
    %v1163 = vld [vmem:[#allocation2 + $0x70] sm:$0xff]
    %v1164 = vld [vmem:[#allocation2 + $0x78] sm:$0xff]
    %v1165 = vld [vmem:[#allocation2 + $0x80] sm:$0xff]
    %v1166 = vld [vmem:[#allocation2 + $0x88] sm:$0xff]
    %v1167 = vld [vmem:[#allocation2 + $0x90] sm:$0xff]
    %v1168 = vld [vmem:[#allocation2 + $0x98] sm:$0xff]
    %v1169 = vld [vmem:[#allocation2 + $0xa0] sm:$0xff]
    %v1170 = vld [vmem:[#allocation2 + $0xa8] sm:$0xff]
    %v1171 = vld [vmem:[#allocation2 + $0xb0] sm:$0xff]
    %v1172 = vld [vmem:[#allocation2 + $0xb8] sm:$0xff]
    %v1173 = vld [vmem:[#allocation2 + $0xc0] sm:$0xff]
    %v1174 = vld [vmem:[#allocation2 + $0xc8] sm:$0xff]
    %v1175 = vld [vmem:[#allocation2 + $0xd0] sm:$0xff]
    %v1176 = vld [vmem:[#allocation2 + $0xd8] sm:$0xff]
    %v1177 = vld [vmem:[#allocation2 + $0xe0] sm:$0xff]
    %v1178 = vld [vmem:[#allocation2 + $0xe8] sm:$0xff]
    %v1179 = vld [vmem:[#allocation2 + $0xf0] sm:$0xff]
    %v1180 = vld [vmem:[#allocation2 + $0xf8] sm:$0xff]
    %v1181 = vld [vmem:[#allocation2 + $0x100] sm:$0xff]
    %v1182 = vld [vmem:[#allocation2 + $0x108] sm:$0xff]
    %v1183 = vld [vmem:[#allocation2 + $0x110] sm:$0xff]
    %v1184 = vld [vmem:[#allocation2 + $0x118] sm:$0xff]
    %v1185 = vld [vmem:[#allocation2 + $0x120] sm:$0xff]
    %v1186 = vld [vmem:[#allocation2 + $0x128] sm:$0xff]
    %v1187 = vld [vmem:[#allocation2 + $0x130] sm:$0xff]
    %v1188 = vld [vmem:[#allocation2 + $0x138] sm:$0xff]
    %v1189 = vld [vmem:[#allocation2 + $0x140] sm:$0xff]
    %v1190 = vld [vmem:[#allocation2 + $0x148] sm:$0xff]
    %v1191 = vld [vmem:[#allocation2 + $0x150] sm:$0xff]
    %v1192 = vld [vmem:[#allocation2 + $0x158] sm:$0xff]
    %v1193 = vld [vmem:[#allocation2 + $0x160] sm:$0xff]
    %v1194 = vld [vmem:[#allocation2 + $0x168] sm:$0xff]
    %v1195 = vld [vmem:[#allocation2 + $0x170] sm:$0xff]
    %v1196 = vld [vmem:[#allocation2 + $0x178] sm:$0xff]
    %v1197 = vld [vmem:[#allocation2 + $0x180] sm:$0xff]
    %v1198 = vld [vmem:[#allocation2 + $0x188] sm:$0xff]
    %v1199 = vld [vmem:[#allocation2 + $0x190] sm:$0xff]
    %v1200 = vld [vmem:[#allocation2 + $0x198] sm:$0xff]
    %v1201 = vld [vmem:[#allocation2 + $0x1a0] sm:$0xff]
    %v1202 = vld [vmem:[#allocation2 + $0x1a8] sm:$0xff]
    %v1203 = vld [vmem:[#allocation2 + $0x1b0] sm:$0xff]
    %v1204 = vld [vmem:[#allocation2 + $0x1b8] sm:$0xff]
    %v1205 = vld [vmem:[#allocation2 + $0x1c0] sm:$0xff]
    %v1206 = vld [vmem:[#allocation2 + $0x1c8] sm:$0xff]
    %v1207 = vld [vmem:[#allocation2 + $0x1d0] sm:$0xff]
    %v1208 = vld [vmem:[#allocation2 + $0x1d8] sm:$0xff]
    %v1209 = vld [vmem:[#allocation2 + $0x1e0] sm:$0xff]
    %v1210 = vld [vmem:[#allocation2 + $0x1e8] sm:$0xff]
    %v1211 = vld [vmem:[#allocation2 + $0x1f0] sm:$0xff]
    %v1212 = vld [vmem:[#allocation2 + $0x1f8] sm:$0xff]
    %s1213 = scalar_lea.vmem %s5, 16
    %v1214 = vld [vmem:[%s1213] sm:$0xff]
    %v1215 = vld [vmem:[%s1213 + $0x8] sm:$0xff]
    %v1217 = vsel %vm1065, %v1214, 0
    %v1220 = vsel %vm1065, %v1215, 0
    %1222 = vmatprep.subr.mxu0 %v1056
    %1223 = vmatpush1.msra.mxu0 %v1055
    %1224 = vmatprep.subr.mxu0 %v1058
    %1225 = vmatpush1.msra.mxu0 %v1057
    %1226 = vmatprep.subr.mxu0 %v1060
    %1227 = vmatpush1.msra.mxu0 %v1059
    %1228 = vmatprep.subr.mxu0 %v1062
    %1229 = vmatpush1.msra.mxu0 %v1061
    %1230 = vmatprep.subr.mxu0 0.0
    %1231 = vmatpush1.msra.mxu0 0.0
    %1232 = vmatprep.subr.mxu0 0.0
    %1233 = vmatpush1.msra.mxu0 0.0
    %1234 = vmatprep.subr.mxu0 0.0
    %1235 = vmatpush1.msra.mxu0 0.0
    %1236 = vmatprep.subr.mxu0 0.0
    %1237 = vmatpush1.msra.mxu0 0.0
    %1238 = vmatprep.subr.mxu0 0.0
    %1239 = vmatpush1.msra.mxu0 0.0
    %1240 = vmatprep.subr.mxu0 0.0
    %1241 = vmatpush1.msra.mxu0 0.0
    %1242 = vmatprep.subr.mxu0 0.0
    %1243 = vmatpush1.msra.mxu0 0.0
    %1244 = vmatprep.subr.mxu0 0.0
    %1245 = vmatpush1.msra.mxu0 0.0
    %1246 = vmatprep.subr.mxu0 0.0
    %1247 = vmatpush1.msra.mxu0 0.0
    %1248 = vmatprep.subr.mxu0 0.0
    %1249 = vmatpush1.msra.mxu0 0.0
    %1250 = vmatprep.subr.mxu0 0.0
    %1251 = vmatpush1.msra.mxu0 0.0
    %1252 = vmatprep.subr.mxu0 0.0
    %1253 = vmatpush1.msra.mxu0 0.0
    %1254 = vmatprep.subr.mxu0 0.0
    %1255 = vmatpush1.msra.mxu0 0.0
    %1256 = vmatprep.subr.mxu0 0.0
    %1257 = vmatpush1.msra.mxu0 0.0
    %1258 = vmatprep.subr.mxu0 0.0
    %1259 = vmatpush1.msra.mxu0 0.0
    %1260 = vmatprep.subr.mxu0 0.0
    %1261 = vmatpush1.msra.mxu0 0.0
    %1262 = vmatprep.subr.mxu0 0.0
    %1263 = vmatpush1.msra.mxu0 0.0
    %1264 = vmatprep.subr.mxu0 0.0
    %1265 = vmatpush1.msra.mxu0 0.0
    %1266 = vmatprep.subr.mxu0 0.0
    %1267 = vmatpush1.msra.mxu0 0.0
    %1268 = vmatprep.subr.mxu0 0.0
    %1269 = vmatpush1.msra.mxu0 0.0
    %1270 = vmatprep.subr.mxu0 0.0
    %1271 = vmatpush1.msra.mxu0 0.0
    %1272 = vmatprep.subr.mxu0 0.0
    %1273 = vmatpush1.msra.mxu0 0.0
    %1274 = vmatprep.subr.mxu0 0.0
    %1275 = vmatpush1.msra.mxu0 0.0
    %1276 = vmatprep.subr.mxu0 0.0
    %1277 = vmatpush1.msra.mxu0 0.0
    %1278 = vmatprep.subr.mxu0 0.0
    %1279 = vmatpush1.msra.mxu0 0.0
    %1280 = vmatprep.subr.mxu0 0.0
    %1281 = vmatpush1.msra.mxu0 0.0
    %1282 = vmatprep.subr.mxu0 0.0
    %1283 = vmatpush1.msra.mxu0 0.0
    %1284 = vmatprep.subr.mxu0 0.0
    %1285 = vmatpush1.msra.mxu0 0.0
    %1286 = vmatprep.mubr.f32.mxu0 0.0
    %1287 = vmatmul.mubr.f32.gmra.mrb[0].mxu0 %v1217
    %v1288 = vpop.f32.mrb[0].mxu0
    %v1289 = vadd.f32 0.0, %v1288
    %v1290 = vpop.f32.mrb[0].mxu0
    %v1291 = vadd.f32 0.0, %v1290
    %1292 = vmatprep.mubr.f32.mxu0 0.0
    %1293 = vmatmul.mubr.f32.gmra.mrb[0].mxu0 %v1220
    %v1294 = vpop.f32.mrb[0].mxu0
    %v1295 = vadd.f32 0.0, %v1294
    %v1296 = vpop.f32.mrb[0].mxu0
    %v1297 = vadd.f32 0.0, %v1296
    %1298 = vdwg.mxu0
    %s1299 = scalar_lea.vmem [#allocation2], 512
    %v1300 = vld [vmem:[%s1299] sm:$0xff]
    %v1301 = vld [vmem:[%s1299 + $0x8] sm:$0xff]
    %v1302 = vld [vmem:[%s1299 + $0x10] sm:$0xff]
    %v1303 = vld [vmem:[%s1299 + $0x18] sm:$0xff]
    %v1304 = vld [vmem:[%s1299 + $0x20] sm:$0xff]
    %v1305 = vld [vmem:[%s1299 + $0x28] sm:$0xff]
    %v1306 = vld [vmem:[%s1299 + $0x30] sm:$0xff]
    %v1307 = vld [vmem:[%s1299 + $0x38] sm:$0xff]
    %v1308 = vld [vmem:[%s1299 + $0x40] sm:$0xff]
    %v1309 = vld [vmem:[%s1299 + $0x48] sm:$0xff]
    %v1310 = vld [vmem:[%s1299 + $0x50] sm:$0xff]
    %v1311 = vld [vmem:[%s1299 + $0x58] sm:$0xff]
    %v1312 = vld [vmem:[%s1299 + $0x60] sm:$0xff]
    %v1313 = vld [vmem:[%s1299 + $0x68] sm:$0xff]
    %v1314 = vld [vmem:[%s1299 + $0x70] sm:$0xff]
    %v1315 = vld [vmem:[%s1299 + $0x78] sm:$0xff]
    %v1316 = vld [vmem:[%s1299 + $0x80] sm:$0xff]
    %v1317 = vld [vmem:[%s1299 + $0x88] sm:$0xff]
    %v1318 = vld [vmem:[%s1299 + $0x90] sm:$0xff]
    %v1319 = vld [vmem:[%s1299 + $0x98] sm:$0xff]
    %v1320 = vld [vmem:[%s1299 + $0xa0] sm:$0xff]
    %v1321 = vld [vmem:[%s1299 + $0xa8] sm:$0xff]
    %v1322 = vld [vmem:[%s1299 + $0xb0] sm:$0xff]
    %v1323 = vld [vmem:[%s1299 + $0xb8] sm:$0xff]
    %v1324 = vld [vmem:[%s1299 + $0xc0] sm:$0xff]
    %v1325 = vld [vmem:[%s1299 + $0xc8] sm:$0xff]
    %v1326 = vld [vmem:[%s1299 + $0xd0] sm:$0xff]
    %v1327 = vld [vmem:[%s1299 + $0xd8] sm:$0xff]
    %v1328 = vld [vmem:[%s1299 + $0xe0] sm:$0xff]
    %v1329 = vld [vmem:[%s1299 + $0xe8] sm:$0xff]
    %v1330 = vld [vmem:[%s1299 + $0xf0] sm:$0xff]
    %v1331 = vld [vmem:[%s1299 + $0xf8] sm:$0xff]
    %v1332 = vld [vmem:[%s1299 + $0x100] sm:$0xff]
    %v1333 = vld [vmem:[%s1299 + $0x108] sm:$0xff]
    %v1334 = vld [vmem:[%s1299 + $0x110] sm:$0xff]
    %v1335 = vld [vmem:[%s1299 + $0x118] sm:$0xff]
    %v1336 = vld [vmem:[%s1299 + $0x120] sm:$0xff]
    %v1337 = vld [vmem:[%s1299 + $0x128] sm:$0xff]
    %v1338 = vld [vmem:[%s1299 + $0x130] sm:$0xff]
    %v1339 = vld [vmem:[%s1299 + $0x138] sm:$0xff]
    %v1340 = vld [vmem:[%s1299 + $0x140] sm:$0xff]
    %v1341 = vld [vmem:[%s1299 + $0x148] sm:$0xff]
    %v1342 = vld [vmem:[%s1299 + $0x150] sm:$0xff]
    %v1343 = vld [vmem:[%s1299 + $0x158] sm:$0xff]
    %v1344 = vld [vmem:[%s1299 + $0x160] sm:$0xff]
    %v1345 = vld [vmem:[%s1299 + $0x168] sm:$0xff]
    %v1346 = vld [vmem:[%s1299 + $0x170] sm:$0xff]
    %v1347 = vld [vmem:[%s1299 + $0x178] sm:$0xff]
    %v1348 = vld [vmem:[%s1299 + $0x180] sm:$0xff]
    %v1349 = vld [vmem:[%s1299 + $0x188] sm:$0xff]
    %v1350 = vld [vmem:[%s1299 + $0x190] sm:$0xff]
    %v1351 = vld [vmem:[%s1299 + $0x198] sm:$0xff]
    %v1352 = vld [vmem:[%s1299 + $0x1a0] sm:$0xff]
    %v1353 = vld [vmem:[%s1299 + $0x1a8] sm:$0xff]
    %v1354 = vld [vmem:[%s1299 + $0x1b0] sm:$0xff]
    %v1355 = vld [vmem:[%s1299 + $0x1b8] sm:$0xff]
    %v1356 = vld [vmem:[%s1299 + $0x1c0] sm:$0xff]
    %v1357 = vld [vmem:[%s1299 + $0x1c8] sm:$0xff]
    %v1358 = vld [vmem:[%s1299 + $0x1d0] sm:$0xff]
    %v1359 = vld [vmem:[%s1299 + $0x1d8] sm:$0xff]
    %v1360 = vld [vmem:[%s1299 + $0x1e0] sm:$0xff]
    %v1361 = vld [vmem:[%s1299 + $0x1e8] sm:$0xff]
    %v1362 = vld [vmem:[%s1299 + $0x1f0] sm:$0xff]
    %v1363 = vld [vmem:[%s1299 + $0x1f8] sm:$0xff]
    %1364 = vmatprep.subr.mxu0 %v1301
    %1365 = vmatpush1.msra.mxu0 %v1300
    %1366 = vmatprep.subr.mxu0 %v1303
    %1367 = vmatpush1.msra.mxu0 %v1302
    %1368 = vmatprep.subr.mxu0 %v1305
    %1369 = vmatpush1.msra.mxu0 %v1304
    %1370 = vmatprep.subr.mxu0 %v1307
    %1371 = vmatpush1.msra.mxu0 %v1306
    %1372 = vmatprep.subr.mxu0 %v1309
    %1373 = vmatpush1.msra.mxu0 %v1308
    %1374 = vmatprep.subr.mxu0 %v1311
    %1375 = vmatpush1.msra.mxu0 %v1310
    %1376 = vmatprep.subr.mxu0 %v1313
    %1377 = vmatpush1.msra.mxu0 %v1312
    %1378 = vmatprep.subr.mxu0 %v1315
    %1379 = vmatpush1.msra.mxu0 %v1314
    %1380 = vmatprep.subr.mxu0 %v1317
    %1381 = vmatpush1.msra.mxu0 %v1316
    %1382 = vmatprep.subr.mxu0 %v1319
    %1383 = vmatpush1.msra.mxu0 %v1318
    %1384 = vmatprep.subr.mxu0 %v1321
    %1385 = vmatpush1.msra.mxu0 %v1320
    %1386 = vmatprep.subr.mxu0 %v1323
    %1387 = vmatpush1.msra.mxu0 %v1322
    %1388 = vmatprep.subr.mxu0 %v1325
    %1389 = vmatpush1.msra.mxu0 %v1324
    %1390 = vmatprep.subr.mxu0 %v1327
    %1391 = vmatpush1.msra.mxu0 %v1326
    %1392 = vmatprep.subr.mxu0 %v1329
    %1393 = vmatpush1.msra.mxu0 %v1328
    %1394 = vmatprep.subr.mxu0 %v1331
    %1395 = vmatpush1.msra.mxu0 %v1330
    %1396 = vmatprep.subr.mxu0 %v1333
    %1397 = vmatpush1.msra.mxu0 %v1332
    %1398 = vmatprep.subr.mxu0 %v1335
    %1399 = vmatpush1.msra.mxu0 %v1334
    %1400 = vmatprep.subr.mxu0 %v1337
    %1401 = vmatpush1.msra.mxu0 %v1336
    %1402 = vmatprep.subr.mxu0 %v1339
    %1403 = vmatpush1.msra.mxu0 %v1338
    %1404 = vmatprep.subr.mxu0 %v1341
    %1405 = vmatpush1.msra.mxu0 %v1340
    %1406 = vmatprep.subr.mxu0 %v1343
    %1407 = vmatpush1.msra.mxu0 %v1342
    %1408 = vmatprep.subr.mxu0 %v1345
    %1409 = vmatpush1.msra.mxu0 %v1344
    %1410 = vmatprep.subr.mxu0 %v1347
    %1411 = vmatpush1.msra.mxu0 %v1346
    %1412 = vmatprep.subr.mxu0 %v1349
    %1413 = vmatpush1.msra.mxu0 %v1348
    %1414 = vmatprep.subr.mxu0 %v1351
    %1415 = vmatpush1.msra.mxu0 %v1350
    %1416 = vmatprep.subr.mxu0 %v1353
    %1417 = vmatpush1.msra.mxu0 %v1352
    %1418 = vmatprep.subr.mxu0 %v1355
    %1419 = vmatpush1.msra.mxu0 %v1354
    %1420 = vmatprep.subr.mxu0 %v1357
    %1421 = vmatpush1.msra.mxu0 %v1356
    %1422 = vmatprep.subr.mxu0 %v1359
    %1423 = vmatpush1.msra.mxu0 %v1358
    %1424 = vmatprep.subr.mxu0 %v1361
    %1425 = vmatpush1.msra.mxu0 %v1360
    %1426 = vmatprep.subr.mxu0 %v1363
    %1427 = vmatpush1.msra.mxu0 %v1362
    %1428 = vmatprep.mubr.f32.mxu0 %v1291
    %1429 = vmatmul.mubr.f32.gmra.mrb[0].mxu0 %v1289
    %v1430 = vpop.f32.mrb[0].mxu0
    %v1431 = vadd.f32 0.0, %v1430
    %v1432 = vpop.f32.mrb[0].mxu0
    %v1433 = vadd.f32 0.0, %v1432
    %1434 = vmatprep.mubr.f32.mxu0 %v1297
    %1435 = vmatmul.mubr.f32.gmra.mrb[0].mxu0 %v1295
    %v1436 = vpop.f32.mrb[0].mxu0
    %v1437 = vadd.f32 0.0, %v1436
    %v1438 = vpop.f32.mrb[0].mxu0
    %v1439 = vadd.f32 0.0, %v1438
    %1440 = vdwg.mxu0
    %1441 = vmatprep.subr.mxu0 %v1150
    %1442 = vmatpush1.msra.mxu0 %v1149
    %1443 = vmatprep.subr.mxu0 %v1152
    %1444 = vmatpush1.msra.mxu0 %v1151
    %1445 = vmatprep.subr.mxu0 %v1154
    %1446 = vmatpush1.msra.mxu0 %v1153
    %1447 = vmatprep.subr.mxu0 %v1156
    %1448 = vmatpush1.msra.mxu0 %v1155
    %1449 = vmatprep.subr.mxu0 %v1158
    %1450 = vmatpush1.msra.mxu0 %v1157
    %1451 = vmatprep.subr.mxu0 %v1160
    %1452 = vmatpush1.msra.mxu0 %v1159
    %1453 = vmatprep.subr.mxu0 %v1162
    %1454 = vmatpush1.msra.mxu0 %v1161
    %1455 = vmatprep.subr.mxu0 %v1164
    %1456 = vmatpush1.msra.mxu0 %v1163
    %1457 = vmatprep.subr.mxu0 %v1166
    %1458 = vmatpush1.msra.mxu0 %v1165
    %1459 = vmatprep.subr.mxu0 %v1168
    %1460 = vmatpush1.msra.mxu0 %v1167
    %1461 = vmatprep.subr.mxu0 %v1170
    %1462 = vmatpush1.msra.mxu0 %v1169
    %1463 = vmatprep.subr.mxu0 %v1172
    %1464 = vmatpush1.msra.mxu0 %v1171
    %1465 = vmatprep.subr.mxu0 %v1174
    %1466 = vmatpush1.msra.mxu0 %v1173
    %1467 = vmatprep.subr.mxu0 %v1176
    %1468 = vmatpush1.msra.mxu0 %v1175
    %1469 = vmatprep.subr.mxu0 %v1178
    %1470 = vmatpush1.msra.mxu0 %v1177
    %1471 = vmatprep.subr.mxu0 %v1180
    %1472 = vmatpush1.msra.mxu0 %v1179
    %1473 = vmatprep.subr.mxu0 %v1182
    %1474 = vmatpush1.msra.mxu0 %v1181
    %1475 = vmatprep.subr.mxu0 %v1184
    %1476 = vmatpush1.msra.mxu0 %v1183
    %1477 = vmatprep.subr.mxu0 %v1186
    %1478 = vmatpush1.msra.mxu0 %v1185
    %1479 = vmatprep.subr.mxu0 %v1188
    %1480 = vmatpush1.msra.mxu0 %v1187
    %1481 = vmatprep.subr.mxu0 %v1190
    %1482 = vmatpush1.msra.mxu0 %v1189
    %1483 = vmatprep.subr.mxu0 %v1192
    %1484 = vmatpush1.msra.mxu0 %v1191
    %1485 = vmatprep.subr.mxu0 %v1194
    %1486 = vmatpush1.msra.mxu0 %v1193
    %1487 = vmatprep.subr.mxu0 %v1196
    %1488 = vmatpush1.msra.mxu0 %v1195
    %1489 = vmatprep.subr.mxu0 %v1198
    %1490 = vmatpush1.msra.mxu0 %v1197
    %1491 = vmatprep.subr.mxu0 %v1200
    %1492 = vmatpush1.msra.mxu0 %v1199
    %1493 = vmatprep.subr.mxu0 %v1202
    %1494 = vmatpush1.msra.mxu0 %v1201
    %1495 = vmatprep.subr.mxu0 %v1204
    %1496 = vmatpush1.msra.mxu0 %v1203
    %1497 = vmatprep.subr.mxu0 %v1206
    %1498 = vmatpush1.msra.mxu0 %v1205
    %1499 = vmatprep.subr.mxu0 %v1208
    %1500 = vmatpush1.msra.mxu0 %v1207
    %1501 = vmatprep.subr.mxu0 %v1210
    %1502 = vmatpush1.msra.mxu0 %v1209
    %1503 = vmatprep.subr.mxu0 %v1212
    %1504 = vmatpush1.msra.mxu0 %v1211
    %1505 = vmatprep.mubr.f32.mxu0 %v1141
    %1506 = vmatmul.mubr.f32.gmra.mrb[0].mxu0 %v1139
    %v1507 = vpop.f32.mrb[0].mxu0
    %v1508 = vadd.f32 %v1431, %v1507
    %v1509 = vpop.f32.mrb[0].mxu0
    %v1510 = vadd.f32 %v1433, %v1509
    %1511 = vmatprep.mubr.f32.mxu0 %v1147
    %1512 = vmatmul.mubr.f32.gmra.mrb[0].mxu0 %v1145
    %v1513 = vpop.f32.mrb[0].mxu0
    %v1514 = vadd.f32 %v1437, %v1513
    %v1515 = vpop.f32.mrb[0].mxu0
    %v1516 = vadd.f32 %v1439, %v1515
    %1517 = vdwg.mxu0
    %s1518 = scalar_lea.vmem %s5, 32
    %v1519 = vld [vmem:[%s1518] sm:$0xff]
    %v1520 = vld [vmem:[%s1518 + $0x8] sm:$0xff]
    %v1522 = vsel %vm1065, %v1519, 0
    %v1525 = vsel %vm1065, %v1520, 0
    %1527 = vmatprep.subr.mxu0 %v1056
    %1528 = vmatpush1.msra.mxu0 %v1055
    %1529 = vmatprep.subr.mxu0 %v1058
    %1530 = vmatpush1.msra.mxu0 %v1057
    %1531 = vmatprep.subr.mxu0 %v1060
    %1532 = vmatpush1.msra.mxu0 %v1059
    %1533 = vmatprep.subr.mxu0 %v1062
    %1534 = vmatpush1.msra.mxu0 %v1061
    %1535 = vmatprep.subr.mxu0 0.0
    %1536 = vmatpush1.msra.mxu0 0.0
    %1537 = vmatprep.subr.mxu0 0.0
    %1538 = vmatpush1.msra.mxu0 0.0
    %1539 = vmatprep.subr.mxu0 0.0
    %1540 = vmatpush1.msra.mxu0 0.0
    %1541 = vmatprep.subr.mxu0 0.0
    %1542 = vmatpush1.msra.mxu0 0.0
    %1543 = vmatprep.subr.mxu0 0.0
    %1544 = vmatpush1.msra.mxu0 0.0
    %1545 = vmatprep.subr.mxu0 0.0
    %1546 = vmatpush1.msra.mxu0 0.0
    %1547 = vmatprep.subr.mxu0 0.0
    %1548 = vmatpush1.msra.mxu0 0.0
    %1549 = vmatprep.subr.mxu0 0.0
    %1550 = vmatpush1.msra.mxu0 0.0
    %1551 = vmatprep.subr.mxu0 0.0
    %1552 = vmatpush1.msra.mxu0 0.0
    %1553 = vmatprep.subr.mxu0 0.0
    %1554 = vmatpush1.msra.mxu0 0.0
    %1555 = vmatprep.subr.mxu0 0.0
    %1556 = vmatpush1.msra.mxu0 0.0
    %1557 = vmatprep.subr.mxu0 0.0
    %1558 = vmatpush1.msra.mxu0 0.0
    %1559 = vmatprep.subr.mxu0 0.0
    %1560 = vmatpush1.msra.mxu0 0.0
    %1561 = vmatprep.subr.mxu0 0.0
    %1562 = vmatpush1.msra.mxu0 0.0
    %1563 = vmatprep.subr.mxu0 0.0
    %1564 = vmatpush1.msra.mxu0 0.0
    %1565 = vmatprep.subr.mxu0 0.0
    %1566 = vmatpush1.msra.mxu0 0.0
    %1567 = vmatprep.subr.mxu0 0.0
    %1568 = vmatpush1.msra.mxu0 0.0
    %1569 = vmatprep.subr.mxu0 0.0
    %1570 = vmatpush1.msra.mxu0 0.0
    %1571 = vmatprep.subr.mxu0 0.0
    %1572 = vmatpush1.msra.mxu0 0.0
    %1573 = vmatprep.subr.mxu0 0.0
    %1574 = vmatpush1.msra.mxu0 0.0
    %1575 = vmatprep.subr.mxu0 0.0
    %1576 = vmatpush1.msra.mxu0 0.0
    %1577 = vmatprep.subr.mxu0 0.0
    %1578 = vmatpush1.msra.mxu0 0.0
    %1579 = vmatprep.subr.mxu0 0.0
    %1580 = vmatpush1.msra.mxu0 0.0
    %1581 = vmatprep.subr.mxu0 0.0
    %1582 = vmatpush1.msra.mxu0 0.0
    %1583 = vmatprep.subr.mxu0 0.0
    %1584 = vmatpush1.msra.mxu0 0.0
    %1585 = vmatprep.subr.mxu0 0.0
    %1586 = vmatpush1.msra.mxu0 0.0
    %1587 = vmatprep.subr.mxu0 0.0
    %1588 = vmatpush1.msra.mxu0 0.0
    %1589 = vmatprep.subr.mxu0 0.0
    %1590 = vmatpush1.msra.mxu0 0.0
    %1591 = vmatprep.mubr.f32.mxu0 0.0
    %1592 = vmatmul.mubr.f32.gmra.mrb[0].mxu0 %v1522
    %v1593 = vpop.f32.mrb[0].mxu0
    %v1594 = vadd.f32 0.0, %v1593
    %v1595 = vpop.f32.mrb[0].mxu0
    %v1596 = vadd.f32 0.0, %v1595
    %1597 = vmatprep.mubr.f32.mxu0 0.0
    %1598 = vmatmul.mubr.f32.gmra.mrb[0].mxu0 %v1525
    %v1599 = vpop.f32.mrb[0].mxu0
    %v1600 = vadd.f32 0.0, %v1599
    %v1601 = vpop.f32.mrb[0].mxu0
    %v1602 = vadd.f32 0.0, %v1601
    %1603 = vdwg.mxu0
    %s1604 = scalar_lea.vmem [#allocation2], 1024
    %v1605 = vld [vmem:[%s1604] sm:$0xff]
    %v1606 = vld [vmem:[%s1604 + $0x8] sm:$0xff]
    %v1607 = vld [vmem:[%s1604 + $0x10] sm:$0xff]
    %v1608 = vld [vmem:[%s1604 + $0x18] sm:$0xff]
    %v1609 = vld [vmem:[%s1604 + $0x20] sm:$0xff]
    %v1610 = vld [vmem:[%s1604 + $0x28] sm:$0xff]
    %v1611 = vld [vmem:[%s1604 + $0x30] sm:$0xff]
    %v1612 = vld [vmem:[%s1604 + $0x38] sm:$0xff]
    %v1613 = vld [vmem:[%s1604 + $0x40] sm:$0xff]
    %v1614 = vld [vmem:[%s1604 + $0x48] sm:$0xff]
    %v1615 = vld [vmem:[%s1604 + $0x50] sm:$0xff]
    %v1616 = vld [vmem:[%s1604 + $0x58] sm:$0xff]
    %v1617 = vld [vmem:[%s1604 + $0x60] sm:$0xff]
    %v1618 = vld [vmem:[%s1604 + $0x68] sm:$0xff]
    %v1619 = vld [vmem:[%s1604 + $0x70] sm:$0xff]
    %v1620 = vld [vmem:[%s1604 + $0x78] sm:$0xff]
    %v1621 = vld [vmem:[%s1604 + $0x80] sm:$0xff]
    %v1622 = vld [vmem:[%s1604 + $0x88] sm:$0xff]
    %v1623 = vld [vmem:[%s1604 + $0x90] sm:$0xff]
    %v1624 = vld [vmem:[%s1604 + $0x98] sm:$0xff]
    %v1625 = vld [vmem:[%s1604 + $0xa0] sm:$0xff]
    %v1626 = vld [vmem:[%s1604 + $0xa8] sm:$0xff]
    %v1627 = vld [vmem:[%s1604 + $0xb0] sm:$0xff]
    %v1628 = vld [vmem:[%s1604 + $0xb8] sm:$0xff]
    %v1629 = vld [vmem:[%s1604 + $0xc0] sm:$0xff]
    %v1630 = vld [vmem:[%s1604 + $0xc8] sm:$0xff]
    %v1631 = vld [vmem:[%s1604 + $0xd0] sm:$0xff]
    %v1632 = vld [vmem:[%s1604 + $0xd8] sm:$0xff]
    %v1633 = vld [vmem:[%s1604 + $0xe0] sm:$0xff]
    %v1634 = vld [vmem:[%s1604 + $0xe8] sm:$0xff]
    %v1635 = vld [vmem:[%s1604 + $0xf0] sm:$0xff]
    %v1636 = vld [vmem:[%s1604 + $0xf8] sm:$0xff]
    %v1637 = vld [vmem:[%s1604 + $0x100] sm:$0xff]
    %v1638 = vld [vmem:[%s1604 + $0x108] sm:$0xff]
    %v1639 = vld [vmem:[%s1604 + $0x110] sm:$0xff]
    %v1640 = vld [vmem:[%s1604 + $0x118] sm:$0xff]
    %v1641 = vld [vmem:[%s1604 + $0x120] sm:$0xff]
    %v1642 = vld [vmem:[%s1604 + $0x128] sm:$0xff]
    %v1643 = vld [vmem:[%s1604 + $0x130] sm:$0xff]
    %v1644 = vld [vmem:[%s1604 + $0x138] sm:$0xff]
    %v1645 = vld [vmem:[%s1604 + $0x140] sm:$0xff]
    %v1646 = vld [vmem:[%s1604 + $0x148] sm:$0xff]
    %v1647 = vld [vmem:[%s1604 + $0x150] sm:$0xff]
    %v1648 = vld [vmem:[%s1604 + $0x158] sm:$0xff]
    %v1649 = vld [vmem:[%s1604 + $0x160] sm:$0xff]
    %v1650 = vld [vmem:[%s1604 + $0x168] sm:$0xff]
    %v1651 = vld [vmem:[%s1604 + $0x170] sm:$0xff]
    %v1652 = vld [vmem:[%s1604 + $0x178] sm:$0xff]
    %v1653 = vld [vmem:[%s1604 + $0x180] sm:$0xff]
    %v1654 = vld [vmem:[%s1604 + $0x188] sm:$0xff]
    %v1655 = vld [vmem:[%s1604 + $0x190] sm:$0xff]
    %v1656 = vld [vmem:[%s1604 + $0x198] sm:$0xff]
    %v1657 = vld [vmem:[%s1604 + $0x1a0] sm:$0xff]
    %v1658 = vld [vmem:[%s1604 + $0x1a8] sm:$0xff]
    %v1659 = vld [vmem:[%s1604 + $0x1b0] sm:$0xff]
    %v1660 = vld [vmem:[%s1604 + $0x1b8] sm:$0xff]
    %v1661 = vld [vmem:[%s1604 + $0x1c0] sm:$0xff]
    %v1662 = vld [vmem:[%s1604 + $0x1c8] sm:$0xff]
    %v1663 = vld [vmem:[%s1604 + $0x1d0] sm:$0xff]
    %v1664 = vld [vmem:[%s1604 + $0x1d8] sm:$0xff]
    %v1665 = vld [vmem:[%s1604 + $0x1e0] sm:$0xff]
    %v1666 = vld [vmem:[%s1604 + $0x1e8] sm:$0xff]
    %v1667 = vld [vmem:[%s1604 + $0x1f0] sm:$0xff]
    %v1668 = vld [vmem:[%s1604 + $0x1f8] sm:$0xff]
    %1669 = vmatprep.subr.mxu0 %v1606
    %1670 = vmatpush1.msra.mxu0 %v1605
    %1671 = vmatprep.subr.mxu0 %v1608
    %1672 = vmatpush1.msra.mxu0 %v1607
    %1673 = vmatprep.subr.mxu0 %v1610
    %1674 = vmatpush1.msra.mxu0 %v1609
    %1675 = vmatprep.subr.mxu0 %v1612
    %1676 = vmatpush1.msra.mxu0 %v1611
    %1677 = vmatprep.subr.mxu0 %v1614
    %1678 = vmatpush1.msra.mxu0 %v1613
    %1679 = vmatprep.subr.mxu0 %v1616
    %1680 = vmatpush1.msra.mxu0 %v1615
    %1681 = vmatprep.subr.mxu0 %v1618
    %1682 = vmatpush1.msra.mxu0 %v1617
    %1683 = vmatprep.subr.mxu0 %v1620
    %1684 = vmatpush1.msra.mxu0 %v1619
    %1685 = vmatprep.subr.mxu0 %v1622
    %1686 = vmatpush1.msra.mxu0 %v1621
    %1687 = vmatprep.subr.mxu0 %v1624
    %1688 = vmatpush1.msra.mxu0 %v1623
    %1689 = vmatprep.subr.mxu0 %v1626
    %1690 = vmatpush1.msra.mxu0 %v1625
    %1691 = vmatprep.subr.mxu0 %v1628
    %1692 = vmatpush1.msra.mxu0 %v1627
    %1693 = vmatprep.subr.mxu0 %v1630
    %1694 = vmatpush1.msra.mxu0 %v1629
    %1695 = vmatprep.subr.mxu0 %v1632
    %1696 = vmatpush1.msra.mxu0 %v1631
    %1697 = vmatprep.subr.mxu0 %v1634
    %1698 = vmatpush1.msra.mxu0 %v1633
    %1699 = vmatprep.subr.mxu0 %v1636
    %1700 = vmatpush1.msra.mxu0 %v1635
    %1701 = vmatprep.subr.mxu0 %v1638
    %1702 = vmatpush1.msra.mxu0 %v1637
    %1703 = vmatprep.subr.mxu0 %v1640
    %1704 = vmatpush1.msra.mxu0 %v1639
    %1705 = vmatprep.subr.mxu0 %v1642
    %1706 = vmatpush1.msra.mxu0 %v1641
    %1707 = vmatprep.subr.mxu0 %v1644
    %1708 = vmatpush1.msra.mxu0 %v1643
    %1709 = vmatprep.subr.mxu0 %v1646
    %1710 = vmatpush1.msra.mxu0 %v1645
    %1711 = vmatprep.subr.mxu0 %v1648
    %1712 = vmatpush1.msra.mxu0 %v1647
    %1713 = vmatprep.subr.mxu0 %v1650
    %1714 = vmatpush1.msra.mxu0 %v1649
    %1715 = vmatprep.subr.mxu0 %v1652
    %1716 = vmatpush1.msra.mxu0 %v1651
    %1717 = vmatprep.subr.mxu0 %v1654
    %1718 = vmatpush1.msra.mxu0 %v1653
    %1719 = vmatprep.subr.mxu0 %v1656
    %1720 = vmatpush1.msra.mxu0 %v1655
    %1721 = vmatprep.subr.mxu0 %v1658
    %1722 = vmatpush1.msra.mxu0 %v1657
    %1723 = vmatprep.subr.mxu0 %v1660
    %1724 = vmatpush1.msra.mxu0 %v1659
    %1725 = vmatprep.subr.mxu0 %v1662
    %1726 = vmatpush1.msra.mxu0 %v1661
    %1727 = vmatprep.subr.mxu0 %v1664
    %1728 = vmatpush1.msra.mxu0 %v1663
    %1729 = vmatprep.subr.mxu0 %v1666
    %1730 = vmatpush1.msra.mxu0 %v1665
    %1731 = vmatprep.subr.mxu0 %v1668
    %1732 = vmatpush1.msra.mxu0 %v1667
    %1733 = vmatprep.mubr.f32.mxu0 %v1596
    %1734 = vmatmul.mubr.f32.gmra.mrb[0].mxu0 %v1594
    %v1735 = vpop.f32.mrb[0].mxu0
    %v1736 = vadd.f32 0.0, %v1735
    %v1737 = vpop.f32.mrb[0].mxu0
    %v1738 = vadd.f32 0.0, %v1737
    %1739 = vmatprep.mubr.f32.mxu0 %v1602
    %1740 = vmatmul.mubr.f32.gmra.mrb[0].mxu0 %v1600
    %v1741 = vpop.f32.mrb[0].mxu0
    %v1742 = vadd.f32 0.0, %v1741
    %v1743 = vpop.f32.mrb[0].mxu0
    %v1744 = vadd.f32 0.0, %v1743
    %1745 = vdwg.mxu0
    %v1746 = vadd.f32 %v1508, %v1736
    %v1747 = vadd.f32 %v1510, %v1738
    %v1748 = vadd.f32 %v1514, %v1742
    %v1749 = vadd.f32 %v1516, %v1744
    %s1750 = scalar_lea.vmem %s5, 48
    %v1751 = vld [vmem:[%s1750] sm:$0xff]
    %v1752 = vld [vmem:[%s1750 + $0x8] sm:$0xff]
    %v1754 = vsel %vm1065, %v1751, 0
    %v1757 = vsel %vm1065, %v1752, 0
    %1759 = vmatprep.subr.mxu0 %v1056
    %1760 = vmatpush1.msra.mxu0 %v1055
    %1761 = vmatprep.subr.mxu0 %v1058
    %1762 = vmatpush1.msra.mxu0 %v1057
    %1763 = vmatprep.subr.mxu0 %v1060
    %1764 = vmatpush1.msra.mxu0 %v1059
    %1765 = vmatprep.subr.mxu0 %v1062
    %1766 = vmatpush1.msra.mxu0 %v1061
    %1767 = vmatprep.subr.mxu0 0.0
    %1768 = vmatpush1.msra.mxu0 0.0
    %1769 = vmatprep.subr.mxu0 0.0
    %1770 = vmatpush1.msra.mxu0 0.0
    %1771 = vmatprep.subr.mxu0 0.0
    %1772 = vmatpush1.msra.mxu0 0.0
    %1773 = vmatprep.subr.mxu0 0.0
    %1774 = vmatpush1.msra.mxu0 0.0
    %1775 = vmatprep.subr.mxu0 0.0
    %1776 = vmatpush1.msra.mxu0 0.0
    %1777 = vmatprep.subr.mxu0 0.0
    %1778 = vmatpush1.msra.mxu0 0.0
    %1779 = vmatprep.subr.mxu0 0.0
    %1780 = vmatpush1.msra.mxu0 0.0
    %1781 = vmatprep.subr.mxu0 0.0
    %1782 = vmatpush1.msra.mxu0 0.0
    %1783 = vmatprep.subr.mxu0 0.0
    %1784 = vmatpush1.msra.mxu0 0.0
    %1785 = vmatprep.subr.mxu0 0.0
    %1786 = vmatpush1.msra.mxu0 0.0
    %1787 = vmatprep.subr.mxu0 0.0
    %1788 = vmatpush1.msra.mxu0 0.0
    %1789 = vmatprep.subr.mxu0 0.0
    %1790 = vmatpush1.msra.mxu0 0.0
    %1791 = vmatprep.subr.mxu0 0.0
    %1792 = vmatpush1.msra.mxu0 0.0
    %1793 = vmatprep.subr.mxu0 0.0
    %1794 = vmatpush1.msra.mxu0 0.0
    %1795 = vmatprep.subr.mxu0 0.0
    %1796 = vmatpush1.msra.mxu0 0.0
    %1797 = vmatprep.subr.mxu0 0.0
    %1798 = vmatpush1.msra.mxu0 0.0
    %1799 = vmatprep.subr.mxu0 0.0
    %1800 = vmatpush1.msra.mxu0 0.0
    %1801 = vmatprep.subr.mxu0 0.0
    %1802 = vmatpush1.msra.mxu0 0.0
    %1803 = vmatprep.subr.mxu0 0.0
    %1804 = vmatpush1.msra.mxu0 0.0
    %1805 = vmatprep.subr.mxu0 0.0
    %1806 = vmatpush1.msra.mxu0 0.0
    %1807 = vmatprep.subr.mxu0 0.0
    %1808 = vmatpush1.msra.mxu0 0.0
    %1809 = vmatprep.subr.mxu0 0.0
    %1810 = vmatpush1.msra.mxu0 0.0
    %1811 = vmatprep.subr.mxu0 0.0
    %1812 = vmatpush1.msra.mxu0 0.0
    %1813 = vmatprep.subr.mxu0 0.0
    %1814 = vmatpush1.msra.mxu0 0.0
    %1815 = vmatprep.subr.mxu0 0.0
    %1816 = vmatpush1.msra.mxu0 0.0
    %1817 = vmatprep.subr.mxu0 0.0
    %1818 = vmatpush1.msra.mxu0 0.0
    %1819 = vmatprep.subr.mxu0 0.0
    %1820 = vmatpush1.msra.mxu0 0.0
    %1821 = vmatprep.subr.mxu0 0.0
    %1822 = vmatpush1.msra.mxu0 0.0
    %1823 = vmatprep.mubr.f32.mxu0 0.0
    %1824 = vmatmul.mubr.f32.gmra.mrb[0].mxu0 %v1754
    %v1825 = vpop.f32.mrb[0].mxu0
    %v1826 = vadd.f32 0.0, %v1825
    %v1827 = vpop.f32.mrb[0].mxu0
    %v1828 = vadd.f32 0.0, %v1827
    %1829 = vmatprep.mubr.f32.mxu0 0.0
    %1830 = vmatmul.mubr.f32.gmra.mrb[0].mxu0 %v1757
    %v1831 = vpop.f32.mrb[0].mxu0
    %v1832 = vadd.f32 0.0, %v1831
    %v1833 = vpop.f32.mrb[0].mxu0
    %v1834 = vadd.f32 0.0, %v1833
    %1835 = vdwg.mxu0
    %s1836 = scalar_lea.vmem [#allocation2], 1536
    %v1837 = vld [vmem:[%s1836] sm:$0xff]
    %v1838 = vld [vmem:[%s1836 + $0x8] sm:$0xff]
    %v1839 = vld [vmem:[%s1836 + $0x10] sm:$0xff]
    %v1840 = vld [vmem:[%s1836 + $0x18] sm:$0xff]
    %v1841 = vld [vmem:[%s1836 + $0x20] sm:$0xff]
    %v1842 = vld [vmem:[%s1836 + $0x28] sm:$0xff]
    %v1843 = vld [vmem:[%s1836 + $0x30] sm:$0xff]
    %v1844 = vld [vmem:[%s1836 + $0x38] sm:$0xff]
    %v1845 = vld [vmem:[%s1836 + $0x40] sm:$0xff]
    %v1846 = vld [vmem:[%s1836 + $0x48] sm:$0xff]
    %v1847 = vld [vmem:[%s1836 + $0x50] sm:$0xff]
    %v1848 = vld [vmem:[%s1836 + $0x58] sm:$0xff]
    %v1849 = vld [vmem:[%s1836 + $0x60] sm:$0xff]
    %v1850 = vld [vmem:[%s1836 + $0x68] sm:$0xff]
    %v1851 = vld [vmem:[%s1836 + $0x70] sm:$0xff]
    %v1852 = vld [vmem:[%s1836 + $0x78] sm:$0xff]
    %v1853 = vld [vmem:[%s1836 + $0x80] sm:$0xff]
    %v1854 = vld [vmem:[%s1836 + $0x88] sm:$0xff]
    %v1855 = vld [vmem:[%s1836 + $0x90] sm:$0xff]
    %v1856 = vld [vmem:[%s1836 + $0x98] sm:$0xff]
    %v1857 = vld [vmem:[%s1836 + $0xa0] sm:$0xff]
    %v1858 = vld [vmem:[%s1836 + $0xa8] sm:$0xff]
    %v1859 = vld [vmem:[%s1836 + $0xb0] sm:$0xff]
    %v1860 = vld [vmem:[%s1836 + $0xb8] sm:$0xff]
    %v1861 = vld [vmem:[%s1836 + $0xc0] sm:$0xff]
    %v1862 = vld [vmem:[%s1836 + $0xc8] sm:$0xff]
    %v1863 = vld [vmem:[%s1836 + $0xd0] sm:$0xff]
    %v1864 = vld [vmem:[%s1836 + $0xd8] sm:$0xff]
    %v1865 = vld [vmem:[%s1836 + $0xe0] sm:$0xff]
    %v1866 = vld [vmem:[%s1836 + $0xe8] sm:$0xff]
    %v1867 = vld [vmem:[%s1836 + $0xf0] sm:$0xff]
    %v1868 = vld [vmem:[%s1836 + $0xf8] sm:$0xff]
    %v1869 = vld [vmem:[%s1836 + $0x100] sm:$0xff]
    %v1870 = vld [vmem:[%s1836 + $0x108] sm:$0xff]
    %v1871 = vld [vmem:[%s1836 + $0x110] sm:$0xff]
    %v1872 = vld [vmem:[%s1836 + $0x118] sm:$0xff]
    %v1873 = vld [vmem:[%s1836 + $0x120] sm:$0xff]
    %v1874 = vld [vmem:[%s1836 + $0x128] sm:$0xff]
    %v1875 = vld [vmem:[%s1836 + $0x130] sm:$0xff]
    %v1876 = vld [vmem:[%s1836 + $0x138] sm:$0xff]
    %v1877 = vld [vmem:[%s1836 + $0x140] sm:$0xff]
    %v1878 = vld [vmem:[%s1836 + $0x148] sm:$0xff]
    %v1879 = vld [vmem:[%s1836 + $0x150] sm:$0xff]
    %v1880 = vld [vmem:[%s1836 + $0x158] sm:$0xff]
    %v1881 = vld [vmem:[%s1836 + $0x160] sm:$0xff]
    %v1882 = vld [vmem:[%s1836 + $0x168] sm:$0xff]
    %v1883 = vld [vmem:[%s1836 + $0x170] sm:$0xff]
    %v1884 = vld [vmem:[%s1836 + $0x178] sm:$0xff]
    %v1885 = vld [vmem:[%s1836 + $0x180] sm:$0xff]
    %v1886 = vld [vmem:[%s1836 + $0x188] sm:$0xff]
    %v1887 = vld [vmem:[%s1836 + $0x190] sm:$0xff]
    %v1888 = vld [vmem:[%s1836 + $0x198] sm:$0xff]
    %v1889 = vld [vmem:[%s1836 + $0x1a0] sm:$0xff]
    %v1890 = vld [vmem:[%s1836 + $0x1a8] sm:$0xff]
    %v1891 = vld [vmem:[%s1836 + $0x1b0] sm:$0xff]
    %v1892 = vld [vmem:[%s1836 + $0x1b8] sm:$0xff]
    %v1893 = vld [vmem:[%s1836 + $0x1c0] sm:$0xff]
    %v1894 = vld [vmem:[%s1836 + $0x1c8] sm:$0xff]
    %v1895 = vld [vmem:[%s1836 + $0x1d0] sm:$0xff]
    %v1896 = vld [vmem:[%s1836 + $0x1d8] sm:$0xff]
    %v1897 = vld [vmem:[%s1836 + $0x1e0] sm:$0xff]
    %v1898 = vld [vmem:[%s1836 + $0x1e8] sm:$0xff]
    %v1899 = vld [vmem:[%s1836 + $0x1f0] sm:$0xff]
    %v1900 = vld [vmem:[%s1836 + $0x1f8] sm:$0xff]
    %1901 = vmatprep.subr.mxu0 %v1838
    %1902 = vmatpush1.msra.mxu0 %v1837
    %1903 = vmatprep.subr.mxu0 %v1840
    %1904 = vmatpush1.msra.mxu0 %v1839
    %1905 = vmatprep.subr.mxu0 %v1842
    %1906 = vmatpush1.msra.mxu0 %v1841
    %1907 = vmatprep.subr.mxu0 %v1844
    %1908 = vmatpush1.msra.mxu0 %v1843
    %1909 = vmatprep.subr.mxu0 %v1846
    %1910 = vmatpush1.msra.mxu0 %v1845
    %1911 = vmatprep.subr.mxu0 %v1848
    %1912 = vmatpush1.msra.mxu0 %v1847
    %1913 = vmatprep.subr.mxu0 %v1850
    %1914 = vmatpush1.msra.mxu0 %v1849
    %1915 = vmatprep.subr.mxu0 %v1852
    %1916 = vmatpush1.msra.mxu0 %v1851
    %1917 = vmatprep.subr.mxu0 %v1854
    %1918 = vmatpush1.msra.mxu0 %v1853
    %1919 = vmatprep.subr.mxu0 %v1856
    %1920 = vmatpush1.msra.mxu0 %v1855
    %1921 = vmatprep.subr.mxu0 %v1858
    %1922 = vmatpush1.msra.mxu0 %v1857
    %1923 = vmatprep.subr.mxu0 %v1860
    %1924 = vmatpush1.msra.mxu0 %v1859
    %1925 = vmatprep.subr.mxu0 %v1862
    %1926 = vmatpush1.msra.mxu0 %v1861
    %1927 = vmatprep.subr.mxu0 %v1864
    %1928 = vmatpush1.msra.mxu0 %v1863
    %1929 = vmatprep.subr.mxu0 %v1866
    %1930 = vmatpush1.msra.mxu0 %v1865
    %1931 = vmatprep.subr.mxu0 %v1868
    %1932 = vmatpush1.msra.mxu0 %v1867
    %1933 = vmatprep.subr.mxu0 %v1870
    %1934 = vmatpush1.msra.mxu0 %v1869
    %1935 = vmatprep.subr.mxu0 %v1872
    %1936 = vmatpush1.msra.mxu0 %v1871
    %1937 = vmatprep.subr.mxu0 %v1874
    %1938 = vmatpush1.msra.mxu0 %v1873
    %1939 = vmatprep.subr.mxu0 %v1876
    %1940 = vmatpush1.msra.mxu0 %v1875
    %1941 = vmatprep.subr.mxu0 %v1878
    %1942 = vmatpush1.msra.mxu0 %v1877
    %1943 = vmatprep.subr.mxu0 %v1880
    %1944 = vmatpush1.msra.mxu0 %v1879
    %1945 = vmatprep.subr.mxu0 %v1882
    %1946 = vmatpush1.msra.mxu0 %v1881
    %1947 = vmatprep.subr.mxu0 %v1884
    %1948 = vmatpush1.msra.mxu0 %v1883
    %1949 = vmatprep.subr.mxu0 %v1886
    %1950 = vmatpush1.msra.mxu0 %v1885
    %1951 = vmatprep.subr.mxu0 %v1888
    %1952 = vmatpush1.msra.mxu0 %v1887
    %1953 = vmatprep.subr.mxu0 %v1890
    %1954 = vmatpush1.msra.mxu0 %v1889
    %1955 = vmatprep.subr.mxu0 %v1892
    %1956 = vmatpush1.msra.mxu0 %v1891
    %1957 = vmatprep.subr.mxu0 %v1894
    %1958 = vmatpush1.msra.mxu0 %v1893
    %1959 = vmatprep.subr.mxu0 %v1896
    %1960 = vmatpush1.msra.mxu0 %v1895
    %1961 = vmatprep.subr.mxu0 %v1898
    %1962 = vmatpush1.msra.mxu0 %v1897
    %1963 = vmatprep.subr.mxu0 %v1900
    %1964 = vmatpush1.msra.mxu0 %v1899
    %1965 = vmatprep.mubr.f32.mxu0 %v1828
    %1966 = vmatmul.mubr.f32.gmra.mrb[0].mxu0 %v1826
    %v1967 = vpop.f32.mrb[0].mxu0
    %v1968 = vadd.f32 0.0, %v1967
    %v1969 = vpop.f32.mrb[0].mxu0
    %v1970 = vadd.f32 0.0, %v1969
    %1971 = vmatprep.mubr.f32.mxu0 %v1834
    %1972 = vmatmul.mubr.f32.gmra.mrb[0].mxu0 %v1832
    %v1973 = vpop.f32.mrb[0].mxu0
    %v1974 = vadd.f32 0.0, %v1973
    %v1975 = vpop.f32.mrb[0].mxu0
    %v1976 = vadd.f32 0.0, %v1975
    %1977 = vdwg.mxu0
    %v1978 = vadd.f32 %v1746, %v1968
    %v1979 = vadd.f32 %v1747, %v1970
    %v1980 = vadd.f32 %v1748, %v1974
    %v1981 = vadd.f32 %v1749, %v1976
    %v1982 = vld [vmem:[%s7] sm:$0x3]
    %v1984 = vlaneseq
    %v1985 = vshrl.u32 %v1984, 7
    %v1986 = vsub.s32 0, %v1985
    %v1987 = vrot.slane %v1982, %v1986
    %v1988 = vlaneseq
    %v1989 = vshrl.u32 %v1988, 7
    %v1990 = vsub.s32 1, %v1989
    %v1991 = vrot.slane %v1982, %v1990
    %v1994 = vadd.f32 %v1978, %v1987
    %v1995 = vadd.f32 %v1979, %v1991
    %v1996 = vadd.f32 %v1980, %v1987
    %v1997 = vadd.f32 %v1981, %v1991
    %v1998 = vmax.f32 %v1994, 0.0
    %v1999 = vmax.f32 %v1995, 0.0
    %v2000 = vmax.f32 %v1996, 0.0
    %v2001 = vmax.f32 %v1997, 0.0
    %v2002 = vld [vmem:[%s8] sm:$0x3]
    %vm2003 = vcmask 130048
    %v2005 = vsel %vm2003, %v2002, 0
    %2007 = vmatprep.subr.mxu0 %v1999
    %2008 = vmatpush1.msra.mxu0 %v1998
    %2009 = vmatprep.subr.mxu0 %v2001
    %2010 = vmatpush1.msra.mxu0 %v2000
    %2011 = vmatprep.subr.mxu0 0.0
    %2012 = vmatpush1.msra.mxu0 0.0
    %2013 = vmatprep.subr.mxu0 0.0
    %2014 = vmatpush1.msra.mxu0 0.0
    %2015 = vmatprep.subr.mxu0 0.0
    %2016 = vmatpush1.msra.mxu0 0.0
    %2017 = vmatprep.subr.mxu0 0.0
    %2018 = vmatpush1.msra.mxu0 0.0
    %2019 = vmatprep.subr.mxu0 0.0
    %2020 = vmatpush1.msra.mxu0 0.0
    %2021 = vmatprep.subr.mxu0 0.0
    %2022 = vmatpush1.msra.mxu0 0.0
    %2023 = vmatprep.subr.mxu0 0.0
    %2024 = vmatpush1.msra.mxu0 0.0
    %2025 = vmatprep.subr.mxu0 0.0
    %2026 = vmatpush1.msra.mxu0 0.0
    %2027 = vmatprep.subr.mxu0 0.0
    %2028 = vmatpush1.msra.mxu0 0.0
    %2029 = vmatprep.subr.mxu0 0.0
    %2030 = vmatpush1.msra.mxu0 0.0
    %2031 = vmatprep.subr.mxu0 0.0
    %2032 = vmatpush1.msra.mxu0 0.0
    %2033 = vmatprep.subr.mxu0 0.0
    %2034 = vmatpush1.msra.mxu0 0.0
    %2035 = vmatprep.subr.mxu0 0.0
    %2036 = vmatpush1.msra.mxu0 0.0
    %2037 = vmatprep.subr.mxu0 0.0
    %2038 = vmatpush1.msra.mxu0 0.0
    %2039 = vmatprep.subr.mxu0 0.0
    %2040 = vmatpush1.msra.mxu0 0.0
    %2041 = vmatprep.subr.mxu0 0.0
    %2042 = vmatpush1.msra.mxu0 0.0
    %2043 = vmatprep.subr.mxu0 0.0
    %2044 = vmatpush1.msra.mxu0 0.0
    %2045 = vmatprep.subr.mxu0 0.0
    %2046 = vmatpush1.msra.mxu0 0.0
    %2047 = vmatprep.subr.mxu0 0.0
    %2048 = vmatpush1.msra.mxu0 0.0
    %2049 = vmatprep.subr.mxu0 0.0
    %2050 = vmatpush1.msra.mxu0 0.0
    %2051 = vmatprep.subr.mxu0 0.0
    %2052 = vmatpush1.msra.mxu0 0.0
    %2053 = vmatprep.subr.mxu0 0.0
    %2054 = vmatpush1.msra.mxu0 0.0
    %2055 = vmatprep.subr.mxu0 0.0
    %2056 = vmatpush1.msra.mxu0 0.0
    %2057 = vmatprep.subr.mxu0 0.0
    %2058 = vmatpush1.msra.mxu0 0.0
    %2059 = vmatprep.subr.mxu0 0.0
    %2060 = vmatpush1.msra.mxu0 0.0
    %2061 = vmatprep.subr.mxu0 0.0
    %2062 = vmatpush1.msra.mxu0 0.0
    %2063 = vmatprep.subr.mxu0 0.0
    %2064 = vmatpush1.msra.mxu0 0.0
    %2065 = vmatprep.subr.mxu0 0.0
    %2066 = vmatpush1.msra.mxu0 0.0
    %2067 = vmatprep.subr.mxu0 0.0
    %2068 = vmatpush1.msra.mxu0 0.0
    %2069 = vmatprep.subr.mxu0 0.0
    %2070 = vmatpush1.msra.mxu0 0.0
    %2071 = vmatprep.mubr.f32.mxu0 0.0
    %2072 = vmatmul.mubr.f32.gmra.mrb[0].mxu0 %v2005
    %v2073 = vpop.f32.mrb[0].mxu0
    %v2074 = vadd.f32 0.0, %v2073
    %v2075 = vpop.f32.mrb[0].mxu0
    %v2076 = vadd.f32 0.0, %v2075
    %2077 = vdwg.mxu0
    %v2078 = vld [vmem:[#allocation5] sm:$0xff]
    %v2079 = vld [vmem:[#allocation5 + $0x8] sm:$0xff]
    %v2080 = vld [vmem:[#allocation5 + $0x10] sm:$0xff]
    %v2081 = vld [vmem:[#allocation5 + $0x18] sm:$0xff]
    %v2082 = vld [vmem:[#allocation5 + $0x20] sm:$0xff]
    %v2083 = vld [vmem:[#allocation5 + $0x28] sm:$0xff]
    %v2084 = vld [vmem:[#allocation5 + $0x30] sm:$0xff]
    %v2085 = vld [vmem:[#allocation5 + $0x38] sm:$0xff]
    %v2086 = vld [vmem:[#allocation5 + $0x40] sm:$0xff]
    %v2087 = vld [vmem:[#allocation5 + $0x48] sm:$0xff]
    %v2088 = vld [vmem:[#allocation5 + $0x50] sm:$0xff]
    %v2089 = vld [vmem:[#allocation5 + $0x58] sm:$0xff]
    %v2090 = vld [vmem:[#allocation5 + $0x60] sm:$0xff]
    %v2091 = vld [vmem:[#allocation5 + $0x68] sm:$0xff]
    %v2092 = vld [vmem:[#allocation5 + $0x70] sm:$0xff]
    %v2093 = vld [vmem:[#allocation5 + $0x78] sm:$0xff]
    %v2094 = vld [vmem:[#allocation5 + $0x80] sm:$0xff]
    %v2095 = vld [vmem:[#allocation5 + $0x88] sm:$0xff]
    %v2096 = vld [vmem:[#allocation5 + $0x90] sm:$0xff]
    %v2097 = vld [vmem:[#allocation5 + $0x98] sm:$0xff]
    %v2098 = vld [vmem:[#allocation5 + $0xa0] sm:$0xff]
    %v2099 = vld [vmem:[#allocation5 + $0xa8] sm:$0xff]
    %v2100 = vld [vmem:[#allocation5 + $0xb0] sm:$0xff]
    %v2101 = vld [vmem:[#allocation5 + $0xb8] sm:$0xff]
    %v2102 = vld [vmem:[#allocation5 + $0xc0] sm:$0xff]
    %v2103 = vld [vmem:[#allocation5 + $0xc8] sm:$0xff]
    %v2104 = vld [vmem:[#allocation5 + $0xd0] sm:$0xff]
    %v2105 = vld [vmem:[#allocation5 + $0xd8] sm:$0xff]
    %v2106 = vld [vmem:[#allocation5 + $0xe0] sm:$0xff]
    %v2107 = vld [vmem:[#allocation5 + $0xe8] sm:$0xff]
    %v2108 = vld [vmem:[#allocation5 + $0xf0] sm:$0xff]
    %v2109 = vld [vmem:[#allocation5 + $0xf8] sm:$0xff]
    %s2110 = scalar_lea.vmem %s8, 2
    %v2111 = vld [vmem:[%s2110] sm:$0x3]
    %v2113 = vsel %vm2003, %v2111, 0
    %2115 = vmatprep.subr.mxu0 %v1999
    %2116 = vmatpush1.msra.mxu0 %v1998
    %2117 = vmatprep.subr.mxu0 %v2001
    %2118 = vmatpush1.msra.mxu0 %v2000
    %2119 = vmatprep.subr.mxu0 0.0
    %2120 = vmatpush1.msra.mxu0 0.0
    %2121 = vmatprep.subr.mxu0 0.0
    %2122 = vmatpush1.msra.mxu0 0.0
    %2123 = vmatprep.subr.mxu0 0.0
    %2124 = vmatpush1.msra.mxu0 0.0
    %2125 = vmatprep.subr.mxu0 0.0
    %2126 = vmatpush1.msra.mxu0 0.0
    %2127 = vmatprep.subr.mxu0 0.0
    %2128 = vmatpush1.msra.mxu0 0.0
    %2129 = vmatprep.subr.mxu0 0.0
    %2130 = vmatpush1.msra.mxu0 0.0
    %2131 = vmatprep.subr.mxu0 0.0
    %2132 = vmatpush1.msra.mxu0 0.0
    %2133 = vmatprep.subr.mxu0 0.0
    %2134 = vmatpush1.msra.mxu0 0.0
    %2135 = vmatprep.subr.mxu0 0.0
    %2136 = vmatpush1.msra.mxu0 0.0
    %2137 = vmatprep.subr.mxu0 0.0
    %2138 = vmatpush1.msra.mxu0 0.0
    %2139 = vmatprep.subr.mxu0 0.0
    %2140 = vmatpush1.msra.mxu0 0.0
    %2141 = vmatprep.subr.mxu0 0.0
    %2142 = vmatpush1.msra.mxu0 0.0
    %2143 = vmatprep.subr.mxu0 0.0
    %2144 = vmatpush1.msra.mxu0 0.0
    %2145 = vmatprep.subr.mxu0 0.0
    %2146 = vmatpush1.msra.mxu0 0.0
    %2147 = vmatprep.subr.mxu0 0.0
    %2148 = vmatpush1.msra.mxu0 0.0
    %2149 = vmatprep.subr.mxu0 0.0
    %2150 = vmatpush1.msra.mxu0 0.0
    %2151 = vmatprep.subr.mxu0 0.0
    %2152 = vmatpush1.msra.mxu0 0.0
    %2153 = vmatprep.subr.mxu0 0.0
    %2154 = vmatpush1.msra.mxu0 0.0
    %2155 = vmatprep.subr.mxu0 0.0
    %2156 = vmatpush1.msra.mxu0 0.0
    %2157 = vmatprep.subr.mxu0 0.0
    %2158 = vmatpush1.msra.mxu0 0.0
    %2159 = vmatprep.subr.mxu0 0.0
    %2160 = vmatpush1.msra.mxu0 0.0
    %2161 = vmatprep.subr.mxu0 0.0
    %2162 = vmatpush1.msra.mxu0 0.0
    %2163 = vmatprep.subr.mxu0 0.0
    %2164 = vmatpush1.msra.mxu0 0.0
    %2165 = vmatprep.subr.mxu0 0.0
    %2166 = vmatpush1.msra.mxu0 0.0
    %2167 = vmatprep.subr.mxu0 0.0
    %2168 = vmatpush1.msra.mxu0 0.0
    %2169 = vmatprep.subr.mxu0 0.0
    %2170 = vmatpush1.msra.mxu0 0.0
    %2171 = vmatprep.subr.mxu0 0.0
    %2172 = vmatpush1.msra.mxu0 0.0
    %2173 = vmatprep.subr.mxu0 0.0
    %2174 = vmatpush1.msra.mxu0 0.0
    %2175 = vmatprep.subr.mxu0 0.0
    %2176 = vmatpush1.msra.mxu0 0.0
    %2177 = vmatprep.subr.mxu0 0.0
    %2178 = vmatpush1.msra.mxu0 0.0
    %2179 = vmatprep.mubr.f32.mxu0 0.0
    %2180 = vmatmul.mubr.f32.gmra.mrb[0].mxu0 %v2113
    %v2181 = vpop.f32.mrb[0].mxu0
    %v2182 = vadd.f32 0.0, %v2181
    %v2183 = vpop.f32.mrb[0].mxu0
    %v2184 = vadd.f32 0.0, %v2183
    %2185 = vdwg.mxu0
    %v2186 = vld [vmem:[#allocation5 + $0x100] sm:$0xff]
    %v2187 = vld [vmem:[#allocation5 + $0x108] sm:$0xff]
    %v2188 = vld [vmem:[#allocation5 + $0x110] sm:$0xff]
    %v2189 = vld [vmem:[#allocation5 + $0x118] sm:$0xff]
    %v2190 = vld [vmem:[#allocation5 + $0x120] sm:$0xff]
    %v2191 = vld [vmem:[#allocation5 + $0x128] sm:$0xff]
    %v2192 = vld [vmem:[#allocation5 + $0x130] sm:$0xff]
    %v2193 = vld [vmem:[#allocation5 + $0x138] sm:$0xff]
    %v2194 = vld [vmem:[#allocation5 + $0x140] sm:$0xff]
    %v2195 = vld [vmem:[#allocation5 + $0x148] sm:$0xff]
    %v2196 = vld [vmem:[#allocation5 + $0x150] sm:$0xff]
    %v2197 = vld [vmem:[#allocation5 + $0x158] sm:$0xff]
    %v2198 = vld [vmem:[#allocation5 + $0x160] sm:$0xff]
    %v2199 = vld [vmem:[#allocation5 + $0x168] sm:$0xff]
    %v2200 = vld [vmem:[#allocation5 + $0x170] sm:$0xff]
    %v2201 = vld [vmem:[#allocation5 + $0x178] sm:$0xff]
    %v2202 = vld [vmem:[#allocation5 + $0x180] sm:$0xff]
    %v2203 = vld [vmem:[#allocation5 + $0x188] sm:$0xff]
    %v2204 = vld [vmem:[#allocation5 + $0x190] sm:$0xff]
    %v2205 = vld [vmem:[#allocation5 + $0x198] sm:$0xff]
    %v2206 = vld [vmem:[#allocation5 + $0x1a0] sm:$0xff]
    %v2207 = vld [vmem:[#allocation5 + $0x1a8] sm:$0xff]
    %v2208 = vld [vmem:[#allocation5 + $0x1b0] sm:$0xff]
    %v2209 = vld [vmem:[#allocation5 + $0x1b8] sm:$0xff]
    %v2210 = vld [vmem:[#allocation5 + $0x1c0] sm:$0xff]
    %v2211 = vld [vmem:[#allocation5 + $0x1c8] sm:$0xff]
    %v2212 = vld [vmem:[#allocation5 + $0x1d0] sm:$0xff]
    %v2213 = vld [vmem:[#allocation5 + $0x1d8] sm:$0xff]
    %v2214 = vld [vmem:[#allocation5 + $0x1e0] sm:$0xff]
    %v2215 = vld [vmem:[#allocation5 + $0x1e8] sm:$0xff]
    %v2216 = vld [vmem:[#allocation5 + $0x1f0] sm:$0xff]
    %v2217 = vld [vmem:[#allocation5 + $0x1f8] sm:$0xff]
    %2218 = vmatprep.subr.mxu0 0.0
    %2219 = vmatpush1.msra.mxu0 %v2186
    %2220 = vmatprep.subr.mxu0 0.0
    %2221 = vmatpush1.msra.mxu0 %v2187
    %2222 = vmatprep.subr.mxu0 0.0
    %2223 = vmatpush1.msra.mxu0 %v2188
    %2224 = vmatprep.subr.mxu0 0.0
    %2225 = vmatpush1.msra.mxu0 %v2189
    %2226 = vmatprep.subr.mxu0 0.0
    %2227 = vmatpush1.msra.mxu0 %v2190
    %2228 = vmatprep.subr.mxu0 0.0
    %2229 = vmatpush1.msra.mxu0 %v2191
    %2230 = vmatprep.subr.mxu0 0.0
    %2231 = vmatpush1.msra.mxu0 %v2192
    %2232 = vmatprep.subr.mxu0 0.0
    %2233 = vmatpush1.msra.mxu0 %v2193
    %2234 = vmatprep.subr.mxu0 0.0
    %2235 = vmatpush1.msra.mxu0 %v2194
    %2236 = vmatprep.subr.mxu0 0.0
    %2237 = vmatpush1.msra.mxu0 %v2195
    %2238 = vmatprep.subr.mxu0 0.0
    %2239 = vmatpush1.msra.mxu0 %v2196
    %2240 = vmatprep.subr.mxu0 0.0
    %2241 = vmatpush1.msra.mxu0 %v2197
    %2242 = vmatprep.subr.mxu0 0.0
    %2243 = vmatpush1.msra.mxu0 %v2198
    %2244 = vmatprep.subr.mxu0 0.0
    %2245 = vmatpush1.msra.mxu0 %v2199
    %2246 = vmatprep.subr.mxu0 0.0
    %2247 = vmatpush1.msra.mxu0 %v2200
    %2248 = vmatprep.subr.mxu0 0.0
    %2249 = vmatpush1.msra.mxu0 %v2201
    %2250 = vmatprep.subr.mxu0 0.0
    %2251 = vmatpush1.msra.mxu0 %v2202
    %2252 = vmatprep.subr.mxu0 0.0
    %2253 = vmatpush1.msra.mxu0 %v2203
    %2254 = vmatprep.subr.mxu0 0.0
    %2255 = vmatpush1.msra.mxu0 %v2204
    %2256 = vmatprep.subr.mxu0 0.0
    %2257 = vmatpush1.msra.mxu0 %v2205
    %2258 = vmatprep.subr.mxu0 0.0
    %2259 = vmatpush1.msra.mxu0 %v2206
    %2260 = vmatprep.subr.mxu0 0.0
    %2261 = vmatpush1.msra.mxu0 %v2207
    %2262 = vmatprep.subr.mxu0 0.0
    %2263 = vmatpush1.msra.mxu0 %v2208
    %2264 = vmatprep.subr.mxu0 0.0
    %2265 = vmatpush1.msra.mxu0 %v2209
    %2266 = vmatprep.subr.mxu0 0.0
    %2267 = vmatpush1.msra.mxu0 %v2210
    %2268 = vmatprep.subr.mxu0 0.0
    %2269 = vmatpush1.msra.mxu0 %v2211
    %2270 = vmatprep.subr.mxu0 0.0
    %2271 = vmatpush1.msra.mxu0 %v2212
    %2272 = vmatprep.subr.mxu0 0.0
    %2273 = vmatpush1.msra.mxu0 %v2213
    %2274 = vmatprep.subr.mxu0 0.0
    %2275 = vmatpush1.msra.mxu0 %v2214
    %2276 = vmatprep.subr.mxu0 0.0
    %2277 = vmatpush1.msra.mxu0 %v2215
    %2278 = vmatprep.subr.mxu0 0.0
    %2279 = vmatpush1.msra.mxu0 %v2216
    %2280 = vmatprep.subr.mxu0 0.0
    %2281 = vmatpush1.msra.mxu0 %v2217
    %2282 = vmatprep.mubr.f32.mxu0 %v2184
    %2283 = vmatmul.mubr.f32.gmra.mrb[0].mxu0 %v2182
    %v2284 = vpop.f32.mrb[0].mxu0
    %v2285 = vadd.f32 0.0, %v2284
    %v2286 = vpop.f32.mrb[0].mxu0
    %2287 = vdwg.mxu0
    %2288 = vmatprep.subr.mxu0 0.0
    %2289 = vmatpush1.msra.mxu0 %v2078
    %2290 = vmatprep.subr.mxu0 0.0
    %2291 = vmatpush1.msra.mxu0 %v2079
    %2292 = vmatprep.subr.mxu0 0.0
    %2293 = vmatpush1.msra.mxu0 %v2080
    %2294 = vmatprep.subr.mxu0 0.0
    %2295 = vmatpush1.msra.mxu0 %v2081
    %2296 = vmatprep.subr.mxu0 0.0
    %2297 = vmatpush1.msra.mxu0 %v2082
    %2298 = vmatprep.subr.mxu0 0.0
    %2299 = vmatpush1.msra.mxu0 %v2083
    %2300 = vmatprep.subr.mxu0 0.0
    %2301 = vmatpush1.msra.mxu0 %v2084
    %2302 = vmatprep.subr.mxu0 0.0
    %2303 = vmatpush1.msra.mxu0 %v2085
    %2304 = vmatprep.subr.mxu0 0.0
    %2305 = vmatpush1.msra.mxu0 %v2086
    %2306 = vmatprep.subr.mxu0 0.0
    %2307 = vmatpush1.msra.mxu0 %v2087
    %2308 = vmatprep.subr.mxu0 0.0
    %2309 = vmatpush1.msra.mxu0 %v2088
    %2310 = vmatprep.subr.mxu0 0.0
    %2311 = vmatpush1.msra.mxu0 %v2089
    %2312 = vmatprep.subr.mxu0 0.0
    %2313 = vmatpush1.msra.mxu0 %v2090
    %2314 = vmatprep.subr.mxu0 0.0
    %2315 = vmatpush1.msra.mxu0 %v2091
    %2316 = vmatprep.subr.mxu0 0.0
    %2317 = vmatpush1.msra.mxu0 %v2092
    %2318 = vmatprep.subr.mxu0 0.0
    %2319 = vmatpush1.msra.mxu0 %v2093
    %2320 = vmatprep.subr.mxu0 0.0
    %2321 = vmatpush1.msra.mxu0 %v2094
    %2322 = vmatprep.subr.mxu0 0.0
    %2323 = vmatpush1.msra.mxu0 %v2095
    %2324 = vmatprep.subr.mxu0 0.0
    %2325 = vmatpush1.msra.mxu0 %v2096
    %2326 = vmatprep.subr.mxu0 0.0
    %2327 = vmatpush1.msra.mxu0 %v2097
    %2328 = vmatprep.subr.mxu0 0.0
    %2329 = vmatpush1.msra.mxu0 %v2098
    %2330 = vmatprep.subr.mxu0 0.0
    %2331 = vmatpush1.msra.mxu0 %v2099
    %2332 = vmatprep.subr.mxu0 0.0
    %2333 = vmatpush1.msra.mxu0 %v2100
    %2334 = vmatprep.subr.mxu0 0.0
    %2335 = vmatpush1.msra.mxu0 %v2101
    %2336 = vmatprep.subr.mxu0 0.0
    %2337 = vmatpush1.msra.mxu0 %v2102
    %2338 = vmatprep.subr.mxu0 0.0
    %2339 = vmatpush1.msra.mxu0 %v2103
    %2340 = vmatprep.subr.mxu0 0.0
    %2341 = vmatpush1.msra.mxu0 %v2104
    %2342 = vmatprep.subr.mxu0 0.0
    %2343 = vmatpush1.msra.mxu0 %v2105
    %2344 = vmatprep.subr.mxu0 0.0
    %2345 = vmatpush1.msra.mxu0 %v2106
    %2346 = vmatprep.subr.mxu0 0.0
    %2347 = vmatpush1.msra.mxu0 %v2107
    %2348 = vmatprep.subr.mxu0 0.0
    %2349 = vmatpush1.msra.mxu0 %v2108
    %2350 = vmatprep.subr.mxu0 0.0
    %2351 = vmatpush1.msra.mxu0 %v2109
    %2352 = vmatprep.mubr.f32.mxu0 %v2076
    %2353 = vmatmul.mubr.f32.gmra.mrb[0].mxu0 %v2074
    %v2354 = vpop.f32.mrb[0].mxu0
    %v2355 = vadd.f32 %v2285, %v2354
    %v2356 = vpop.f32.mrb[0].mxu0
    %2357 = vdwg.mxu0
    %s2358 = scalar_lea.vmem %s8, 4
    %v2359 = vld [vmem:[%s2358] sm:$0x3]
    %v2361 = vsel %vm2003, %v2359, 0
    %2363 = vmatprep.subr.mxu0 %v1999
    %2364 = vmatpush1.msra.mxu0 %v1998
    %2365 = vmatprep.subr.mxu0 %v2001
    %2366 = vmatpush1.msra.mxu0 %v2000
    %2367 = vmatprep.subr.mxu0 0.0
    %2368 = vmatpush1.msra.mxu0 0.0
    %2369 = vmatprep.subr.mxu0 0.0
    %2370 = vmatpush1.msra.mxu0 0.0
    %2371 = vmatprep.subr.mxu0 0.0
    %2372 = vmatpush1.msra.mxu0 0.0
    %2373 = vmatprep.subr.mxu0 0.0
    %2374 = vmatpush1.msra.mxu0 0.0
    %2375 = vmatprep.subr.mxu0 0.0
    %2376 = vmatpush1.msra.mxu0 0.0
    %2377 = vmatprep.subr.mxu0 0.0
    %2378 = vmatpush1.msra.mxu0 0.0
    %2379 = vmatprep.subr.mxu0 0.0
    %2380 = vmatpush1.msra.mxu0 0.0
    %2381 = vmatprep.subr.mxu0 0.0
    %2382 = vmatpush1.msra.mxu0 0.0
    %2383 = vmatprep.subr.mxu0 0.0
    %2384 = vmatpush1.msra.mxu0 0.0
    %2385 = vmatprep.subr.mxu0 0.0
    %2386 = vmatpush1.msra.mxu0 0.0
    %2387 = vmatprep.subr.mxu0 0.0
    %2388 = vmatpush1.msra.mxu0 0.0
    %2389 = vmatprep.subr.mxu0 0.0
    %2390 = vmatpush1.msra.mxu0 0.0
    %2391 = vmatprep.subr.mxu0 0.0
    %2392 = vmatpush1.msra.mxu0 0.0
    %2393 = vmatprep.subr.mxu0 0.0
    %2394 = vmatpush1.msra.mxu0 0.0
    %2395 = vmatprep.subr.mxu0 0.0
    %2396 = vmatpush1.msra.mxu0 0.0
    %2397 = vmatprep.subr.mxu0 0.0
    %2398 = vmatpush1.msra.mxu0 0.0
    %2399 = vmatprep.subr.mxu0 0.0
    %2400 = vmatpush1.msra.mxu0 0.0
    %2401 = vmatprep.subr.mxu0 0.0
    %2402 = vmatpush1.msra.mxu0 0.0
    %2403 = vmatprep.subr.mxu0 0.0
    %2404 = vmatpush1.msra.mxu0 0.0
    %2405 = vmatprep.subr.mxu0 0.0
    %2406 = vmatpush1.msra.mxu0 0.0
    %2407 = vmatprep.subr.mxu0 0.0
    %2408 = vmatpush1.msra.mxu0 0.0
    %2409 = vmatprep.subr.mxu0 0.0
    %2410 = vmatpush1.msra.mxu0 0.0
    %2411 = vmatprep.subr.mxu0 0.0
    %2412 = vmatpush1.msra.mxu0 0.0
    %2413 = vmatprep.subr.mxu0 0.0
    %2414 = vmatpush1.msra.mxu0 0.0
    %2415 = vmatprep.subr.mxu0 0.0
    %2416 = vmatpush1.msra.mxu0 0.0
    %2417 = vmatprep.subr.mxu0 0.0
    %2418 = vmatpush1.msra.mxu0 0.0
    %2419 = vmatprep.subr.mxu0 0.0
    %2420 = vmatpush1.msra.mxu0 0.0
    %2421 = vmatprep.subr.mxu0 0.0
    %2422 = vmatpush1.msra.mxu0 0.0
    %2423 = vmatprep.subr.mxu0 0.0
    %2424 = vmatpush1.msra.mxu0 0.0
    %2425 = vmatprep.subr.mxu0 0.0
    %2426 = vmatpush1.msra.mxu0 0.0
    %2427 = vmatprep.mubr.f32.mxu0 0.0
    %2428 = vmatmul.mubr.f32.gmra.mrb[0].mxu0 %v2361
    %v2429 = vpop.f32.mrb[0].mxu0
    %v2430 = vadd.f32 0.0, %v2429
    %v2431 = vpop.f32.mrb[0].mxu0
    %v2432 = vadd.f32 0.0, %v2431
    %2433 = vdwg.mxu0
    %v2434 = vld [vmem:[#allocation5 + $0x200] sm:$0xff]
    %v2435 = vld [vmem:[#allocation5 + $0x208] sm:$0xff]
    %v2436 = vld [vmem:[#allocation5 + $0x210] sm:$0xff]
    %v2437 = vld [vmem:[#allocation5 + $0x218] sm:$0xff]
    %v2438 = vld [vmem:[#allocation5 + $0x220] sm:$0xff]
    %v2439 = vld [vmem:[#allocation5 + $0x228] sm:$0xff]
    %v2440 = vld [vmem:[#allocation5 + $0x230] sm:$0xff]
    %v2441 = vld [vmem:[#allocation5 + $0x238] sm:$0xff]
    %v2442 = vld [vmem:[#allocation5 + $0x240] sm:$0xff]
    %v2443 = vld [vmem:[#allocation5 + $0x248] sm:$0xff]
    %v2444 = vld [vmem:[#allocation5 + $0x250] sm:$0xff]
    %v2445 = vld [vmem:[#allocation5 + $0x258] sm:$0xff]
    %v2446 = vld [vmem:[#allocation5 + $0x260] sm:$0xff]
    %v2447 = vld [vmem:[#allocation5 + $0x268] sm:$0xff]
    %v2448 = vld [vmem:[#allocation5 + $0x270] sm:$0xff]
    %v2449 = vld [vmem:[#allocation5 + $0x278] sm:$0xff]
    %v2450 = vld [vmem:[#allocation5 + $0x280] sm:$0xff]
    %v2451 = vld [vmem:[#allocation5 + $0x288] sm:$0xff]
    %v2452 = vld [vmem:[#allocation5 + $0x290] sm:$0xff]
    %v2453 = vld [vmem:[#allocation5 + $0x298] sm:$0xff]
    %v2454 = vld [vmem:[#allocation5 + $0x2a0] sm:$0xff]
    %v2455 = vld [vmem:[#allocation5 + $0x2a8] sm:$0xff]
    %v2456 = vld [vmem:[#allocation5 + $0x2b0] sm:$0xff]
    %v2457 = vld [vmem:[#allocation5 + $0x2b8] sm:$0xff]
    %v2458 = vld [vmem:[#allocation5 + $0x2c0] sm:$0xff]
    %v2459 = vld [vmem:[#allocation5 + $0x2c8] sm:$0xff]
    %v2460 = vld [vmem:[#allocation5 + $0x2d0] sm:$0xff]
    %v2461 = vld [vmem:[#allocation5 + $0x2d8] sm:$0xff]
    %v2462 = vld [vmem:[#allocation5 + $0x2e0] sm:$0xff]
    %v2463 = vld [vmem:[#allocation5 + $0x2e8] sm:$0xff]
    %v2464 = vld [vmem:[#allocation5 + $0x2f0] sm:$0xff]
    %v2465 = vld [vmem:[#allocation5 + $0x2f8] sm:$0xff]
    %2466 = vmatprep.subr.mxu0 0.0
    %2467 = vmatpush1.msra.mxu0 %v2434
    %2468 = vmatprep.subr.mxu0 0.0
    %2469 = vmatpush1.msra.mxu0 %v2435
    %2470 = vmatprep.subr.mxu0 0.0
    %2471 = vmatpush1.msra.mxu0 %v2436
    %2472 = vmatprep.subr.mxu0 0.0
    %2473 = vmatpush1.msra.mxu0 %v2437
    %2474 = vmatprep.subr.mxu0 0.0
    %2475 = vmatpush1.msra.mxu0 %v2438
    %2476 = vmatprep.subr.mxu0 0.0
    %2477 = vmatpush1.msra.mxu0 %v2439
    %2478 = vmatprep.subr.mxu0 0.0
    %2479 = vmatpush1.msra.mxu0 %v2440
    %2480 = vmatprep.subr.mxu0 0.0
    %2481 = vmatpush1.msra.mxu0 %v2441
    %2482 = vmatprep.subr.mxu0 0.0
    %2483 = vmatpush1.msra.mxu0 %v2442
    %2484 = vmatprep.subr.mxu0 0.0
    %2485 = vmatpush1.msra.mxu0 %v2443
    %2486 = vmatprep.subr.mxu0 0.0
    %2487 = vmatpush1.msra.mxu0 %v2444
    %2488 = vmatprep.subr.mxu0 0.0
    %2489 = vmatpush1.msra.mxu0 %v2445
    %2490 = vmatprep.subr.mxu0 0.0
    %2491 = vmatpush1.msra.mxu0 %v2446
    %2492 = vmatprep.subr.mxu0 0.0
    %2493 = vmatpush1.msra.mxu0 %v2447
    %2494 = vmatprep.subr.mxu0 0.0
    %2495 = vmatpush1.msra.mxu0 %v2448
    %2496 = vmatprep.subr.mxu0 0.0
    %2497 = vmatpush1.msra.mxu0 %v2449
    %2498 = vmatprep.subr.mxu0 0.0
    %2499 = vmatpush1.msra.mxu0 %v2450
    %2500 = vmatprep.subr.mxu0 0.0
    %2501 = vmatpush1.msra.mxu0 %v2451
    %2502 = vmatprep.subr.mxu0 0.0
    %2503 = vmatpush1.msra.mxu0 %v2452
    %2504 = vmatprep.subr.mxu0 0.0
    %2505 = vmatpush1.msra.mxu0 %v2453
    %2506 = vmatprep.subr.mxu0 0.0
    %2507 = vmatpush1.msra.mxu0 %v2454
    %2508 = vmatprep.subr.mxu0 0.0
    %2509 = vmatpush1.msra.mxu0 %v2455
    %2510 = vmatprep.subr.mxu0 0.0
    %2511 = vmatpush1.msra.mxu0 %v2456
    %2512 = vmatprep.subr.mxu0 0.0
    %2513 = vmatpush1.msra.mxu0 %v2457
    %2514 = vmatprep.subr.mxu0 0.0
    %2515 = vmatpush1.msra.mxu0 %v2458
    %2516 = vmatprep.subr.mxu0 0.0
    %2517 = vmatpush1.msra.mxu0 %v2459
    %2518 = vmatprep.subr.mxu0 0.0
    %2519 = vmatpush1.msra.mxu0 %v2460
    %2520 = vmatprep.subr.mxu0 0.0
    %2521 = vmatpush1.msra.mxu0 %v2461
    %2522 = vmatprep.subr.mxu0 0.0
    %2523 = vmatpush1.msra.mxu0 %v2462
    %2524 = vmatprep.subr.mxu0 0.0
    %2525 = vmatpush1.msra.mxu0 %v2463
    %2526 = vmatprep.subr.mxu0 0.0
    %2527 = vmatpush1.msra.mxu0 %v2464
    %2528 = vmatprep.subr.mxu0 0.0
    %2529 = vmatpush1.msra.mxu0 %v2465
    %2530 = vmatprep.mubr.f32.mxu0 %v2432
    %2531 = vmatmul.mubr.f32.gmra.mrb[0].mxu0 %v2430
    %v2532 = vpop.f32.mrb[0].mxu0
    %v2533 = vadd.f32 0.0, %v2532
    %v2534 = vpop.f32.mrb[0].mxu0
    %2535 = vdwg.mxu0
    %v2536 = vadd.f32 %v2355, %v2533
    %s2537 = scalar_lea.vmem %s8, 6
    %v2538 = vld [vmem:[%s2537] sm:$0x3]
    %v2540 = vsel %vm2003, %v2538, 0
    %2542 = vmatprep.subr.mxu0 %v1999
    %2543 = vmatpush1.msra.mxu0 %v1998
    %2544 = vmatprep.subr.mxu0 %v2001
    %2545 = vmatpush1.msra.mxu0 %v2000
    %2546 = vmatprep.subr.mxu0 0.0
    %2547 = vmatpush1.msra.mxu0 0.0
    %2548 = vmatprep.subr.mxu0 0.0
    %2549 = vmatpush1.msra.mxu0 0.0
    %2550 = vmatprep.subr.mxu0 0.0
    %2551 = vmatpush1.msra.mxu0 0.0
    %2552 = vmatprep.subr.mxu0 0.0
    %2553 = vmatpush1.msra.mxu0 0.0
    %2554 = vmatprep.subr.mxu0 0.0
    %2555 = vmatpush1.msra.mxu0 0.0
    %2556 = vmatprep.subr.mxu0 0.0
    %2557 = vmatpush1.msra.mxu0 0.0
    %2558 = vmatprep.subr.mxu0 0.0
    %2559 = vmatpush1.msra.mxu0 0.0
    %2560 = vmatprep.subr.mxu0 0.0
    %2561 = vmatpush1.msra.mxu0 0.0
    %2562 = vmatprep.subr.mxu0 0.0
    %2563 = vmatpush1.msra.mxu0 0.0
    %2564 = vmatprep.subr.mxu0 0.0
    %2565 = vmatpush1.msra.mxu0 0.0
    %2566 = vmatprep.subr.mxu0 0.0
    %2567 = vmatpush1.msra.mxu0 0.0
    %2568 = vmatprep.subr.mxu0 0.0
    %2569 = vmatpush1.msra.mxu0 0.0
    %2570 = vmatprep.subr.mxu0 0.0
    %2571 = vmatpush1.msra.mxu0 0.0
    %2572 = vmatprep.subr.mxu0 0.0
    %2573 = vmatpush1.msra.mxu0 0.0
    %2574 = vmatprep.subr.mxu0 0.0
    %2575 = vmatpush1.msra.mxu0 0.0
    %2576 = vmatprep.subr.mxu0 0.0
    %2577 = vmatpush1.msra.mxu0 0.0
    %2578 = vmatprep.subr.mxu0 0.0
    %2579 = vmatpush1.msra.mxu0 0.0
    %2580 = vmatprep.subr.mxu0 0.0
    %2581 = vmatpush1.msra.mxu0 0.0
    %2582 = vmatprep.subr.mxu0 0.0
    %2583 = vmatpush1.msra.mxu0 0.0
    %2584 = vmatprep.subr.mxu0 0.0
    %2585 = vmatpush1.msra.mxu0 0.0
    %2586 = vmatprep.subr.mxu0 0.0
    %2587 = vmatpush1.msra.mxu0 0.0
    %2588 = vmatprep.subr.mxu0 0.0
    %2589 = vmatpush1.msra.mxu0 0.0
    %2590 = vmatprep.subr.mxu0 0.0
    %2591 = vmatpush1.msra.mxu0 0.0
    %2592 = vmatprep.subr.mxu0 0.0
    %2593 = vmatpush1.msra.mxu0 0.0
    %2594 = vmatprep.subr.mxu0 0.0
    %2595 = vmatpush1.msra.mxu0 0.0
    %2596 = vmatprep.subr.mxu0 0.0
    %2597 = vmatpush1.msra.mxu0 0.0
    %2598 = vmatprep.subr.mxu0 0.0
    %2599 = vmatpush1.msra.mxu0 0.0
    %2600 = vmatprep.subr.mxu0 0.0
    %2601 = vmatpush1.msra.mxu0 0.0
    %2602 = vmatprep.subr.mxu0 0.0
    %2603 = vmatpush1.msra.mxu0 0.0
    %2604 = vmatprep.subr.mxu0 0.0
    %2605 = vmatpush1.msra.mxu0 0.0
    %2606 = vmatprep.mubr.f32.mxu0 0.0
    %2607 = vmatmul.mubr.f32.gmra.mrb[0].mxu0 %v2540
    %v2608 = vpop.f32.mrb[0].mxu0
    %v2609 = vadd.f32 0.0, %v2608
    %v2610 = vpop.f32.mrb[0].mxu0
    %v2611 = vadd.f32 0.0, %v2610
    %2612 = vdwg.mxu0
    %v2613 = vld [vmem:[#allocation5 + $0x300] sm:$0xff]
    %v2614 = vld [vmem:[#allocation5 + $0x308] sm:$0xff]
    %v2615 = vld [vmem:[#allocation5 + $0x310] sm:$0xff]
    %v2616 = vld [vmem:[#allocation5 + $0x318] sm:$0xff]
    %v2617 = vld [vmem:[#allocation5 + $0x320] sm:$0xff]
    %v2618 = vld [vmem:[#allocation5 + $0x328] sm:$0xff]
    %v2619 = vld [vmem:[#allocation5 + $0x330] sm:$0xff]
    %v2620 = vld [vmem:[#allocation5 + $0x338] sm:$0xff]
    %v2621 = vld [vmem:[#allocation5 + $0x340] sm:$0xff]
    %v2622 = vld [vmem:[#allocation5 + $0x348] sm:$0xff]
    %v2623 = vld [vmem:[#allocation5 + $0x350] sm:$0xff]
    %v2624 = vld [vmem:[#allocation5 + $0x358] sm:$0xff]
    %v2625 = vld [vmem:[#allocation5 + $0x360] sm:$0xff]
    %v2626 = vld [vmem:[#allocation5 + $0x368] sm:$0xff]
    %v2627 = vld [vmem:[#allocation5 + $0x370] sm:$0xff]
    %v2628 = vld [vmem:[#allocation5 + $0x378] sm:$0xff]
    %v2629 = vld [vmem:[#allocation5 + $0x380] sm:$0xff]
    %v2630 = vld [vmem:[#allocation5 + $0x388] sm:$0xff]
    %v2631 = vld [vmem:[#allocation5 + $0x390] sm:$0xff]
    %v2632 = vld [vmem:[#allocation5 + $0x398] sm:$0xff]
    %v2633 = vld [vmem:[#allocation5 + $0x3a0] sm:$0xff]
    %v2634 = vld [vmem:[#allocation5 + $0x3a8] sm:$0xff]
    %v2635 = vld [vmem:[#allocation5 + $0x3b0] sm:$0xff]
    %v2636 = vld [vmem:[#allocation5 + $0x3b8] sm:$0xff]
    %v2637 = vld [vmem:[#allocation5 + $0x3c0] sm:$0xff]
    %v2638 = vld [vmem:[#allocation5 + $0x3c8] sm:$0xff]
    %v2639 = vld [vmem:[#allocation5 + $0x3d0] sm:$0xff]
    %v2640 = vld [vmem:[#allocation5 + $0x3d8] sm:$0xff]
    %v2641 = vld [vmem:[#allocation5 + $0x3e0] sm:$0xff]
    %v2642 = vld [vmem:[#allocation5 + $0x3e8] sm:$0xff]
    %v2643 = vld [vmem:[#allocation5 + $0x3f0] sm:$0xff]
    %v2644 = vld [vmem:[#allocation5 + $0x3f8] sm:$0xff]
    %2645 = vmatprep.subr.mxu0 0.0
    %2646 = vmatpush1.msra.mxu0 %v2613
    %2647 = vmatprep.subr.mxu0 0.0
    %2648 = vmatpush1.msra.mxu0 %v2614
    %2649 = vmatprep.subr.mxu0 0.0
    %2650 = vmatpush1.msra.mxu0 %v2615
    %2651 = vmatprep.subr.mxu0 0.0
    %2652 = vmatpush1.msra.mxu0 %v2616
    %2653 = vmatprep.subr.mxu0 0.0
    %2654 = vmatpush1.msra.mxu0 %v2617
    %2655 = vmatprep.subr.mxu0 0.0
    %2656 = vmatpush1.msra.mxu0 %v2618
    %2657 = vmatprep.subr.mxu0 0.0
    %2658 = vmatpush1.msra.mxu0 %v2619
    %2659 = vmatprep.subr.mxu0 0.0
    %2660 = vmatpush1.msra.mxu0 %v2620
    %2661 = vmatprep.subr.mxu0 0.0
    %2662 = vmatpush1.msra.mxu0 %v2621
    %2663 = vmatprep.subr.mxu0 0.0
    %2664 = vmatpush1.msra.mxu0 %v2622
    %2665 = vmatprep.subr.mxu0 0.0
    %2666 = vmatpush1.msra.mxu0 %v2623
    %2667 = vmatprep.subr.mxu0 0.0
    %2668 = vmatpush1.msra.mxu0 %v2624
    %2669 = vmatprep.subr.mxu0 0.0
    %2670 = vmatpush1.msra.mxu0 %v2625
    %2671 = vmatprep.subr.mxu0 0.0
    %2672 = vmatpush1.msra.mxu0 %v2626
    %2673 = vmatprep.subr.mxu0 0.0
    %2674 = vmatpush1.msra.mxu0 %v2627
    %2675 = vmatprep.subr.mxu0 0.0
    %2676 = vmatpush1.msra.mxu0 %v2628
    %2677 = vmatprep.subr.mxu0 0.0
    %2678 = vmatpush1.msra.mxu0 %v2629
    %2679 = vmatprep.subr.mxu0 0.0
    %2680 = vmatpush1.msra.mxu0 %v2630
    %2681 = vmatprep.subr.mxu0 0.0
    %2682 = vmatpush1.msra.mxu0 %v2631
    %2683 = vmatprep.subr.mxu0 0.0
    %2684 = vmatpush1.msra.mxu0 %v2632
    %2685 = vmatprep.subr.mxu0 0.0
    %2686 = vmatpush1.msra.mxu0 %v2633
    %2687 = vmatprep.subr.mxu0 0.0
    %2688 = vmatpush1.msra.mxu0 %v2634
    %2689 = vmatprep.subr.mxu0 0.0
    %2690 = vmatpush1.msra.mxu0 %v2635
    %2691 = vmatprep.subr.mxu0 0.0
    %2692 = vmatpush1.msra.mxu0 %v2636
    %2693 = vmatprep.subr.mxu0 0.0
    %2694 = vmatpush1.msra.mxu0 %v2637
    %2695 = vmatprep.subr.mxu0 0.0
    %2696 = vmatpush1.msra.mxu0 %v2638
    %2697 = vmatprep.subr.mxu0 0.0
    %2698 = vmatpush1.msra.mxu0 %v2639
    %2699 = vmatprep.subr.mxu0 0.0
    %2700 = vmatpush1.msra.mxu0 %v2640
    %2701 = vmatprep.subr.mxu0 0.0
    %2702 = vmatpush1.msra.mxu0 %v2641
    %2703 = vmatprep.subr.mxu0 0.0
    %2704 = vmatpush1.msra.mxu0 %v2642
    %2705 = vmatprep.subr.mxu0 0.0
    %2706 = vmatpush1.msra.mxu0 %v2643
    %2707 = vmatprep.subr.mxu0 0.0
    %2708 = vmatpush1.msra.mxu0 %v2644
    %2709 = vmatprep.mubr.f32.mxu0 %v2611
    %2710 = vmatmul.mubr.f32.gmra.mrb[0].mxu0 %v2609
    %v2711 = vpop.f32.mrb[0].mxu0
    %v2712 = vadd.f32 0.0, %v2711
    %v2713 = vpop.f32.mrb[0].mxu0
    %2714 = vdwg.mxu0
    %v2715 = vadd.f32 %v2536, %v2712
    %s2716 = scalar_lea.vmem %s8, 8
    %v2717 = vld [vmem:[%s2716] sm:$0x3]
    %v2719 = vsel %vm2003, %v2717, 0
    %2721 = vmatprep.subr.mxu0 %v1999
    %2722 = vmatpush1.msra.mxu0 %v1998
    %2723 = vmatprep.subr.mxu0 %v2001
    %2724 = vmatpush1.msra.mxu0 %v2000
    %2725 = vmatprep.subr.mxu0 0.0
    %2726 = vmatpush1.msra.mxu0 0.0
    %2727 = vmatprep.subr.mxu0 0.0
    %2728 = vmatpush1.msra.mxu0 0.0
    %2729 = vmatprep.subr.mxu0 0.0
    %2730 = vmatpush1.msra.mxu0 0.0
    %2731 = vmatprep.subr.mxu0 0.0
    %2732 = vmatpush1.msra.mxu0 0.0
    %2733 = vmatprep.subr.mxu0 0.0
    %2734 = vmatpush1.msra.mxu0 0.0
    %2735 = vmatprep.subr.mxu0 0.0
    %2736 = vmatpush1.msra.mxu0 0.0
    %2737 = vmatprep.subr.mxu0 0.0
    %2738 = vmatpush1.msra.mxu0 0.0
    %2739 = vmatprep.subr.mxu0 0.0
    %2740 = vmatpush1.msra.mxu0 0.0
    %2741 = vmatprep.subr.mxu0 0.0
    %2742 = vmatpush1.msra.mxu0 0.0
    %2743 = vmatprep.subr.mxu0 0.0
    %2744 = vmatpush1.msra.mxu0 0.0
    %2745 = vmatprep.subr.mxu0 0.0
    %2746 = vmatpush1.msra.mxu0 0.0
    %2747 = vmatprep.subr.mxu0 0.0
    %2748 = vmatpush1.msra.mxu0 0.0
    %2749 = vmatprep.subr.mxu0 0.0
    %2750 = vmatpush1.msra.mxu0 0.0
    %2751 = vmatprep.subr.mxu0 0.0
    %2752 = vmatpush1.msra.mxu0 0.0
    %2753 = vmatprep.subr.mxu0 0.0
    %2754 = vmatpush1.msra.mxu0 0.0
    %2755 = vmatprep.subr.mxu0 0.0
    %2756 = vmatpush1.msra.mxu0 0.0
    %2757 = vmatprep.subr.mxu0 0.0
    %2758 = vmatpush1.msra.mxu0 0.0
    %2759 = vmatprep.subr.mxu0 0.0
    %2760 = vmatpush1.msra.mxu0 0.0
    %2761 = vmatprep.subr.mxu0 0.0
    %2762 = vmatpush1.msra.mxu0 0.0
    %2763 = vmatprep.subr.mxu0 0.0
    %2764 = vmatpush1.msra.mxu0 0.0
    %2765 = vmatprep.subr.mxu0 0.0
    %2766 = vmatpush1.msra.mxu0 0.0
    %2767 = vmatprep.subr.mxu0 0.0
    %2768 = vmatpush1.msra.mxu0 0.0
    %2769 = vmatprep.subr.mxu0 0.0
    %2770 = vmatpush1.msra.mxu0 0.0
    %2771 = vmatprep.subr.mxu0 0.0
    %2772 = vmatpush1.msra.mxu0 0.0
    %2773 = vmatprep.subr.mxu0 0.0
    %2774 = vmatpush1.msra.mxu0 0.0
    %2775 = vmatprep.subr.mxu0 0.0
    %2776 = vmatpush1.msra.mxu0 0.0
    %2777 = vmatprep.subr.mxu0 0.0
    %2778 = vmatpush1.msra.mxu0 0.0
    %2779 = vmatprep.subr.mxu0 0.0
    %2780 = vmatpush1.msra.mxu0 0.0
    %2781 = vmatprep.subr.mxu0 0.0
    %2782 = vmatpush1.msra.mxu0 0.0
    %2783 = vmatprep.subr.mxu0 0.0
    %2784 = vmatpush1.msra.mxu0 0.0
    %2785 = vmatprep.mubr.f32.mxu0 0.0
    %2786 = vmatmul.mubr.f32.gmra.mrb[0].mxu0 %v2719
    %v2787 = vpop.f32.mrb[0].mxu0
    %v2788 = vadd.f32 0.0, %v2787
    %v2789 = vpop.f32.mrb[0].mxu0
    %v2790 = vadd.f32 0.0, %v2789
    %2791 = vdwg.mxu0
    %v2792 = vld [vmem:[#allocation5 + $0x400] sm:$0xff]
    %v2793 = vld [vmem:[#allocation5 + $0x408] sm:$0xff]
    %v2794 = vld [vmem:[#allocation5 + $0x410] sm:$0xff]
    %v2795 = vld [vmem:[#allocation5 + $0x418] sm:$0xff]
    %v2796 = vld [vmem:[#allocation5 + $0x420] sm:$0xff]
    %v2797 = vld [vmem:[#allocation5 + $0x428] sm:$0xff]
    %v2798 = vld [vmem:[#allocation5 + $0x430] sm:$0xff]
    %v2799 = vld [vmem:[#allocation5 + $0x438] sm:$0xff]
    %v2800 = vld [vmem:[#allocation5 + $0x440] sm:$0xff]
    %v2801 = vld [vmem:[#allocation5 + $0x448] sm:$0xff]
    %v2802 = vld [vmem:[#allocation5 + $0x450] sm:$0xff]
    %v2803 = vld [vmem:[#allocation5 + $0x458] sm:$0xff]
    %v2804 = vld [vmem:[#allocation5 + $0x460] sm:$0xff]
    %v2805 = vld [vmem:[#allocation5 + $0x468] sm:$0xff]
    %v2806 = vld [vmem:[#allocation5 + $0x470] sm:$0xff]
    %v2807 = vld [vmem:[#allocation5 + $0x478] sm:$0xff]
    %v2808 = vld [vmem:[#allocation5 + $0x480] sm:$0xff]
    %v2809 = vld [vmem:[#allocation5 + $0x488] sm:$0xff]
    %v2810 = vld [vmem:[#allocation5 + $0x490] sm:$0xff]
    %v2811 = vld [vmem:[#allocation5 + $0x498] sm:$0xff]
    %v2812 = vld [vmem:[#allocation5 + $0x4a0] sm:$0xff]
    %v2813 = vld [vmem:[#allocation5 + $0x4a8] sm:$0xff]
    %v2814 = vld [vmem:[#allocation5 + $0x4b0] sm:$0xff]
    %v2815 = vld [vmem:[#allocation5 + $0x4b8] sm:$0xff]
    %v2816 = vld [vmem:[#allocation5 + $0x4c0] sm:$0xff]
    %v2817 = vld [vmem:[#allocation5 + $0x4c8] sm:$0xff]
    %v2818 = vld [vmem:[#allocation5 + $0x4d0] sm:$0xff]
    %v2819 = vld [vmem:[#allocation5 + $0x4d8] sm:$0xff]
    %v2820 = vld [vmem:[#allocation5 + $0x4e0] sm:$0xff]
    %v2821 = vld [vmem:[#allocation5 + $0x4e8] sm:$0xff]
    %v2822 = vld [vmem:[#allocation5 + $0x4f0] sm:$0xff]
    %v2823 = vld [vmem:[#allocation5 + $0x4f8] sm:$0xff]
    %2824 = vmatprep.subr.mxu0 0.0
    %2825 = vmatpush1.msra.mxu0 %v2792
    %2826 = vmatprep.subr.mxu0 0.0
    %2827 = vmatpush1.msra.mxu0 %v2793
    %2828 = vmatprep.subr.mxu0 0.0
    %2829 = vmatpush1.msra.mxu0 %v2794
    %2830 = vmatprep.subr.mxu0 0.0
    %2831 = vmatpush1.msra.mxu0 %v2795
    %2832 = vmatprep.subr.mxu0 0.0
    %2833 = vmatpush1.msra.mxu0 %v2796
    %2834 = vmatprep.subr.mxu0 0.0
    %2835 = vmatpush1.msra.mxu0 %v2797
    %2836 = vmatprep.subr.mxu0 0.0
    %2837 = vmatpush1.msra.mxu0 %v2798
    %2838 = vmatprep.subr.mxu0 0.0
    %2839 = vmatpush1.msra.mxu0 %v2799
    %2840 = vmatprep.subr.mxu0 0.0
    %2841 = vmatpush1.msra.mxu0 %v2800
    %2842 = vmatprep.subr.mxu0 0.0
    %2843 = vmatpush1.msra.mxu0 %v2801
    %2844 = vmatprep.subr.mxu0 0.0
    %2845 = vmatpush1.msra.mxu0 %v2802
    %2846 = vmatprep.subr.mxu0 0.0
    %2847 = vmatpush1.msra.mxu0 %v2803
    %2848 = vmatprep.subr.mxu0 0.0
    %2849 = vmatpush1.msra.mxu0 %v2804
    %2850 = vmatprep.subr.mxu0 0.0
    %2851 = vmatpush1.msra.mxu0 %v2805
    %2852 = vmatprep.subr.mxu0 0.0
    %2853 = vmatpush1.msra.mxu0 %v2806
    %2854 = vmatprep.subr.mxu0 0.0
    %2855 = vmatpush1.msra.mxu0 %v2807
    %2856 = vmatprep.subr.mxu0 0.0
    %2857 = vmatpush1.msra.mxu0 %v2808
    %2858 = vmatprep.subr.mxu0 0.0
    %2859 = vmatpush1.msra.mxu0 %v2809
    %2860 = vmatprep.subr.mxu0 0.0
    %2861 = vmatpush1.msra.mxu0 %v2810
    %2862 = vmatprep.subr.mxu0 0.0
    %2863 = vmatpush1.msra.mxu0 %v2811
    %2864 = vmatprep.subr.mxu0 0.0
    %2865 = vmatpush1.msra.mxu0 %v2812
    %2866 = vmatprep.subr.mxu0 0.0
    %2867 = vmatpush1.msra.mxu0 %v2813
    %2868 = vmatprep.subr.mxu0 0.0
    %2869 = vmatpush1.msra.mxu0 %v2814
    %2870 = vmatprep.subr.mxu0 0.0
    %2871 = vmatpush1.msra.mxu0 %v2815
    %2872 = vmatprep.subr.mxu0 0.0
    %2873 = vmatpush1.msra.mxu0 %v2816
    %2874 = vmatprep.subr.mxu0 0.0
    %2875 = vmatpush1.msra.mxu0 %v2817
    %2876 = vmatprep.subr.mxu0 0.0
    %2877 = vmatpush1.msra.mxu0 %v2818
    %2878 = vmatprep.subr.mxu0 0.0
    %2879 = vmatpush1.msra.mxu0 %v2819
    %2880 = vmatprep.subr.mxu0 0.0
    %2881 = vmatpush1.msra.mxu0 %v2820
    %2882 = vmatprep.subr.mxu0 0.0
    %2883 = vmatpush1.msra.mxu0 %v2821
    %2884 = vmatprep.subr.mxu0 0.0
    %2885 = vmatpush1.msra.mxu0 %v2822
    %2886 = vmatprep.subr.mxu0 0.0
    %2887 = vmatpush1.msra.mxu0 %v2823
    %2888 = vmatprep.mubr.f32.mxu0 %v2790
    %2889 = vmatmul.mubr.f32.gmra.mrb[0].mxu0 %v2788
    %v2890 = vpop.f32.mrb[0].mxu0
    %v2891 = vadd.f32 0.0, %v2890
    %v2892 = vpop.f32.mrb[0].mxu0
    %2893 = vdwg.mxu0
    %v2894 = vadd.f32 %v2715, %v2891
    %s2895 = scalar_lea.vmem %s8, 10
    %v2896 = vld [vmem:[%s2895] sm:$0x3]
    %v2898 = vsel %vm2003, %v2896, 0
    %2900 = vmatprep.subr.mxu0 %v1999
    %2901 = vmatpush1.msra.mxu0 %v1998
    %2902 = vmatprep.subr.mxu0 %v2001
    %2903 = vmatpush1.msra.mxu0 %v2000
    %2904 = vmatprep.subr.mxu0 0.0
    %2905 = vmatpush1.msra.mxu0 0.0
    %2906 = vmatprep.subr.mxu0 0.0
    %2907 = vmatpush1.msra.mxu0 0.0
    %2908 = vmatprep.subr.mxu0 0.0
    %2909 = vmatpush1.msra.mxu0 0.0
    %2910 = vmatprep.subr.mxu0 0.0
    %2911 = vmatpush1.msra.mxu0 0.0
    %2912 = vmatprep.subr.mxu0 0.0
    %2913 = vmatpush1.msra.mxu0 0.0
    %2914 = vmatprep.subr.mxu0 0.0
    %2915 = vmatpush1.msra.mxu0 0.0
    %2916 = vmatprep.subr.mxu0 0.0
    %2917 = vmatpush1.msra.mxu0 0.0
    %2918 = vmatprep.subr.mxu0 0.0
    %2919 = vmatpush1.msra.mxu0 0.0
    %2920 = vmatprep.subr.mxu0 0.0
    %2921 = vmatpush1.msra.mxu0 0.0
    %2922 = vmatprep.subr.mxu0 0.0
    %2923 = vmatpush1.msra.mxu0 0.0
    %2924 = vmatprep.subr.mxu0 0.0
    %2925 = vmatpush1.msra.mxu0 0.0
    %2926 = vmatprep.subr.mxu0 0.0
    %2927 = vmatpush1.msra.mxu0 0.0
    %2928 = vmatprep.subr.mxu0 0.0
    %2929 = vmatpush1.msra.mxu0 0.0
    %2930 = vmatprep.subr.mxu0 0.0
    %2931 = vmatpush1.msra.mxu0 0.0
    %2932 = vmatprep.subr.mxu0 0.0
    %2933 = vmatpush1.msra.mxu0 0.0
    %2934 = vmatprep.subr.mxu0 0.0
    %2935 = vmatpush1.msra.mxu0 0.0
    %2936 = vmatprep.subr.mxu0 0.0
    %2937 = vmatpush1.msra.mxu0 0.0
    %2938 = vmatprep.subr.mxu0 0.0
    %2939 = vmatpush1.msra.mxu0 0.0
    %2940 = vmatprep.subr.mxu0 0.0
    %2941 = vmatpush1.msra.mxu0 0.0
    %2942 = vmatprep.subr.mxu0 0.0
    %2943 = vmatpush1.msra.mxu0 0.0
    %2944 = vmatprep.subr.mxu0 0.0
    %2945 = vmatpush1.msra.mxu0 0.0
    %2946 = vmatprep.subr.mxu0 0.0
    %2947 = vmatpush1.msra.mxu0 0.0
    %2948 = vmatprep.subr.mxu0 0.0
    %2949 = vmatpush1.msra.mxu0 0.0
    %2950 = vmatprep.subr.mxu0 0.0
    %2951 = vmatpush1.msra.mxu0 0.0
    %2952 = vmatprep.subr.mxu0 0.0
    %2953 = vmatpush1.msra.mxu0 0.0
    %2954 = vmatprep.subr.mxu0 0.0
    %2955 = vmatpush1.msra.mxu0 0.0
    %2956 = vmatprep.subr.mxu0 0.0
    %2957 = vmatpush1.msra.mxu0 0.0
    %2958 = vmatprep.subr.mxu0 0.0
    %2959 = vmatpush1.msra.mxu0 0.0
    %2960 = vmatprep.subr.mxu0 0.0
    %2961 = vmatpush1.msra.mxu0 0.0
    %2962 = vmatprep.subr.mxu0 0.0
    %2963 = vmatpush1.msra.mxu0 0.0
    %2964 = vmatprep.mubr.f32.mxu0 0.0
    %2965 = vmatmul.mubr.f32.gmra.mrb[0].mxu0 %v2898
    %v2966 = vpop.f32.mrb[0].mxu0
    %v2967 = vadd.f32 0.0, %v2966
    %v2968 = vpop.f32.mrb[0].mxu0
    %v2969 = vadd.f32 0.0, %v2968
    %2970 = vdwg.mxu0
    %v2971 = vld [vmem:[#allocation5 + $0x500] sm:$0xff]
    %v2972 = vld [vmem:[#allocation5 + $0x508] sm:$0xff]
    %v2973 = vld [vmem:[#allocation5 + $0x510] sm:$0xff]
    %v2974 = vld [vmem:[#allocation5 + $0x518] sm:$0xff]
    %v2975 = vld [vmem:[#allocation5 + $0x520] sm:$0xff]
    %v2976 = vld [vmem:[#allocation5 + $0x528] sm:$0xff]
    %v2977 = vld [vmem:[#allocation5 + $0x530] sm:$0xff]
    %v2978 = vld [vmem:[#allocation5 + $0x538] sm:$0xff]
    %v2979 = vld [vmem:[#allocation5 + $0x540] sm:$0xff]
    %v2980 = vld [vmem:[#allocation5 + $0x548] sm:$0xff]
    %v2981 = vld [vmem:[#allocation5 + $0x550] sm:$0xff]
    %v2982 = vld [vmem:[#allocation5 + $0x558] sm:$0xff]
    %v2983 = vld [vmem:[#allocation5 + $0x560] sm:$0xff]
    %v2984 = vld [vmem:[#allocation5 + $0x568] sm:$0xff]
    %v2985 = vld [vmem:[#allocation5 + $0x570] sm:$0xff]
    %v2986 = vld [vmem:[#allocation5 + $0x578] sm:$0xff]
    %v2987 = vld [vmem:[#allocation5 + $0x580] sm:$0xff]
    %v2988 = vld [vmem:[#allocation5 + $0x588] sm:$0xff]
    %v2989 = vld [vmem:[#allocation5 + $0x590] sm:$0xff]
    %v2990 = vld [vmem:[#allocation5 + $0x598] sm:$0xff]
    %v2991 = vld [vmem:[#allocation5 + $0x5a0] sm:$0xff]
    %v2992 = vld [vmem:[#allocation5 + $0x5a8] sm:$0xff]
    %v2993 = vld [vmem:[#allocation5 + $0x5b0] sm:$0xff]
    %v2994 = vld [vmem:[#allocation5 + $0x5b8] sm:$0xff]
    %v2995 = vld [vmem:[#allocation5 + $0x5c0] sm:$0xff]
    %v2996 = vld [vmem:[#allocation5 + $0x5c8] sm:$0xff]
    %v2997 = vld [vmem:[#allocation5 + $0x5d0] sm:$0xff]
    %v2998 = vld [vmem:[#allocation5 + $0x5d8] sm:$0xff]
    %v2999 = vld [vmem:[#allocation5 + $0x5e0] sm:$0xff]
    %v3000 = vld [vmem:[#allocation5 + $0x5e8] sm:$0xff]
    %v3001 = vld [vmem:[#allocation5 + $0x5f0] sm:$0xff]
    %v3002 = vld [vmem:[#allocation5 + $0x5f8] sm:$0xff]
    %3003 = vmatprep.subr.mxu0 0.0
    %3004 = vmatpush1.msra.mxu0 %v2971
    %3005 = vmatprep.subr.mxu0 0.0
    %3006 = vmatpush1.msra.mxu0 %v2972
    %3007 = vmatprep.subr.mxu0 0.0
    %3008 = vmatpush1.msra.mxu0 %v2973
    %3009 = vmatprep.subr.mxu0 0.0
    %3010 = vmatpush1.msra.mxu0 %v2974
    %3011 = vmatprep.subr.mxu0 0.0
    %3012 = vmatpush1.msra.mxu0 %v2975
    %3013 = vmatprep.subr.mxu0 0.0
    %3014 = vmatpush1.msra.mxu0 %v2976
    %3015 = vmatprep.subr.mxu0 0.0
    %3016 = vmatpush1.msra.mxu0 %v2977
    %3017 = vmatprep.subr.mxu0 0.0
    %3018 = vmatpush1.msra.mxu0 %v2978
    %3019 = vmatprep.subr.mxu0 0.0
    %3020 = vmatpush1.msra.mxu0 %v2979
    %3021 = vmatprep.subr.mxu0 0.0
    %3022 = vmatpush1.msra.mxu0 %v2980
    %3023 = vmatprep.subr.mxu0 0.0
    %3024 = vmatpush1.msra.mxu0 %v2981
    %3025 = vmatprep.subr.mxu0 0.0
    %3026 = vmatpush1.msra.mxu0 %v2982
    %3027 = vmatprep.subr.mxu0 0.0
    %3028 = vmatpush1.msra.mxu0 %v2983
    %3029 = vmatprep.subr.mxu0 0.0
    %3030 = vmatpush1.msra.mxu0 %v2984
    %3031 = vmatprep.subr.mxu0 0.0
    %3032 = vmatpush1.msra.mxu0 %v2985
    %3033 = vmatprep.subr.mxu0 0.0
    %3034 = vmatpush1.msra.mxu0 %v2986
    %3035 = vmatprep.subr.mxu0 0.0
    %3036 = vmatpush1.msra.mxu0 %v2987
    %3037 = vmatprep.subr.mxu0 0.0
    %3038 = vmatpush1.msra.mxu0 %v2988
    %3039 = vmatprep.subr.mxu0 0.0
    %3040 = vmatpush1.msra.mxu0 %v2989
    %3041 = vmatprep.subr.mxu0 0.0
    %3042 = vmatpush1.msra.mxu0 %v2990
    %3043 = vmatprep.subr.mxu0 0.0
    %3044 = vmatpush1.msra.mxu0 %v2991
    %3045 = vmatprep.subr.mxu0 0.0
    %3046 = vmatpush1.msra.mxu0 %v2992
    %3047 = vmatprep.subr.mxu0 0.0
    %3048 = vmatpush1.msra.mxu0 %v2993
    %3049 = vmatprep.subr.mxu0 0.0
    %3050 = vmatpush1.msra.mxu0 %v2994
    %3051 = vmatprep.subr.mxu0 0.0
    %3052 = vmatpush1.msra.mxu0 %v2995
    %3053 = vmatprep.subr.mxu0 0.0
    %3054 = vmatpush1.msra.mxu0 %v2996
    %3055 = vmatprep.subr.mxu0 0.0
    %3056 = vmatpush1.msra.mxu0 %v2997
    %3057 = vmatprep.subr.mxu0 0.0
    %3058 = vmatpush1.msra.mxu0 %v2998
    %3059 = vmatprep.subr.mxu0 0.0
    %3060 = vmatpush1.msra.mxu0 %v2999
    %3061 = vmatprep.subr.mxu0 0.0
    %3062 = vmatpush1.msra.mxu0 %v3000
    %3063 = vmatprep.subr.mxu0 0.0
    %3064 = vmatpush1.msra.mxu0 %v3001
    %3065 = vmatprep.subr.mxu0 0.0
    %3066 = vmatpush1.msra.mxu0 %v3002
    %3067 = vmatprep.mubr.f32.mxu0 %v2969
    %3068 = vmatmul.mubr.f32.gmra.mrb[0].mxu0 %v2967
    %v3069 = vpop.f32.mrb[0].mxu0
    %v3070 = vadd.f32 0.0, %v3069
    %v3071 = vpop.f32.mrb[0].mxu0
    %3072 = vdwg.mxu0
    %v3073 = vadd.f32 %v2894, %v3070
    %s3074 = scalar_lea.vmem %s8, 12
    %v3075 = vld [vmem:[%s3074] sm:$0x3]
    %v3077 = vsel %vm2003, %v3075, 0
    %3079 = vmatprep.subr.mxu0 %v1999
    %3080 = vmatpush1.msra.mxu0 %v1998
    %3081 = vmatprep.subr.mxu0 %v2001
    %3082 = vmatpush1.msra.mxu0 %v2000
    %3083 = vmatprep.subr.mxu0 0.0
    %3084 = vmatpush1.msra.mxu0 0.0
    %3085 = vmatprep.subr.mxu0 0.0
    %3086 = vmatpush1.msra.mxu0 0.0
    %3087 = vmatprep.subr.mxu0 0.0
    %3088 = vmatpush1.msra.mxu0 0.0
    %3089 = vmatprep.subr.mxu0 0.0
    %3090 = vmatpush1.msra.mxu0 0.0
    %3091 = vmatprep.subr.mxu0 0.0
    %3092 = vmatpush1.msra.mxu0 0.0
    %3093 = vmatprep.subr.mxu0 0.0
    %3094 = vmatpush1.msra.mxu0 0.0
    %3095 = vmatprep.subr.mxu0 0.0
    %3096 = vmatpush1.msra.mxu0 0.0
    %3097 = vmatprep.subr.mxu0 0.0
    %3098 = vmatpush1.msra.mxu0 0.0
    %3099 = vmatprep.subr.mxu0 0.0
    %3100 = vmatpush1.msra.mxu0 0.0
    %3101 = vmatprep.subr.mxu0 0.0
    %3102 = vmatpush1.msra.mxu0 0.0
    %3103 = vmatprep.subr.mxu0 0.0
    %3104 = vmatpush1.msra.mxu0 0.0
    %3105 = vmatprep.subr.mxu0 0.0
    %3106 = vmatpush1.msra.mxu0 0.0
    %3107 = vmatprep.subr.mxu0 0.0
    %3108 = vmatpush1.msra.mxu0 0.0
    %3109 = vmatprep.subr.mxu0 0.0
    %3110 = vmatpush1.msra.mxu0 0.0
    %3111 = vmatprep.subr.mxu0 0.0
    %3112 = vmatpush1.msra.mxu0 0.0
    %3113 = vmatprep.subr.mxu0 0.0
    %3114 = vmatpush1.msra.mxu0 0.0
    %3115 = vmatprep.subr.mxu0 0.0
    %3116 = vmatpush1.msra.mxu0 0.0
    %3117 = vmatprep.subr.mxu0 0.0
    %3118 = vmatpush1.msra.mxu0 0.0
    %3119 = vmatprep.subr.mxu0 0.0
    %3120 = vmatpush1.msra.mxu0 0.0
    %3121 = vmatprep.subr.mxu0 0.0
    %3122 = vmatpush1.msra.mxu0 0.0
    %3123 = vmatprep.subr.mxu0 0.0
    %3124 = vmatpush1.msra.mxu0 0.0
    %3125 = vmatprep.subr.mxu0 0.0
    %3126 = vmatpush1.msra.mxu0 0.0
    %3127 = vmatprep.subr.mxu0 0.0
    %3128 = vmatpush1.msra.mxu0 0.0
    %3129 = vmatprep.subr.mxu0 0.0
    %3130 = vmatpush1.msra.mxu0 0.0
    %3131 = vmatprep.subr.mxu0 0.0
    %3132 = vmatpush1.msra.mxu0 0.0
    %3133 = vmatprep.subr.mxu0 0.0
    %3134 = vmatpush1.msra.mxu0 0.0
    %3135 = vmatprep.subr.mxu0 0.0
    %3136 = vmatpush1.msra.mxu0 0.0
    %3137 = vmatprep.subr.mxu0 0.0
    %3138 = vmatpush1.msra.mxu0 0.0
    %3139 = vmatprep.subr.mxu0 0.0
    %3140 = vmatpush1.msra.mxu0 0.0
    %3141 = vmatprep.subr.mxu0 0.0
    %3142 = vmatpush1.msra.mxu0 0.0
    %3143 = vmatprep.mubr.f32.mxu0 0.0
    %3144 = vmatmul.mubr.f32.gmra.mrb[0].mxu0 %v3077
    %v3145 = vpop.f32.mrb[0].mxu0
    %v3146 = vadd.f32 0.0, %v3145
    %v3147 = vpop.f32.mrb[0].mxu0
    %v3148 = vadd.f32 0.0, %v3147
    %3149 = vdwg.mxu0
    %v3150 = vld [vmem:[#allocation5 + $0x600] sm:$0xff]
    %v3151 = vld [vmem:[#allocation5 + $0x608] sm:$0xff]
    %v3152 = vld [vmem:[#allocation5 + $0x610] sm:$0xff]
    %v3153 = vld [vmem:[#allocation5 + $0x618] sm:$0xff]
    %v3154 = vld [vmem:[#allocation5 + $0x620] sm:$0xff]
    %v3155 = vld [vmem:[#allocation5 + $0x628] sm:$0xff]
    %v3156 = vld [vmem:[#allocation5 + $0x630] sm:$0xff]
    %v3157 = vld [vmem:[#allocation5 + $0x638] sm:$0xff]
    %v3158 = vld [vmem:[#allocation5 + $0x640] sm:$0xff]
    %v3159 = vld [vmem:[#allocation5 + $0x648] sm:$0xff]
    %v3160 = vld [vmem:[#allocation5 + $0x650] sm:$0xff]
    %v3161 = vld [vmem:[#allocation5 + $0x658] sm:$0xff]
    %v3162 = vld [vmem:[#allocation5 + $0x660] sm:$0xff]
    %v3163 = vld [vmem:[#allocation5 + $0x668] sm:$0xff]
    %v3164 = vld [vmem:[#allocation5 + $0x670] sm:$0xff]
    %v3165 = vld [vmem:[#allocation5 + $0x678] sm:$0xff]
    %v3166 = vld [vmem:[#allocation5 + $0x680] sm:$0xff]
    %v3167 = vld [vmem:[#allocation5 + $0x688] sm:$0xff]
    %v3168 = vld [vmem:[#allocation5 + $0x690] sm:$0xff]
    %v3169 = vld [vmem:[#allocation5 + $0x698] sm:$0xff]
    %v3170 = vld [vmem:[#allocation5 + $0x6a0] sm:$0xff]
    %v3171 = vld [vmem:[#allocation5 + $0x6a8] sm:$0xff]
    %v3172 = vld [vmem:[#allocation5 + $0x6b0] sm:$0xff]
    %v3173 = vld [vmem:[#allocation5 + $0x6b8] sm:$0xff]
    %v3174 = vld [vmem:[#allocation5 + $0x6c0] sm:$0xff]
    %v3175 = vld [vmem:[#allocation5 + $0x6c8] sm:$0xff]
    %v3176 = vld [vmem:[#allocation5 + $0x6d0] sm:$0xff]
    %v3177 = vld [vmem:[#allocation5 + $0x6d8] sm:$0xff]
    %v3178 = vld [vmem:[#allocation5 + $0x6e0] sm:$0xff]
    %v3179 = vld [vmem:[#allocation5 + $0x6e8] sm:$0xff]
    %v3180 = vld [vmem:[#allocation5 + $0x6f0] sm:$0xff]
    %v3181 = vld [vmem:[#allocation5 + $0x6f8] sm:$0xff]
    %3182 = vmatprep.subr.mxu0 0.0
    %3183 = vmatpush1.msra.mxu0 %v3150
    %3184 = vmatprep.subr.mxu0 0.0
    %3185 = vmatpush1.msra.mxu0 %v3151
    %3186 = vmatprep.subr.mxu0 0.0
    %3187 = vmatpush1.msra.mxu0 %v3152
    %3188 = vmatprep.subr.mxu0 0.0
    %3189 = vmatpush1.msra.mxu0 %v3153
    %3190 = vmatprep.subr.mxu0 0.0
    %3191 = vmatpush1.msra.mxu0 %v3154
    %3192 = vmatprep.subr.mxu0 0.0
    %3193 = vmatpush1.msra.mxu0 %v3155
    %3194 = vmatprep.subr.mxu0 0.0
    %3195 = vmatpush1.msra.mxu0 %v3156
    %3196 = vmatprep.subr.mxu0 0.0
    %3197 = vmatpush1.msra.mxu0 %v3157
    %3198 = vmatprep.subr.mxu0 0.0
    %3199 = vmatpush1.msra.mxu0 %v3158
    %3200 = vmatprep.subr.mxu0 0.0
    %3201 = vmatpush1.msra.mxu0 %v3159
    %3202 = vmatprep.subr.mxu0 0.0
    %3203 = vmatpush1.msra.mxu0 %v3160
    %3204 = vmatprep.subr.mxu0 0.0
    %3205 = vmatpush1.msra.mxu0 %v3161
    %3206 = vmatprep.subr.mxu0 0.0
    %3207 = vmatpush1.msra.mxu0 %v3162
    %3208 = vmatprep.subr.mxu0 0.0
    %3209 = vmatpush1.msra.mxu0 %v3163
    %3210 = vmatprep.subr.mxu0 0.0
    %3211 = vmatpush1.msra.mxu0 %v3164
    %3212 = vmatprep.subr.mxu0 0.0
    %3213 = vmatpush1.msra.mxu0 %v3165
    %3214 = vmatprep.subr.mxu0 0.0
    %3215 = vmatpush1.msra.mxu0 %v3166
    %3216 = vmatprep.subr.mxu0 0.0
    %3217 = vmatpush1.msra.mxu0 %v3167
    %3218 = vmatprep.subr.mxu0 0.0
    %3219 = vmatpush1.msra.mxu0 %v3168
    %3220 = vmatprep.subr.mxu0 0.0
    %3221 = vmatpush1.msra.mxu0 %v3169
    %3222 = vmatprep.subr.mxu0 0.0
    %3223 = vmatpush1.msra.mxu0 %v3170
    %3224 = vmatprep.subr.mxu0 0.0
    %3225 = vmatpush1.msra.mxu0 %v3171
    %3226 = vmatprep.subr.mxu0 0.0
    %3227 = vmatpush1.msra.mxu0 %v3172
    %3228 = vmatprep.subr.mxu0 0.0
    %3229 = vmatpush1.msra.mxu0 %v3173
    %3230 = vmatprep.subr.mxu0 0.0
    %3231 = vmatpush1.msra.mxu0 %v3174
    %3232 = vmatprep.subr.mxu0 0.0
    %3233 = vmatpush1.msra.mxu0 %v3175
    %3234 = vmatprep.subr.mxu0 0.0
    %3235 = vmatpush1.msra.mxu0 %v3176
    %3236 = vmatprep.subr.mxu0 0.0
    %3237 = vmatpush1.msra.mxu0 %v3177
    %3238 = vmatprep.subr.mxu0 0.0
    %3239 = vmatpush1.msra.mxu0 %v3178
    %3240 = vmatprep.subr.mxu0 0.0
    %3241 = vmatpush1.msra.mxu0 %v3179
    %3242 = vmatprep.subr.mxu0 0.0
    %3243 = vmatpush1.msra.mxu0 %v3180
    %3244 = vmatprep.subr.mxu0 0.0
    %3245 = vmatpush1.msra.mxu0 %v3181
    %3246 = vmatprep.mubr.f32.mxu0 %v3148
    %3247 = vmatmul.mubr.f32.gmra.mrb[0].mxu0 %v3146
    %v3248 = vpop.f32.mrb[0].mxu0
    %v3249 = vadd.f32 0.0, %v3248
    %v3250 = vpop.f32.mrb[0].mxu0
    %3251 = vdwg.mxu0
    %v3252 = vadd.f32 %v3073, %v3249
    %s3253 = scalar_lea.vmem %s8, 14
    %v3254 = vld [vmem:[%s3253] sm:$0x3]
    %v3256 = vsel %vm2003, %v3254, 0
    %3258 = vmatprep.subr.mxu0 %v1999
    %3259 = vmatpush1.msra.mxu0 %v1998
    %3260 = vmatprep.subr.mxu0 %v2001
    %3261 = vmatpush1.msra.mxu0 %v2000
    %3262 = vmatprep.subr.mxu0 0.0
    %3263 = vmatpush1.msra.mxu0 0.0
    %3264 = vmatprep.subr.mxu0 0.0
    %3265 = vmatpush1.msra.mxu0 0.0
    %3266 = vmatprep.subr.mxu0 0.0
    %3267 = vmatpush1.msra.mxu0 0.0
    %3268 = vmatprep.subr.mxu0 0.0
    %3269 = vmatpush1.msra.mxu0 0.0
    %3270 = vmatprep.subr.mxu0 0.0
    %3271 = vmatpush1.msra.mxu0 0.0
    %3272 = vmatprep.subr.mxu0 0.0
    %3273 = vmatpush1.msra.mxu0 0.0
    %3274 = vmatprep.subr.mxu0 0.0
    %3275 = vmatpush1.msra.mxu0 0.0
    %3276 = vmatprep.subr.mxu0 0.0
    %3277 = vmatpush1.msra.mxu0 0.0
    %3278 = vmatprep.subr.mxu0 0.0
    %3279 = vmatpush1.msra.mxu0 0.0
    %3280 = vmatprep.subr.mxu0 0.0
    %3281 = vmatpush1.msra.mxu0 0.0
    %3282 = vmatprep.subr.mxu0 0.0
    %3283 = vmatpush1.msra.mxu0 0.0
    %3284 = vmatprep.subr.mxu0 0.0
    %3285 = vmatpush1.msra.mxu0 0.0
    %3286 = vmatprep.subr.mxu0 0.0
    %3287 = vmatpush1.msra.mxu0 0.0
    %3288 = vmatprep.subr.mxu0 0.0
    %3289 = vmatpush1.msra.mxu0 0.0
    %3290 = vmatprep.subr.mxu0 0.0
    %3291 = vmatpush1.msra.mxu0 0.0
    %3292 = vmatprep.subr.mxu0 0.0
    %3293 = vmatpush1.msra.mxu0 0.0
    %3294 = vmatprep.subr.mxu0 0.0
    %3295 = vmatpush1.msra.mxu0 0.0
    %3296 = vmatprep.subr.mxu0 0.0
    %3297 = vmatpush1.msra.mxu0 0.0
    %3298 = vmatprep.subr.mxu0 0.0
    %3299 = vmatpush1.msra.mxu0 0.0
    %3300 = vmatprep.subr.mxu0 0.0
    %3301 = vmatpush1.msra.mxu0 0.0
    %3302 = vmatprep.subr.mxu0 0.0
    %3303 = vmatpush1.msra.mxu0 0.0
    %3304 = vmatprep.subr.mxu0 0.0
    %3305 = vmatpush1.msra.mxu0 0.0
    %3306 = vmatprep.subr.mxu0 0.0
    %3307 = vmatpush1.msra.mxu0 0.0
    %3308 = vmatprep.subr.mxu0 0.0
    %3309 = vmatpush1.msra.mxu0 0.0
    %3310 = vmatprep.subr.mxu0 0.0
    %3311 = vmatpush1.msra.mxu0 0.0
    %3312 = vmatprep.subr.mxu0 0.0
    %3313 = vmatpush1.msra.mxu0 0.0
    %3314 = vmatprep.subr.mxu0 0.0
    %3315 = vmatpush1.msra.mxu0 0.0
    %3316 = vmatprep.subr.mxu0 0.0
    %3317 = vmatpush1.msra.mxu0 0.0
    %3318 = vmatprep.subr.mxu0 0.0
    %3319 = vmatpush1.msra.mxu0 0.0
    %3320 = vmatprep.subr.mxu0 0.0
    %3321 = vmatpush1.msra.mxu0 0.0
    %3322 = vmatprep.mubr.f32.mxu0 0.0
    %3323 = vmatmul.mubr.f32.gmra.mrb[0].mxu0 %v3256
    %v3324 = vpop.f32.mrb[0].mxu0
    %v3325 = vadd.f32 0.0, %v3324
    %v3326 = vpop.f32.mrb[0].mxu0
    %v3327 = vadd.f32 0.0, %v3326
    %3328 = vdwg.mxu0
    %v3329 = vld [vmem:[#allocation5 + $0x700] sm:$0xff]
    %v3330 = vld [vmem:[#allocation5 + $0x708] sm:$0xff]
    %v3331 = vld [vmem:[#allocation5 + $0x710] sm:$0xff]
    %v3332 = vld [vmem:[#allocation5 + $0x718] sm:$0xff]
    %v3333 = vld [vmem:[#allocation5 + $0x720] sm:$0xff]
    %v3334 = vld [vmem:[#allocation5 + $0x728] sm:$0xff]
    %v3335 = vld [vmem:[#allocation5 + $0x730] sm:$0xff]
    %v3336 = vld [vmem:[#allocation5 + $0x738] sm:$0xff]
    %v3337 = vld [vmem:[#allocation5 + $0x740] sm:$0xff]
    %v3338 = vld [vmem:[#allocation5 + $0x748] sm:$0xff]
    %v3339 = vld [vmem:[#allocation5 + $0x750] sm:$0xff]
    %v3340 = vld [vmem:[#allocation5 + $0x758] sm:$0xff]
    %v3341 = vld [vmem:[#allocation5 + $0x760] sm:$0xff]
    %v3342 = vld [vmem:[#allocation5 + $0x768] sm:$0xff]
    %v3343 = vld [vmem:[#allocation5 + $0x770] sm:$0xff]
    %v3344 = vld [vmem:[#allocation5 + $0x778] sm:$0xff]
    %v3345 = vld [vmem:[#allocation5 + $0x780] sm:$0xff]
    %v3346 = vld [vmem:[#allocation5 + $0x788] sm:$0xff]
    %v3347 = vld [vmem:[#allocation5 + $0x790] sm:$0xff]
    %v3348 = vld [vmem:[#allocation5 + $0x798] sm:$0xff]
    %v3349 = vld [vmem:[#allocation5 + $0x7a0] sm:$0xff]
    %v3350 = vld [vmem:[#allocation5 + $0x7a8] sm:$0xff]
    %v3351 = vld [vmem:[#allocation5 + $0x7b0] sm:$0xff]
    %v3352 = vld [vmem:[#allocation5 + $0x7b8] sm:$0xff]
    %v3353 = vld [vmem:[#allocation5 + $0x7c0] sm:$0xff]
    %v3354 = vld [vmem:[#allocation5 + $0x7c8] sm:$0xff]
    %v3355 = vld [vmem:[#allocation5 + $0x7d0] sm:$0xff]
    %v3356 = vld [vmem:[#allocation5 + $0x7d8] sm:$0xff]
    %v3357 = vld [vmem:[#allocation5 + $0x7e0] sm:$0xff]
    %v3358 = vld [vmem:[#allocation5 + $0x7e8] sm:$0xff]
    %v3359 = vld [vmem:[#allocation5 + $0x7f0] sm:$0xff]
    %v3360 = vld [vmem:[#allocation5 + $0x7f8] sm:$0xff]
    %3361 = vmatprep.subr.mxu0 0.0
    %3362 = vmatpush1.msra.mxu0 %v3329
    %3363 = vmatprep.subr.mxu0 0.0
    %3364 = vmatpush1.msra.mxu0 %v3330
    %3365 = vmatprep.subr.mxu0 0.0
    %3366 = vmatpush1.msra.mxu0 %v3331
    %3367 = vmatprep.subr.mxu0 0.0
    %3368 = vmatpush1.msra.mxu0 %v3332
    %3369 = vmatprep.subr.mxu0 0.0
    %3370 = vmatpush1.msra.mxu0 %v3333
    %3371 = vmatprep.subr.mxu0 0.0
    %3372 = vmatpush1.msra.mxu0 %v3334
    %3373 = vmatprep.subr.mxu0 0.0
    %3374 = vmatpush1.msra.mxu0 %v3335
    %3375 = vmatprep.subr.mxu0 0.0
    %3376 = vmatpush1.msra.mxu0 %v3336
    %3377 = vmatprep.subr.mxu0 0.0
    %3378 = vmatpush1.msra.mxu0 %v3337
    %3379 = vmatprep.subr.mxu0 0.0
    %3380 = vmatpush1.msra.mxu0 %v3338
    %3381 = vmatprep.subr.mxu0 0.0
    %3382 = vmatpush1.msra.mxu0 %v3339
    %3383 = vmatprep.subr.mxu0 0.0
    %3384 = vmatpush1.msra.mxu0 %v3340
    %3385 = vmatprep.subr.mxu0 0.0
    %3386 = vmatpush1.msra.mxu0 %v3341
    %3387 = vmatprep.subr.mxu0 0.0
    %3388 = vmatpush1.msra.mxu0 %v3342
    %3389 = vmatprep.subr.mxu0 0.0
    %3390 = vmatpush1.msra.mxu0 %v3343
    %3391 = vmatprep.subr.mxu0 0.0
    %3392 = vmatpush1.msra.mxu0 %v3344
    %3393 = vmatprep.subr.mxu0 0.0
    %3394 = vmatpush1.msra.mxu0 %v3345
    %3395 = vmatprep.subr.mxu0 0.0
    %3396 = vmatpush1.msra.mxu0 %v3346
    %3397 = vmatprep.subr.mxu0 0.0
    %3398 = vmatpush1.msra.mxu0 %v3347
    %3399 = vmatprep.subr.mxu0 0.0
    %3400 = vmatpush1.msra.mxu0 %v3348
    %3401 = vmatprep.subr.mxu0 0.0
    %3402 = vmatpush1.msra.mxu0 %v3349
    %3403 = vmatprep.subr.mxu0 0.0
    %3404 = vmatpush1.msra.mxu0 %v3350
    %3405 = vmatprep.subr.mxu0 0.0
    %3406 = vmatpush1.msra.mxu0 %v3351
    %3407 = vmatprep.subr.mxu0 0.0
    %3408 = vmatpush1.msra.mxu0 %v3352
    %3409 = vmatprep.subr.mxu0 0.0
    %3410 = vmatpush1.msra.mxu0 %v3353
    %3411 = vmatprep.subr.mxu0 0.0
    %3412 = vmatpush1.msra.mxu0 %v3354
    %3413 = vmatprep.subr.mxu0 0.0
    %3414 = vmatpush1.msra.mxu0 %v3355
    %3415 = vmatprep.subr.mxu0 0.0
    %3416 = vmatpush1.msra.mxu0 %v3356
    %3417 = vmatprep.subr.mxu0 0.0
    %3418 = vmatpush1.msra.mxu0 %v3357
    %3419 = vmatprep.subr.mxu0 0.0
    %3420 = vmatpush1.msra.mxu0 %v3358
    %3421 = vmatprep.subr.mxu0 0.0
    %3422 = vmatpush1.msra.mxu0 %v3359
    %3423 = vmatprep.subr.mxu0 0.0
    %3424 = vmatpush1.msra.mxu0 %v3360
    %3425 = vmatprep.mubr.f32.mxu0 %v3327
    %3426 = vmatmul.mubr.f32.gmra.mrb[0].mxu0 %v3325
    %v3427 = vpop.f32.mrb[0].mxu0
    %v3428 = vadd.f32 0.0, %v3427
    %v3429 = vpop.f32.mrb[0].mxu0
    %3430 = vdwg.mxu0
    %v3431 = vadd.f32 %v3252, %v3428
    %v3432 = vld [vmem:[%s10] sm:$0x1]
    %v3434 = vlaneseq
    %v3435 = vshrl.u32 %v3434, 7
    %v3436 = vsub.s32 0, %v3435
    %v3437 = vrot.slane %v3432, %v3436
    %v3439 = vadd.f32 %v3431, %v3437
    %v3440 = vmax.f32 %v3439, 0.0
    %v3441 = vld [vmem:[%s11] sm:$0xff]
    %v3442 = vld [vmem:[%s11 + $0x8] sm:$0xff]
    %v3443 = vld [vmem:[%s11 + $0x10] sm:$0xff]
    %v3444 = vld [vmem:[%s11 + $0x18] sm:$0xff]
    %v3445 = vld [vmem:[%s11 + $0x20] sm:$0xff]
    %v3446 = vld [vmem:[%s11 + $0x28] sm:$0xff]
    %v3447 = vld [vmem:[%s11 + $0x30] sm:$0xff]
    %v3448 = vld [vmem:[%s11 + $0x38] sm:$0xff]
    %v3449 = vld [vmem:[%s11 + $0x40] sm:$0xff]
    %v3450 = vld [vmem:[%s11 + $0x48] sm:$0xff]
    %v3451 = vld [vmem:[%s11 + $0x50] sm:$0xff]
    %v3452 = vld [vmem:[%s11 + $0x58] sm:$0xff]
    %v3453 = vld [vmem:[%s11 + $0x60] sm:$0xff]
    %v3454 = vld [vmem:[%s11 + $0x68] sm:$0xff]
    %v3455 = vld [vmem:[%s11 + $0x70] sm:$0xff]
    %v3456 = vld [vmem:[%s11 + $0x78] sm:$0xff]
    %v3457 = vld [vmem:[#allocation7] sm:$0x1]
    %v3459 = vlaneseq
    %v3460 = vshrl.u32 %v3459, 7
    %v3461 = vsub.s32 0, %v3460
    %v3462 = vrot.slane %v3457, %v3461
    %3464 = vmatprep.subr.mxu0 0.0
    %3465 = vmatpush1.msra.mxu0 %v3441
    %3466 = vmatprep.subr.mxu0 0.0
    %3467 = vmatpush1.msra.mxu0 %v3442
    %3468 = vmatprep.subr.mxu0 0.0
    %3469 = vmatpush1.msra.mxu0 %v3443
    %3470 = vmatprep.subr.mxu0 0.0
    %3471 = vmatpush1.msra.mxu0 %v3444
    %3472 = vmatprep.subr.mxu0 0.0
    %3473 = vmatpush1.msra.mxu0 %v3445
    %3474 = vmatprep.subr.mxu0 0.0
    %3475 = vmatpush1.msra.mxu0 %v3446
    %3476 = vmatprep.subr.mxu0 0.0
    %3477 = vmatpush1.msra.mxu0 %v3447
    %3478 = vmatprep.subr.mxu0 0.0
    %3479 = vmatpush1.msra.mxu0 %v3448
    %3480 = vmatprep.subr.mxu0 0.0
    %3481 = vmatpush1.msra.mxu0 %v3449
    %3482 = vmatprep.subr.mxu0 0.0
    %3483 = vmatpush1.msra.mxu0 %v3450
    %3484 = vmatprep.subr.mxu0 0.0
    %3485 = vmatpush1.msra.mxu0 %v3451
    %3486 = vmatprep.subr.mxu0 0.0
    %3487 = vmatpush1.msra.mxu0 %v3452
    %3488 = vmatprep.subr.mxu0 0.0
    %3489 = vmatpush1.msra.mxu0 %v3453
    %3490 = vmatprep.subr.mxu0 0.0
    %3491 = vmatpush1.msra.mxu0 %v3454
    %3492 = vmatprep.subr.mxu0 0.0
    %3493 = vmatpush1.msra.mxu0 %v3455
    %3494 = vmatprep.subr.mxu0 0.0
    %3495 = vmatpush1.msra.mxu0 %v3456
    %3496 = vmatprep.subr.mxu0 0.0
    %3497 = vmatpush1.msra.mxu0 0.0
    %3498 = vmatprep.subr.mxu0 0.0
    %3499 = vmatpush1.msra.mxu0 0.0
    %3500 = vmatprep.subr.mxu0 0.0
    %3501 = vmatpush1.msra.mxu0 0.0
    %3502 = vmatprep.subr.mxu0 0.0
    %3503 = vmatpush1.msra.mxu0 0.0
    %3504 = vmatprep.subr.mxu0 0.0
    %3505 = vmatpush1.msra.mxu0 0.0
    %3506 = vmatprep.subr.mxu0 0.0
    %3507 = vmatpush1.msra.mxu0 0.0
    %3508 = vmatprep.subr.mxu0 0.0
    %3509 = vmatpush1.msra.mxu0 0.0
    %3510 = vmatprep.subr.mxu0 0.0
    %3511 = vmatpush1.msra.mxu0 0.0
    %3512 = vmatprep.subr.mxu0 0.0
    %3513 = vmatpush1.msra.mxu0 0.0
    %3514 = vmatprep.subr.mxu0 0.0
    %3515 = vmatpush1.msra.mxu0 0.0
    %3516 = vmatprep.subr.mxu0 0.0
    %3517 = vmatpush1.msra.mxu0 0.0
    %3518 = vmatprep.subr.mxu0 0.0
    %3519 = vmatpush1.msra.mxu0 0.0
    %3520 = vmatprep.subr.mxu0 0.0
    %3521 = vmatpush1.msra.mxu0 0.0
    %3522 = vmatprep.subr.mxu0 0.0
    %3523 = vmatpush1.msra.mxu0 0.0
    %3524 = vmatprep.subr.mxu0 0.0
    %3525 = vmatpush1.msra.mxu0 0.0
    %3526 = vmatprep.subr.mxu0 0.0
    %3527 = vmatpush1.msra.mxu0 0.0
    %3528 = vmatprep.mubr.f32.mxu0 0.0
    %3529 = vmatmul.mubr.f32.gmra.mrb[0].mxu0 %v3440
    %v3530 = vpop.f32.mrb[0].mxu0
    %v3531 = vadd.f32 %v3462, %v3530
    %v3532 = vpop.f32.mrb[0].mxu0
    %3533 = vdwg.mxu0
    %vm3534 = vcmask 74752
    %3535 = vst.msk [vmem:[#allocation8] sm:$0x3] %vm3534, %v3531
    // Predicated region
    $region66: #{net_forward.1} parent=1 // pred_check
      _
    $region67: #{net_forward.1} parent=1 // pred_check_branch
      %3537 = sbr.rel (0) target = $region69
    $region68: #{net_forward.1} parent=1 // pred_region
      %s3539 = ssub.s32 32, 32
      %3540 = vsyncadd [#allocation4], %s3539
      %s3542 = sshll.u32 [#allocation8], 4
      %s3543 = int_to_ptr.vmem [resolvable:$true] %s3542
      %3545 = dma.vmem_to_hbm [thread:$0]  %s3543, 32, %s13, [#allocation4]
    $region69: #{net_forward.1} parent=1 // pred_fallthru
      _
    // Predicated region
    $region70: #{net_forward.1} parent=1 // pred_check
      _
    $region71: #{net_forward.1} parent=1 // pred_check_branch
      %3547 = sbr.rel (0) target = $region73
    $region72: #{net_forward.1} parent=1 // pred_region
      %3548 = dma.done [#allocation4], 32
    $region73: #{net_forward.1} parent=1 // pred_fallthru
      _
    %3549 = vsyncpa [#allocation3], 1
    %3550 = vsyncpa [#allocation6], 1
    %3551 = vsyncpa [#allocation4], 1

</llo_original>
